<compile_context>
chip_gen: v7x
topology: tpu7x:2x2x1
jax: 0.10.0
libtpu: 0.0.40
codegen_flags: <defaults>
</compile_context>

<pallas_src>
import jax
import jax.numpy as jnp
from jax.experimental import pallas as pl
from jax.experimental.pallas import tpu as pltpu

# ---- Model hyper-parameters (defaults of the PyTorch module) ---------------
CIN = 20                              # conv_channels[0]
COUT = 20                             # conv_channels[1]
K = 3                                 # kernel_size
STRIDE = 1
POOL_K = 2
POOL_S = 1
L = 50                                # input length implied by the hard-coded 50
LC = (L - K) // STRIDE + 1            # 48 (conv output length)
LP = (LC - POOL_K) // POOL_S + 1      # 47 (pool output length)
NCLS = 3                              # fc output features
FC_IN = COUT * LP                     # 940

XW = CIN * L                          # 1000 input features per sample
NC = COUT * LC                        # 960 conv-output rows
NC_PAD = 1024                         # conv-output lanes padded to a 128 multiple
NCLS_PAD = 8                          # classifier outputs padded to a sublane tile

BT_DEFAULT = 256                      # batch tile (sublane axis) per grid step


def _round_up(n, m):
    return (n + m - 1) // m * m


def model_kernel(x_ref, wtoe_ref, bias_ref, wfc_ref, bfc_ref, out_ref):
    # x_ref    : (Bt, CIN*L)       f32    batch tile in natural layout
    # wtoe_ref : (CIN*L, NC_PAD)   bf16   conv as (padded) Toeplitz, resident
    # bias_ref : (1, NC_PAD)       f32    conv bias per output lane
    # wfc_ref  : (NC_PAD, NCLS_PAD) bf16  fc weight in pooled-lane coordinates
    # bfc_ref  : (1, NCLS_PAD)     f32    fc bias (zero-padded)
    # out_ref  : (Bt, NCLS_PAD)    f32    logits

    # --- Conv1d: one MXU matmul (bf16 operands, f32 accumulation) ---
    xb = x_ref[...].astype(jnp.bfloat16)                         # in-kernel cast
    y = jnp.dot(xb, wtoe_ref[...],
                preferred_element_type=jnp.float32)               # (Bt, 1024)

    # --- bias + ReLU (fused VPU pass, f32) ---
    y = jnp.maximum(y + bias_ref[...], 0.0)

    # --- MaxPool1d(kernel=2, stride=1): max with a lane-rotated copy (XLU).
    # shift = NC_PAD-1 == -1, so shifted[:, i] = y[:, i+1 mod NC_PAD].
    # Cross-channel lanes (l == LC-1), padding lanes (>= 960) and the
    # wrap-around lane all map to zero rows of wfc, so they never reach the FC.
    shifted = pltpu.roll(y, shift=NC_PAD - 1, axis=1)
    pooled = jnp.maximum(y, shifted).astype(jnp.bfloat16)         # (Bt, 1024)

    # --- Flatten + Linear as a second MXU matmul (bf16 x bf16 -> f32) ---
    logits = jnp.dot(pooled, wfc_ref[...],
                     preferred_element_type=jnp.float32)          # (Bt, 8)
    out_ref[...] = (logits + bfc_ref[...]).astype(out_ref.dtype)


def _build_conv_toeplitz_t(conv_w):
    """conv_w (COUT, CIN, K) -> (CIN*L, NC_PAD) Toeplitz (transposed, padded)
    with W[c*L + (l+k), o*LC + l] = conv_w[o, c, k]."""
    eye = jnp.eye(L, dtype=jnp.float32)
    w = jnp.zeros((COUT, LC, CIN, L), jnp.float32)
    for k in range(K):
        shift = eye[k:k + LC, :]                                  # (LC, L), 1 at j=l+k
        w = w + conv_w[:, :, k][:, None, :, None] * shift[None, :, None, :]
    w = w.reshape(NC, XW)                                         # (960, 1000)
    w = jnp.pad(w, ((0, NC_PAD - NC), (0, 0)))                    # (1024, 1000)
    return jnp.transpose(w)                                       # (1000, 1024)


def model_forward(x, conv_w, conv_b, fc_w, fc_b, *, block_b=BT_DEFAULT):
    """x: (B, CIN, L) f32; conv_w: (COUT, CIN, K); conv_b: (COUT,);
    fc_w: (NCLS, FC_IN); fc_b: (NCLS,).  Returns (B, NCLS) f32."""
    B = x.shape[0]
    assert x.shape[1:] == (CIN, L)

    # Even-split batch tiling: tile a multiple of 8 sublanes, minimal padding.
    nb = pl.cdiv(B, block_b)
    bt = _round_up(pl.cdiv(B, nb), 8)
    b_pad = nb * bt

    # Natural layout: (B, CIN, L) -> (B, CIN*L) is a free contiguous reshape.
    x_flat = x.reshape(B, XW)
    if b_pad != B:
        x_flat = jnp.pad(x_flat, ((0, b_pad - B), (0, 0)))

    # Resident weights (constant index maps -> DMA'd once).
    w_toe = _build_conv_toeplitz_t(conv_w).astype(jnp.bfloat16)            # (1000, 1024)
    bias_row = jnp.pad(jnp.repeat(conv_b.astype(jnp.float32), LC),
                       (0, NC_PAD - NC))[None, :]                          # (1, 1024)

    # FC weight in pooled-lane coordinates: lane o*LC + l holds fc_w[:, o*LP + l]
    # for l < LP, zero for l == LC-1 and for the conv padding lanes >= 960.
    wfc = jnp.pad(fc_w.reshape(NCLS, COUT, LP).astype(jnp.float32),
                  ((0, 0), (0, 0), (0, LC - LP)))
    wfc = wfc.reshape(NCLS, NC)
    wfc = jnp.pad(wfc, ((0, NCLS_PAD - NCLS), (0, NC_PAD - NC)))           # (8, 1024)
    wfc_t = jnp.transpose(wfc).astype(jnp.bfloat16)                        # (1024, 8)
    bfc = jnp.pad(fc_b.astype(jnp.float32), (0, NCLS_PAD - NCLS))[None, :]  # (1, 8)

    cost = pl.CostEstimate(
        flops=2 * b_pad * (XW * NC_PAD + NC_PAD * NCLS_PAD),
        transcendentals=0,
        bytes_accessed=(b_pad * XW * 4 + b_pad * NCLS_PAD * 4
                        + w_toe.size * 2 + wfc_t.size * 2
                        + bias_row.size * 4 + bfc.size * 4),
    )

    out = pl.pallas_call(
        model_kernel,
        out_shape=jax.ShapeDtypeStruct((b_pad, NCLS_PAD), jnp.float32),
        grid_spec=pltpu.PrefetchScalarGridSpec(
            num_scalar_prefetch=0,
            grid=(nb,),
            in_specs=[
                pl.BlockSpec((bt, XW), lambda j: (j, 0)),
                pl.BlockSpec((XW, NC_PAD), lambda j: (0, 0)),
                pl.BlockSpec((1, NC_PAD), lambda j: (0, 0)),
                pl.BlockSpec((NC_PAD, NCLS_PAD), lambda j: (0, 0)),
                pl.BlockSpec((1, NCLS_PAD), lambda j: (0, 0)),
            ],
            out_specs=pl.BlockSpec((bt, NCLS_PAD), lambda j: (j, 0)),
        ),
        compiler_params=pltpu.CompilerParams(
            dimension_semantics=("parallel",)),
        cost_estimate=cost,
    )(x_flat, w_toe, bias_row, wfc_t, bfc)

    return out[:B, :NCLS]


def reference_forward(x, conv_w, conv_b, fc_w, fc_b):
    """Pure-JAX reference mirroring the PyTorch forward (with the same bf16
    quantization of the MXU operands as the kernel)."""
    xb = x.astype(jnp.bfloat16).astype(jnp.float32)
    wb = conv_w.astype(jnp.bfloat16).astype(jnp.float32)
    Bn = x.shape[0]
    y = jnp.zeros((Bn, COUT, LC), jnp.float32)
    for k in range(K):
        y = y + jnp.einsum('oc,bcl->bol', wb[:, :, k], xb[:, :, k:k + LC])
    y = y + conv_b[None, :, None]
    y = jnp.maximum(y, 0.0)
    p = jnp.maximum(y[:, :, :LP], y[:, :, 1:1 + LP])
    flat = p.reshape(Bn, -1).astype(jnp.bfloat16).astype(jnp.float32)
    fw = fc_w.astype(jnp.bfloat16).astype(jnp.float32)
    return flat @ fw.T + fc_b[None, :]


if __name__ == "__main__":
    key = jax.random.PRNGKey(0)
    kx, kcw, kcb, kfw, kfb = jax.random.split(key, 5)

    B = 20   # small batch; CIN=20, L=50 are fixed by the module definition
    x = jax.random.normal(kx, (B, CIN, L), dtype=jnp.float32)

    # Deterministic synthetic parameters (shapes match nn.Conv1d / nn.Linear).
    conv_w = 0.1 * jax.random.normal(kcw, (COUT, CIN, K), dtype=jnp.float32)
    conv_b = 0.1 * jax.random.normal(kcb, (COUT,), dtype=jnp.float32)
    fc_w = 0.05 * jax.random.normal(kfw, (NCLS, FC_IN), dtype=jnp.float32)
    fc_b = 0.05 * jax.random.normal(kfb, (NCLS,), dtype=jnp.float32)

    ref = reference_forward(x, conv_w, conv_b, fc_w, fc_b)

    # Default tiling: single grid step, batch padded to a multiple of 8.
    out = jax.block_until_ready(model_forward(x, conv_w, conv_b, fc_w, fc_b))
    assert out.shape == (B, NCLS)
    assert jnp.allclose(out, ref, rtol=5e-3, atol=5e-3), (out, ref)

    # Forced small tile: exercises a multi-step grid plus batch padding.
    out2 = jax.block_until_ready(
        model_forward(x, conv_w, conv_b, fc_w, fc_b, block_b=8))
    assert jnp.allclose(out2, ref, rtol=5e-3, atol=5e-3), (out2, ref)

    print("KERNEL_OK")
</pallas_src>

<mosaic_0001>
module attributes {stable_mosaic.version = 11 : i64} {
  func.func @model_kernel(%arg0: i32, %arg1: memref<24x1000xf32, #tpu.memory_space<vmem>>, %arg2: memref<1000x1024xbf16, #tpu.memory_space<vmem>>, %arg3: memref<1x1024xf32, #tpu.memory_space<vmem>>, %arg4: memref<1024x8xbf16, #tpu.memory_space<vmem>>, %arg5: memref<1x8xf32, #tpu.memory_space<vmem>>, %arg6: memref<24x8xf32, #tpu.memory_space<vmem>>) attributes {dimension_semantics = [#tpu.dimension_semantics<parallel>], iteration_bounds = array<i64: 1>, scalar_prefetch = 0 : i64, scratch_operands = 0 : i64, tpu.core_type = #tpu.core_type<tc>, window_params = [{transform_indices = @transform_0, window_bounds = array<i64: 24, 1000>}, {pipeline_mode = #tpu.pipeline_mode<synchronous>, transform_indices = @transform_1, window_bounds = array<i64: 1000, 1024>}, {pipeline_mode = #tpu.pipeline_mode<synchronous>, transform_indices = @transform_2, window_bounds = array<i64: 1, 1024>}, {pipeline_mode = #tpu.pipeline_mode<synchronous>, transform_indices = @transform_3, window_bounds = array<i64: 1024, 8>}, {pipeline_mode = #tpu.pipeline_mode<synchronous>, transform_indices = @transform_4, window_bounds = array<i64: 1, 8>}, {transform_indices = @transform_5, window_bounds = array<i64: 24, 8>}]} {
    %c0 = arith.constant 0 : index
    %c0_0 = arith.constant 0 : index
    %0 = vector.load %arg1[%c0, %c0_0] : memref<24x1000xf32, #tpu.memory_space<vmem>>, vector<24x1000xf32>
    %1 = arith.truncf %0 : vector<24x1000xf32> to vector<24x1000xbf16>
    %c0_1 = arith.constant 0 : index
    %c0_2 = arith.constant 0 : index
    %2 = vector.load %arg2[%c0_1, %c0_2] : memref<1000x1024xbf16, #tpu.memory_space<vmem>>, vector<1000x1024xbf16>
    %cst = arith.constant dense<0.000000e+00> : vector<24x1024xf32>
    %3 = tpu.matmul %1, %2, %cst {dimension_numbers = #tpu.dot_dimension_numbers<[1], [0], [0], [1], [0, 0, 1, 1], [], []>} : vector<24x1000xbf16>, vector<1000x1024xbf16>, vector<24x1024xf32> -> vector<24x1024xf32>
    %c0_3 = arith.constant 0 : index
    %c0_4 = arith.constant 0 : index
    %4 = vector.load %arg3[%c0_3, %c0_4] : memref<1x1024xf32, #tpu.memory_space<vmem>>, vector<1x1024xf32>
    %5 = vector.broadcast %4 : vector<1x1024xf32> to vector<24x1024xf32>
    %6 = arith.addf %3, %5 : vector<24x1024xf32>
    %cst_5 = arith.constant 0.000000e+00 : f32
    %7 = vector.broadcast %cst_5 : f32 to vector<24x1024xf32>
    %8 = arith.maximumf %6, %7 : vector<24x1024xf32>
    %c1023_i32 = arith.constant 1023 : i32
    %9 = tpu.dynamic_rotate %8 by %c1023_i32 dim 1 : vector<24x1024xf32>, i32 -> vector<24x1024xf32>
    %10 = arith.maximumf %8, %9 : vector<24x1024xf32>
    %11 = arith.truncf %10 : vector<24x1024xf32> to vector<24x1024xbf16>
    %c0_6 = arith.constant 0 : index
    %c0_7 = arith.constant 0 : index
    %12 = vector.load %arg4[%c0_6, %c0_7] : memref<1024x8xbf16, #tpu.memory_space<vmem>>, vector<1024x8xbf16>
    %cst_8 = arith.constant dense<0.000000e+00> : vector<24x8xf32>
    %13 = tpu.matmul %11, %12, %cst_8 {dimension_numbers = #tpu.dot_dimension_numbers<[1], [0], [0], [1], [0, 0, 1, 1], [], []>} : vector<24x1024xbf16>, vector<1024x8xbf16>, vector<24x8xf32> -> vector<24x8xf32>
    %c0_9 = arith.constant 0 : index
    %c0_10 = arith.constant 0 : index
    %14 = vector.load %arg5[%c0_9, %c0_10] : memref<1x8xf32, #tpu.memory_space<vmem>>, vector<1x8xf32>
    %15 = vector.broadcast %14 : vector<1x8xf32> to vector<24x8xf32>
    %16 = arith.addf %13, %15 : vector<24x8xf32>
    %c0_11 = arith.constant 0 : index
    %c0_12 = arith.constant 0 : index
    %17 = vector.load %arg6[%c0_11, %c0_12] : memref<24x8xf32, #tpu.memory_space<vmem>>, vector<24x8xf32>
    tpu.vector_store %arg6[%c0_11, %c0_12], %16 {strides = array<i32>} : memref<24x8xf32, #tpu.memory_space<vmem>>, vector<24x8xf32>,
    return
  }
  func.func @transform_0(%arg0: i32) -> (i32, i32) {
    %c0_i32 = arith.constant 0 : i32
    %c0_i32_0 = arith.constant 0 : i32
    return %arg0, %c0_i32 : i32, i32
  }
  func.func @transform_1(%arg0: i32) -> (i32, i32) {
    %c0_i32 = arith.constant 0 : i32
    %c0_i32_0 = arith.constant 0 : i32
    %c0_i32_1 = arith.constant 0 : i32
    return %c0_i32, %c0_i32_0 : i32, i32
  }
  func.func @transform_2(%arg0: i32) -> (i32, i32) {
    %c0_i32 = arith.constant 0 : i32
    %c0_i32_0 = arith.constant 0 : i32
    %c0_i32_1 = arith.constant 0 : i32
    return %c0_i32, %c0_i32_0 : i32, i32
  }
  func.func @transform_3(%arg0: i32) -> (i32, i32) {
    %c0_i32 = arith.constant 0 : i32
    %c0_i32_0 = arith.constant 0 : i32
    %c0_i32_1 = arith.constant 0 : i32
    return %c0_i32, %c0_i32_0 : i32, i32
  }
  func.func @transform_4(%arg0: i32) -> (i32, i32) {
    %c0_i32 = arith.constant 0 : i32
    %c0_i32_0 = arith.constant 0 : i32
    %c0_i32_1 = arith.constant 0 : i32
    return %c0_i32, %c0_i32_0 : i32, i32
  }
  func.func @transform_5(%arg0: i32) -> (i32, i32) {
    %c0_i32 = arith.constant 0 : i32
    %c0_i32_0 = arith.constant 0 : i32
    return %arg0, %c0_i32 : i32, i32
  }
}

</mosaic_0001>

<llo_original>
// kernel: tpu_custom_call.1
$region0: #{tpu_custom_call.1}
  #allocation0 [shape = 'u32[]', space=smem, size = 0x4, offset = 0x4, fixed_abs, tag = 'smem constant byte address 0x4 - core index']
  #allocation1 [shape = 'u32[144,128]{1,0:T(1,128)}', space=vmem, size = 0x12000, scoped, tag = 'internal scratch']
  %s0 = inlined_call_operand.hbm [shape: f32[24,1000], index: 0, kind: input, shape index: {}]
  %s1 = inlined_call_operand.hbm [shape: bf16[1000,1024], index: 1, kind: input, shape index: {}]
  %s2 = inlined_call_operand.hbm [shape: f32[1,1024], index: 2, kind: input, shape index: {}]
  %s3 = inlined_call_operand.vmem [shape: bf16[1024,8], index: 3, kind: input, shape index: {}]
  %s4 = inlined_call_operand.hbm [shape: f32[1,8], index: 4, kind: input, shape index: {}]
  %s5 = inlined_call_operand.vmem [shape: f32[24,8], index: 5, kind: output, shape index: {}]
  %s6 = sld [smem:[#allocation0]]
  $region46: #{tpu_custom_call.1} parent=0
    _
  %s8 = ssub.s32 1, %s6
  %s9 = scalar_select 0, %s8, %s6
  $region1: #{tpu_custom_call.1} parent=0
    #allocation2 [shape = 'u8[98304]{0}', space=vmem, size = 0x18000, scoped, tag = 'input window, operand 0, single buffered']
    #allocation3 [shape = 's32[1]{0}', space=sflag, size = 0x4, scoped, tag = 'scoped memory for tpu_custom_call.1']
    #allocation4 [shape = 'u8[2048000]{0}', space=vmem, size = 0x1f4000, scoped, tag = 'input window, operand 1, single buffered']
    #allocation5 [shape = 's32[1]{0}', space=sflag, size = 0x4, scoped, tag = 'scoped memory for tpu_custom_call.1']
    #allocation6 [shape = 'u8[4096]{0}', space=vmem, size = 0x1000, scoped, tag = 'input window, operand 2, single buffered']
    #allocation7 [shape = 'u8[512]{0}', space=vmem, size = 0x400, scoped, tag = 'input window, operand 4, single buffered']
    #allocation8 [shape = 's32[1]{0}', space=sflag, size = 0x4, scoped, tag = 'scoped memory for tpu_custom_call.1']
    %10 = vsyncpa [#allocation3], 0
    %11 = vsyncpa [#allocation5], 0
    %12 = vsyncpa [#allocation8], 0
    // Predicated region
    $region2: #{tpu_custom_call.1} parent=1 // pred_check
      _
    $region3: #{tpu_custom_call.1} parent=1 // pred_check_branch
      %14 = sbr.rel (0) target = $region5
    $region4: #{tpu_custom_call.1} parent=1 // pred_region
      %s16 = ssub.s32 3072, 3072
      %17 = vsyncadd [#allocation3], %s16
      %s18 = sshll.u32 [#allocation2], 4
      %s19 = int_to_ptr.vmem [resolvable:$true] %s18
      %24 = dma.hbm_to_vmem [thread:$0]  %s0, 3072, %s19, [#allocation3], 1024, 1024, 64
    $region5: #{tpu_custom_call.1} parent=1 // pred_fallthru
      _
    // Predicated region
    $region6: #{tpu_custom_call.1} parent=1 // pred_check
      _
    $region7: #{tpu_custom_call.1} parent=1 // pred_check_branch
      %26 = sbr.rel (0) target = $region9
    $region8: #{tpu_custom_call.1} parent=1 // pred_region
      %s28 = ssub.s32 64000, 64000
      %29 = vsyncadd [#allocation5], %s28
      %s30 = sshll.u32 [#allocation4], 4
      %s31 = int_to_ptr.vmem [resolvable:$true] %s30
      %36 = dma.hbm_to_vmem [thread:$0]  %s1, 64000, %s31, [#allocation5], 512, 512, 32
    $region9: #{tpu_custom_call.1} parent=1 // pred_fallthru
      _
    // Predicated region
    $region10: #{tpu_custom_call.1} parent=1 // pred_check
      _
    $region11: #{tpu_custom_call.1} parent=1 // pred_check_branch
      %38 = sbr.rel (0) target = $region13
    $region12: #{tpu_custom_call.1} parent=1 // pred_region
      %s40 = ssub.s32 128, 128
      %41 = vsyncadd [#allocation5], %s40
      %s43 = sshll.u32 [#allocation6], 4
      %s44 = int_to_ptr.vmem [resolvable:$true] %s43
      %46 = dma.hbm_to_vmem [thread:$0]  %s2, 128, %s44, [#allocation5]
    $region13: #{tpu_custom_call.1} parent=1 // pred_fallthru
      _
    // Predicated region
    $region14: #{tpu_custom_call.1} parent=1 // pred_check
      _
    $region15: #{tpu_custom_call.1} parent=1 // pred_check_branch
      %48 = sbr.rel (0) target = $region17
    $region16: #{tpu_custom_call.1} parent=1 // pred_region
      _
    $region17: #{tpu_custom_call.1} parent=1 // pred_fallthru
      _
    // Predicated region
    $region18: #{tpu_custom_call.1} parent=1 // pred_check
      _
    $region19: #{tpu_custom_call.1} parent=1 // pred_check_branch
      %50 = sbr.rel (0) target = $region21
    $region20: #{tpu_custom_call.1} parent=1 // pred_region
      %s52 = ssub.s32 16, 16
      %53 = vsyncadd [#allocation8], %s52
      %s55 = sshll.u32 [#allocation7], 4
      %s56 = int_to_ptr.vmem [resolvable:$true] %s55
      %58 = dma.hbm_to_vmem [thread:$0]  %s4, 16, %s56, [#allocation8]
    $region21: #{tpu_custom_call.1} parent=1 // pred_fallthru
      _
    // Predicated region
    $region22: #{tpu_custom_call.1} parent=1 // pred_check
      _
    $region23: #{tpu_custom_call.1} parent=1 // pred_check_branch
      %60 = sbr.rel (0) target = $region25
    $region24: #{tpu_custom_call.1} parent=1 // pred_region
      %61 = dma.done [#allocation3], 3072
    $region25: #{tpu_custom_call.1} parent=1 // pred_fallthru
      _
    // Predicated region
    $region26: #{tpu_custom_call.1} parent=1 // pred_check
      _
    $region27: #{tpu_custom_call.1} parent=1 // pred_check_branch
      %63 = sbr.rel (0) target = $region29
    $region28: #{tpu_custom_call.1} parent=1 // pred_region
      %64 = dma.done [#allocation5], 64000
    $region29: #{tpu_custom_call.1} parent=1 // pred_fallthru
      _
    // Predicated region
    $region30: #{tpu_custom_call.1} parent=1 // pred_check
      _
    $region31: #{tpu_custom_call.1} parent=1 // pred_check_branch
      %66 = sbr.rel (0) target = $region33
    $region32: #{tpu_custom_call.1} parent=1 // pred_region
      %67 = dma.done [#allocation5], 128
    $region33: #{tpu_custom_call.1} parent=1 // pred_fallthru
      _
    // Predicated region
    $region34: #{tpu_custom_call.1} parent=1 // pred_check
      _
    $region35: #{tpu_custom_call.1} parent=1 // pred_check_branch
      %69 = sbr.rel (0) target = $region37
    $region36: #{tpu_custom_call.1} parent=1 // pred_region
      %70 = dma.done [#allocation8], 16
    $region37: #{tpu_custom_call.1} parent=1 // pred_fallthru
      _
    %v72 = vld [vmem:[#allocation2] sm:$0xff]
    %v73 = vld [vmem:[#allocation2 + $0x8] sm:$0xff]
    %v74 = vld [vmem:[#allocation2 + $0x10] sm:$0xff]
    %v75 = vld [vmem:[#allocation2 + $0x18] sm:$0xff]
    %v76 = vld [vmem:[#allocation2 + $0x20] sm:$0xff]
    %v77 = vld [vmem:[#allocation2 + $0x28] sm:$0xff]
    %v78 = vld [vmem:[#allocation2 + $0x30] sm:$0xff]
    %v79 = vld [vmem:[#allocation2 + $0x38] sm:$0xff]
    %v80 = vld [vmem:[#allocation2 + $0x40] sm:$0xff]
    %v81 = vld [vmem:[#allocation2 + $0x48] sm:$0xff]
    %v82 = vld [vmem:[#allocation2 + $0x50] sm:$0xff]
    %v83 = vld [vmem:[#allocation2 + $0x58] sm:$0xff]
    %v84 = vld [vmem:[#allocation2 + $0x60] sm:$0xff]
    %v85 = vld [vmem:[#allocation2 + $0x68] sm:$0xff]
    %v86 = vld [vmem:[#allocation2 + $0x70] sm:$0xff]
    %v87 = vld [vmem:[#allocation2 + $0x78] sm:$0xff]
    %v88 = vld [vmem:[#allocation2 + $0x80] sm:$0xff]
    %v89 = vld [vmem:[#allocation2 + $0x88] sm:$0xff]
    %v90 = vld [vmem:[#allocation2 + $0x90] sm:$0xff]
    %v91 = vld [vmem:[#allocation2 + $0x98] sm:$0xff]
    %v92 = vld [vmem:[#allocation2 + $0xa0] sm:$0xff]
    %v93 = vld [vmem:[#allocation2 + $0xa8] sm:$0xff]
    %v94 = vld [vmem:[#allocation2 + $0xb0] sm:$0xff]
    %v95 = vld [vmem:[#allocation2 + $0xb8] sm:$0xff]
    %v96 = vpack.c.bf16 %v80, %v72
    %v97 = vpack.c.bf16 %v81, %v73
    %v98 = vpack.c.bf16 %v82, %v74
    %v99 = vpack.c.bf16 %v83, %v75
    %v100 = vpack.c.bf16 %v84, %v76
    %v101 = vpack.c.bf16 %v85, %v77
    %v102 = vpack.c.bf16 %v86, %v78
    %v103 = vpack.c.bf16 %v87, %v79
    %v104 = vpack.c.bf16 %v88, %v88
    %v105 = vpack.c.bf16 %v89, %v89
    %v106 = vpack.c.bf16 %v90, %v90
    %v107 = vpack.c.bf16 %v91, %v91
    %v108 = vpack.c.bf16 %v92, %v92
    %v109 = vpack.c.bf16 %v93, %v93
    %v110 = vpack.c.bf16 %v94, %v94
    %v111 = vpack.c.bf16 %v95, %v95
    %v112 = vld [vmem:[#allocation4] sm:$0xff]
    %v113 = vld [vmem:[#allocation4 + $0x8] sm:$0xff]
    %v114 = vld [vmem:[#allocation4 + $0x10] sm:$0xff]
    %v115 = vld [vmem:[#allocation4 + $0x18] sm:$0xff]
    %v116 = vld [vmem:[#allocation4 + $0x20] sm:$0xff]
    %v117 = vld [vmem:[#allocation4 + $0x28] sm:$0xff]
    %v118 = vld [vmem:[#allocation4 + $0x30] sm:$0xff]
    %v119 = vld [vmem:[#allocation4 + $0x38] sm:$0xff]
    %v120 = vld [vmem:[#allocation4 + $0x40] sm:$0xff]
    %v121 = vld [vmem:[#allocation4 + $0x48] sm:$0xff]
    %v122 = vld [vmem:[#allocation4 + $0x50] sm:$0xff]
    %v123 = vld [vmem:[#allocation4 + $0x58] sm:$0xff]
    %v124 = vld [vmem:[#allocation4 + $0x60] sm:$0xff]
    %v125 = vld [vmem:[#allocation4 + $0x68] sm:$0xff]
    %v126 = vld [vmem:[#allocation4 + $0x70] sm:$0xff]
    %v127 = vld [vmem:[#allocation4 + $0x78] sm:$0xff]
    %v128 = vld [vmem:[#allocation4 + $0x80] sm:$0xff]
    %v129 = vld [vmem:[#allocation4 + $0x88] sm:$0xff]
    %v130 = vld [vmem:[#allocation4 + $0x90] sm:$0xff]
    %v131 = vld [vmem:[#allocation4 + $0x98] sm:$0xff]
    %v132 = vld [vmem:[#allocation4 + $0xa0] sm:$0xff]
    %v133 = vld [vmem:[#allocation4 + $0xa8] sm:$0xff]
    %v134 = vld [vmem:[#allocation4 + $0xb0] sm:$0xff]
    %v135 = vld [vmem:[#allocation4 + $0xb8] sm:$0xff]
    %v136 = vld [vmem:[#allocation4 + $0xc0] sm:$0xff]
    %v137 = vld [vmem:[#allocation4 + $0xc8] sm:$0xff]
    %v138 = vld [vmem:[#allocation4 + $0xd0] sm:$0xff]
    %v139 = vld [vmem:[#allocation4 + $0xd8] sm:$0xff]
    %v140 = vld [vmem:[#allocation4 + $0xe0] sm:$0xff]
    %v141 = vld [vmem:[#allocation4 + $0xe8] sm:$0xff]
    %v142 = vld [vmem:[#allocation4 + $0xf0] sm:$0xff]
    %v143 = vld [vmem:[#allocation4 + $0xf8] sm:$0xff]
    %v144 = vld [vmem:[#allocation4 + $0x100] sm:$0xff]
    %v145 = vld [vmem:[#allocation4 + $0x108] sm:$0xff]
    %v146 = vld [vmem:[#allocation4 + $0x110] sm:$0xff]
    %v147 = vld [vmem:[#allocation4 + $0x118] sm:$0xff]
    %v148 = vld [vmem:[#allocation4 + $0x120] sm:$0xff]
    %v149 = vld [vmem:[#allocation4 + $0x128] sm:$0xff]
    %v150 = vld [vmem:[#allocation4 + $0x130] sm:$0xff]
    %v151 = vld [vmem:[#allocation4 + $0x138] sm:$0xff]
    %v152 = vld [vmem:[#allocation4 + $0x140] sm:$0xff]
    %v153 = vld [vmem:[#allocation4 + $0x148] sm:$0xff]
    %v154 = vld [vmem:[#allocation4 + $0x150] sm:$0xff]
    %v155 = vld [vmem:[#allocation4 + $0x158] sm:$0xff]
    %v156 = vld [vmem:[#allocation4 + $0x160] sm:$0xff]
    %v157 = vld [vmem:[#allocation4 + $0x168] sm:$0xff]
    %v158 = vld [vmem:[#allocation4 + $0x170] sm:$0xff]
    %v159 = vld [vmem:[#allocation4 + $0x178] sm:$0xff]
    %v160 = vld [vmem:[#allocation4 + $0x180] sm:$0xff]
    %v161 = vld [vmem:[#allocation4 + $0x188] sm:$0xff]
    %v162 = vld [vmem:[#allocation4 + $0x190] sm:$0xff]
    %v163 = vld [vmem:[#allocation4 + $0x198] sm:$0xff]
    %v164 = vld [vmem:[#allocation4 + $0x1a0] sm:$0xff]
    %v165 = vld [vmem:[#allocation4 + $0x1a8] sm:$0xff]
    %v166 = vld [vmem:[#allocation4 + $0x1b0] sm:$0xff]
    %v167 = vld [vmem:[#allocation4 + $0x1b8] sm:$0xff]
    %v168 = vld [vmem:[#allocation4 + $0x1c0] sm:$0xff]
    %v169 = vld [vmem:[#allocation4 + $0x1c8] sm:$0xff]
    %v170 = vld [vmem:[#allocation4 + $0x1d0] sm:$0xff]
    %v171 = vld [vmem:[#allocation4 + $0x1d8] sm:$0xff]
    %v172 = vld [vmem:[#allocation4 + $0x1e0] sm:$0xff]
    %v173 = vld [vmem:[#allocation4 + $0x1e8] sm:$0xff]
    %v174 = vld [vmem:[#allocation4 + $0x1f0] sm:$0xff]
    %v175 = vld [vmem:[#allocation4 + $0x1f8] sm:$0xff]
    %v176 = vld [vmem:[#allocation4 + $0x200] sm:$0xff]
    %v177 = vld [vmem:[#allocation4 + $0x208] sm:$0xff]
    %v178 = vld [vmem:[#allocation4 + $0x210] sm:$0xff]
    %v179 = vld [vmem:[#allocation4 + $0x218] sm:$0xff]
    %v180 = vld [vmem:[#allocation4 + $0x220] sm:$0xff]
    %v181 = vld [vmem:[#allocation4 + $0x228] sm:$0xff]
    %v182 = vld [vmem:[#allocation4 + $0x230] sm:$0xff]
    %v183 = vld [vmem:[#allocation4 + $0x238] sm:$0xff]
    %v184 = vld [vmem:[#allocation4 + $0x240] sm:$0xff]
    %v185 = vld [vmem:[#allocation4 + $0x248] sm:$0xff]
    %v186 = vld [vmem:[#allocation4 + $0x250] sm:$0xff]
    %v187 = vld [vmem:[#allocation4 + $0x258] sm:$0xff]
    %v188 = vld [vmem:[#allocation4 + $0x260] sm:$0xff]
    %v189 = vld [vmem:[#allocation4 + $0x268] sm:$0xff]
    %v190 = vld [vmem:[#allocation4 + $0x270] sm:$0xff]
    %v191 = vld [vmem:[#allocation4 + $0x278] sm:$0xff]
    %v192 = vld [vmem:[#allocation4 + $0x280] sm:$0xff]
    %v193 = vld [vmem:[#allocation4 + $0x288] sm:$0xff]
    %v194 = vld [vmem:[#allocation4 + $0x290] sm:$0xff]
    %v195 = vld [vmem:[#allocation4 + $0x298] sm:$0xff]
    %v196 = vld [vmem:[#allocation4 + $0x2a0] sm:$0xff]
    %v197 = vld [vmem:[#allocation4 + $0x2a8] sm:$0xff]
    %v198 = vld [vmem:[#allocation4 + $0x2b0] sm:$0xff]
    %v199 = vld [vmem:[#allocation4 + $0x2b8] sm:$0xff]
    %v200 = vld [vmem:[#allocation4 + $0x2c0] sm:$0xff]
    %v201 = vld [vmem:[#allocation4 + $0x2c8] sm:$0xff]
    %v202 = vld [vmem:[#allocation4 + $0x2d0] sm:$0xff]
    %v203 = vld [vmem:[#allocation4 + $0x2d8] sm:$0xff]
    %v204 = vld [vmem:[#allocation4 + $0x2e0] sm:$0xff]
    %v205 = vld [vmem:[#allocation4 + $0x2e8] sm:$0xff]
    %v206 = vld [vmem:[#allocation4 + $0x2f0] sm:$0xff]
    %v207 = vld [vmem:[#allocation4 + $0x2f8] sm:$0xff]
    %v208 = vld [vmem:[#allocation4 + $0x300] sm:$0xff]
    %v209 = vld [vmem:[#allocation4 + $0x308] sm:$0xff]
    %v210 = vld [vmem:[#allocation4 + $0x310] sm:$0xff]
    %v211 = vld [vmem:[#allocation4 + $0x318] sm:$0xff]
    %v212 = vld [vmem:[#allocation4 + $0x320] sm:$0xff]
    %v213 = vld [vmem:[#allocation4 + $0x328] sm:$0xff]
    %v214 = vld [vmem:[#allocation4 + $0x330] sm:$0xff]
    %v215 = vld [vmem:[#allocation4 + $0x338] sm:$0xff]
    %v216 = vld [vmem:[#allocation4 + $0x340] sm:$0xff]
    %v217 = vld [vmem:[#allocation4 + $0x348] sm:$0xff]
    %v218 = vld [vmem:[#allocation4 + $0x350] sm:$0xff]
    %v219 = vld [vmem:[#allocation4 + $0x358] sm:$0xff]
    %v220 = vld [vmem:[#allocation4 + $0x360] sm:$0xff]
    %v221 = vld [vmem:[#allocation4 + $0x368] sm:$0xff]
    %v222 = vld [vmem:[#allocation4 + $0x370] sm:$0xff]
    %v223 = vld [vmem:[#allocation4 + $0x378] sm:$0xff]
    %v224 = vld [vmem:[#allocation4 + $0x380] sm:$0xff]
    %v225 = vld [vmem:[#allocation4 + $0x388] sm:$0xff]
    %v226 = vld [vmem:[#allocation4 + $0x390] sm:$0xff]
    %v227 = vld [vmem:[#allocation4 + $0x398] sm:$0xff]
    %v228 = vld [vmem:[#allocation4 + $0x3a0] sm:$0xff]
    %v229 = vld [vmem:[#allocation4 + $0x3a8] sm:$0xff]
    %v230 = vld [vmem:[#allocation4 + $0x3b0] sm:$0xff]
    %v231 = vld [vmem:[#allocation4 + $0x3b8] sm:$0xff]
    %v232 = vld [vmem:[#allocation4 + $0x3c0] sm:$0xff]
    %v233 = vld [vmem:[#allocation4 + $0x3c8] sm:$0xff]
    %v234 = vld [vmem:[#allocation4 + $0x3d0] sm:$0xff]
    %v235 = vld [vmem:[#allocation4 + $0x3d8] sm:$0xff]
    %v236 = vld [vmem:[#allocation4 + $0x3e0] sm:$0xff]
    %v237 = vld [vmem:[#allocation4 + $0x3e8] sm:$0xff]
    %v238 = vld [vmem:[#allocation4 + $0x3f0] sm:$0xff]
    %v239 = vld [vmem:[#allocation4 + $0x3f8] sm:$0xff]
    %v240 = vld [vmem:[#allocation4 + $0x400] sm:$0xff]
    %v241 = vld [vmem:[#allocation4 + $0x408] sm:$0xff]
    %v242 = vld [vmem:[#allocation4 + $0x410] sm:$0xff]
    %v243 = vld [vmem:[#allocation4 + $0x418] sm:$0xff]
    %v244 = vld [vmem:[#allocation4 + $0x420] sm:$0xff]
    %v245 = vld [vmem:[#allocation4 + $0x428] sm:$0xff]
    %v246 = vld [vmem:[#allocation4 + $0x430] sm:$0xff]
    %v247 = vld [vmem:[#allocation4 + $0x438] sm:$0xff]
    %v248 = vld [vmem:[#allocation4 + $0x440] sm:$0xff]
    %v249 = vld [vmem:[#allocation4 + $0x448] sm:$0xff]
    %v250 = vld [vmem:[#allocation4 + $0x450] sm:$0xff]
    %v251 = vld [vmem:[#allocation4 + $0x458] sm:$0xff]
    %v252 = vld [vmem:[#allocation4 + $0x460] sm:$0xff]
    %v253 = vld [vmem:[#allocation4 + $0x468] sm:$0xff]
    %v254 = vld [vmem:[#allocation4 + $0x470] sm:$0xff]
    %v255 = vld [vmem:[#allocation4 + $0x478] sm:$0xff]
    %v256 = vld [vmem:[#allocation4 + $0x480] sm:$0xff]
    %v257 = vld [vmem:[#allocation4 + $0x488] sm:$0xff]
    %v258 = vld [vmem:[#allocation4 + $0x490] sm:$0xff]
    %v259 = vld [vmem:[#allocation4 + $0x498] sm:$0xff]
    %v260 = vld [vmem:[#allocation4 + $0x4a0] sm:$0xff]
    %v261 = vld [vmem:[#allocation4 + $0x4a8] sm:$0xff]
    %v262 = vld [vmem:[#allocation4 + $0x4b0] sm:$0xff]
    %v263 = vld [vmem:[#allocation4 + $0x4b8] sm:$0xff]
    %v264 = vld [vmem:[#allocation4 + $0x4c0] sm:$0xff]
    %v265 = vld [vmem:[#allocation4 + $0x4c8] sm:$0xff]
    %v266 = vld [vmem:[#allocation4 + $0x4d0] sm:$0xff]
    %v267 = vld [vmem:[#allocation4 + $0x4d8] sm:$0xff]
    %v268 = vld [vmem:[#allocation4 + $0x4e0] sm:$0xff]
    %v269 = vld [vmem:[#allocation4 + $0x4e8] sm:$0xff]
    %v270 = vld [vmem:[#allocation4 + $0x4f0] sm:$0xff]
    %v271 = vld [vmem:[#allocation4 + $0x4f8] sm:$0xff]
    %v272 = vld [vmem:[#allocation4 + $0x500] sm:$0xff]
    %v273 = vld [vmem:[#allocation4 + $0x508] sm:$0xff]
    %v274 = vld [vmem:[#allocation4 + $0x510] sm:$0xff]
    %v275 = vld [vmem:[#allocation4 + $0x518] sm:$0xff]
    %v276 = vld [vmem:[#allocation4 + $0x520] sm:$0xff]
    %v277 = vld [vmem:[#allocation4 + $0x528] sm:$0xff]
    %v278 = vld [vmem:[#allocation4 + $0x530] sm:$0xff]
    %v279 = vld [vmem:[#allocation4 + $0x538] sm:$0xff]
    %v280 = vld [vmem:[#allocation4 + $0x540] sm:$0xff]
    %v281 = vld [vmem:[#allocation4 + $0x548] sm:$0xff]
    %v282 = vld [vmem:[#allocation4 + $0x550] sm:$0xff]
    %v283 = vld [vmem:[#allocation4 + $0x558] sm:$0xff]
    %v284 = vld [vmem:[#allocation4 + $0x560] sm:$0xff]
    %v285 = vld [vmem:[#allocation4 + $0x568] sm:$0xff]
    %v286 = vld [vmem:[#allocation4 + $0x570] sm:$0xff]
    %v287 = vld [vmem:[#allocation4 + $0x578] sm:$0xff]
    %v288 = vld [vmem:[#allocation4 + $0x580] sm:$0xff]
    %v289 = vld [vmem:[#allocation4 + $0x588] sm:$0xff]
    %v290 = vld [vmem:[#allocation4 + $0x590] sm:$0xff]
    %v291 = vld [vmem:[#allocation4 + $0x598] sm:$0xff]
    %v292 = vld [vmem:[#allocation4 + $0x5a0] sm:$0xff]
    %v293 = vld [vmem:[#allocation4 + $0x5a8] sm:$0xff]
    %v294 = vld [vmem:[#allocation4 + $0x5b0] sm:$0xff]
    %v295 = vld [vmem:[#allocation4 + $0x5b8] sm:$0xff]
    %v296 = vld [vmem:[#allocation4 + $0x5c0] sm:$0xff]
    %v297 = vld [vmem:[#allocation4 + $0x5c8] sm:$0xff]
    %v298 = vld [vmem:[#allocation4 + $0x5d0] sm:$0xff]
    %v299 = vld [vmem:[#allocation4 + $0x5d8] sm:$0xff]
    %v300 = vld [vmem:[#allocation4 + $0x5e0] sm:$0xff]
    %v301 = vld [vmem:[#allocation4 + $0x5e8] sm:$0xff]
    %v302 = vld [vmem:[#allocation4 + $0x5f0] sm:$0xff]
    %v303 = vld [vmem:[#allocation4 + $0x5f8] sm:$0xff]
    %v304 = vld [vmem:[#allocation4 + $0x600] sm:$0xff]
    %v305 = vld [vmem:[#allocation4 + $0x608] sm:$0xff]
    %v306 = vld [vmem:[#allocation4 + $0x610] sm:$0xff]
    %v307 = vld [vmem:[#allocation4 + $0x618] sm:$0xff]
    %v308 = vld [vmem:[#allocation4 + $0x620] sm:$0xff]
    %v309 = vld [vmem:[#allocation4 + $0x628] sm:$0xff]
    %v310 = vld [vmem:[#allocation4 + $0x630] sm:$0xff]
    %v311 = vld [vmem:[#allocation4 + $0x638] sm:$0xff]
    %v312 = vld [vmem:[#allocation4 + $0x640] sm:$0xff]
    %v313 = vld [vmem:[#allocation4 + $0x648] sm:$0xff]
    %v314 = vld [vmem:[#allocation4 + $0x650] sm:$0xff]
    %v315 = vld [vmem:[#allocation4 + $0x658] sm:$0xff]
    %v316 = vld [vmem:[#allocation4 + $0x660] sm:$0xff]
    %v317 = vld [vmem:[#allocation4 + $0x668] sm:$0xff]
    %v318 = vld [vmem:[#allocation4 + $0x670] sm:$0xff]
    %v319 = vld [vmem:[#allocation4 + $0x678] sm:$0xff]
    %v320 = vld [vmem:[#allocation4 + $0x680] sm:$0xff]
    %v321 = vld [vmem:[#allocation4 + $0x688] sm:$0xff]
    %v322 = vld [vmem:[#allocation4 + $0x690] sm:$0xff]
    %v323 = vld [vmem:[#allocation4 + $0x698] sm:$0xff]
    %v324 = vld [vmem:[#allocation4 + $0x6a0] sm:$0xff]
    %v325 = vld [vmem:[#allocation4 + $0x6a8] sm:$0xff]
    %v326 = vld [vmem:[#allocation4 + $0x6b0] sm:$0xff]
    %v327 = vld [vmem:[#allocation4 + $0x6b8] sm:$0xff]
    %v328 = vld [vmem:[#allocation4 + $0x6c0] sm:$0xff]
    %v329 = vld [vmem:[#allocation4 + $0x6c8] sm:$0xff]
    %v330 = vld [vmem:[#allocation4 + $0x6d0] sm:$0xff]
    %v331 = vld [vmem:[#allocation4 + $0x6d8] sm:$0xff]
    %v332 = vld [vmem:[#allocation4 + $0x6e0] sm:$0xff]
    %v333 = vld [vmem:[#allocation4 + $0x6e8] sm:$0xff]
    %v334 = vld [vmem:[#allocation4 + $0x6f0] sm:$0xff]
    %v335 = vld [vmem:[#allocation4 + $0x6f8] sm:$0xff]
    %v336 = vld [vmem:[#allocation4 + $0x700] sm:$0xff]
    %v337 = vld [vmem:[#allocation4 + $0x708] sm:$0xff]
    %v338 = vld [vmem:[#allocation4 + $0x710] sm:$0xff]
    %v339 = vld [vmem:[#allocation4 + $0x718] sm:$0xff]
    %v340 = vld [vmem:[#allocation4 + $0x720] sm:$0xff]
    %v341 = vld [vmem:[#allocation4 + $0x728] sm:$0xff]
    %v342 = vld [vmem:[#allocation4 + $0x730] sm:$0xff]
    %v343 = vld [vmem:[#allocation4 + $0x738] sm:$0xff]
    %v344 = vld [vmem:[#allocation4 + $0x740] sm:$0xff]
    %v345 = vld [vmem:[#allocation4 + $0x748] sm:$0xff]
    %v346 = vld [vmem:[#allocation4 + $0x750] sm:$0xff]
    %v347 = vld [vmem:[#allocation4 + $0x758] sm:$0xff]
    %v348 = vld [vmem:[#allocation4 + $0x760] sm:$0xff]
    %v349 = vld [vmem:[#allocation4 + $0x768] sm:$0xff]
    %v350 = vld [vmem:[#allocation4 + $0x770] sm:$0xff]
    %v351 = vld [vmem:[#allocation4 + $0x778] sm:$0xff]
    %v352 = vld [vmem:[#allocation4 + $0x780] sm:$0xff]
    %v353 = vld [vmem:[#allocation4 + $0x788] sm:$0xff]
    %v354 = vld [vmem:[#allocation4 + $0x790] sm:$0xff]
    %v355 = vld [vmem:[#allocation4 + $0x798] sm:$0xff]
    %v356 = vld [vmem:[#allocation4 + $0x7a0] sm:$0xff]
    %v357 = vld [vmem:[#allocation4 + $0x7a8] sm:$0xff]
    %v358 = vld [vmem:[#allocation4 + $0x7b0] sm:$0xff]
    %v359 = vld [vmem:[#allocation4 + $0x7b8] sm:$0xff]
    %v360 = vld [vmem:[#allocation4 + $0x7c0] sm:$0xff]
    %v361 = vld [vmem:[#allocation4 + $0x7c8] sm:$0xff]
    %v362 = vld [vmem:[#allocation4 + $0x7d0] sm:$0xff]
    %v363 = vld [vmem:[#allocation4 + $0x7d8] sm:$0xff]
    %v364 = vld [vmem:[#allocation4 + $0x7e0] sm:$0xff]
    %v365 = vld [vmem:[#allocation4 + $0x7e8] sm:$0xff]
    %v366 = vld [vmem:[#allocation4 + $0x7f0] sm:$0xff]
    %v367 = vld [vmem:[#allocation4 + $0x7f8] sm:$0xff]
    %v368 = vld [vmem:[#allocation4 + $0x800] sm:$0xff]
    %v369 = vld [vmem:[#allocation4 + $0x808] sm:$0xff]
    %v370 = vld [vmem:[#allocation4 + $0x810] sm:$0xff]
    %v371 = vld [vmem:[#allocation4 + $0x818] sm:$0xff]
    %v372 = vld [vmem:[#allocation4 + $0x820] sm:$0xff]
    %v373 = vld [vmem:[#allocation4 + $0x828] sm:$0xff]
    %v374 = vld [vmem:[#allocation4 + $0x830] sm:$0xff]
    %v375 = vld [vmem:[#allocation4 + $0x838] sm:$0xff]
    %v376 = vld [vmem:[#allocation4 + $0x840] sm:$0xff]
    %v377 = vld [vmem:[#allocation4 + $0x848] sm:$0xff]
    %v378 = vld [vmem:[#allocation4 + $0x850] sm:$0xff]
    %v379 = vld [vmem:[#allocation4 + $0x858] sm:$0xff]
    %v380 = vld [vmem:[#allocation4 + $0x860] sm:$0xff]
    %v381 = vld [vmem:[#allocation4 + $0x868] sm:$0xff]
    %v382 = vld [vmem:[#allocation4 + $0x870] sm:$0xff]
    %v383 = vld [vmem:[#allocation4 + $0x878] sm:$0xff]
    %v384 = vld [vmem:[#allocation4 + $0x880] sm:$0xff]
    %v385 = vld [vmem:[#allocation4 + $0x888] sm:$0xff]
    %v386 = vld [vmem:[#allocation4 + $0x890] sm:$0xff]
    %v387 = vld [vmem:[#allocation4 + $0x898] sm:$0xff]
    %v388 = vld [vmem:[#allocation4 + $0x8a0] sm:$0xff]
    %v389 = vld [vmem:[#allocation4 + $0x8a8] sm:$0xff]
    %v390 = vld [vmem:[#allocation4 + $0x8b0] sm:$0xff]
    %v391 = vld [vmem:[#allocation4 + $0x8b8] sm:$0xff]
    %v392 = vld [vmem:[#allocation4 + $0x8c0] sm:$0xff]
    %v393 = vld [vmem:[#allocation4 + $0x8c8] sm:$0xff]
    %v394 = vld [vmem:[#allocation4 + $0x8d0] sm:$0xff]
    %v395 = vld [vmem:[#allocation4 + $0x8d8] sm:$0xff]
    %v396 = vld [vmem:[#allocation4 + $0x8e0] sm:$0xff]
    %v397 = vld [vmem:[#allocation4 + $0x8e8] sm:$0xff]
    %v398 = vld [vmem:[#allocation4 + $0x8f0] sm:$0xff]
    %v399 = vld [vmem:[#allocation4 + $0x8f8] sm:$0xff]
    %v400 = vld [vmem:[#allocation4 + $0x900] sm:$0xff]
    %v401 = vld [vmem:[#allocation4 + $0x908] sm:$0xff]
    %v402 = vld [vmem:[#allocation4 + $0x910] sm:$0xff]
    %v403 = vld [vmem:[#allocation4 + $0x918] sm:$0xff]
    %v404 = vld [vmem:[#allocation4 + $0x920] sm:$0xff]
    %v405 = vld [vmem:[#allocation4 + $0x928] sm:$0xff]
    %v406 = vld [vmem:[#allocation4 + $0x930] sm:$0xff]
    %v407 = vld [vmem:[#allocation4 + $0x938] sm:$0xff]
    %v408 = vld [vmem:[#allocation4 + $0x940] sm:$0xff]
    %v409 = vld [vmem:[#allocation4 + $0x948] sm:$0xff]
    %v410 = vld [vmem:[#allocation4 + $0x950] sm:$0xff]
    %v411 = vld [vmem:[#allocation4 + $0x958] sm:$0xff]
    %v412 = vld [vmem:[#allocation4 + $0x960] sm:$0xff]
    %v413 = vld [vmem:[#allocation4 + $0x968] sm:$0xff]
    %v414 = vld [vmem:[#allocation4 + $0x970] sm:$0xff]
    %v415 = vld [vmem:[#allocation4 + $0x978] sm:$0xff]
    %v416 = vld [vmem:[#allocation4 + $0x980] sm:$0xff]
    %v417 = vld [vmem:[#allocation4 + $0x988] sm:$0xff]
    %v418 = vld [vmem:[#allocation4 + $0x990] sm:$0xff]
    %v419 = vld [vmem:[#allocation4 + $0x998] sm:$0xff]
    %v420 = vld [vmem:[#allocation4 + $0x9a0] sm:$0xff]
    %v421 = vld [vmem:[#allocation4 + $0x9a8] sm:$0xff]
    %v422 = vld [vmem:[#allocation4 + $0x9b0] sm:$0xff]
    %v423 = vld [vmem:[#allocation4 + $0x9b8] sm:$0xff]
    %v424 = vld [vmem:[#allocation4 + $0x9c0] sm:$0xff]
    %v425 = vld [vmem:[#allocation4 + $0x9c8] sm:$0xff]
    %v426 = vld [vmem:[#allocation4 + $0x9d0] sm:$0xff]
    %v427 = vld [vmem:[#allocation4 + $0x9d8] sm:$0xff]
    %v428 = vld [vmem:[#allocation4 + $0x9e0] sm:$0xff]
    %v429 = vld [vmem:[#allocation4 + $0x9e8] sm:$0xff]
    %v430 = vld [vmem:[#allocation4 + $0x9f0] sm:$0xff]
    %v431 = vld [vmem:[#allocation4 + $0x9f8] sm:$0xff]
    %v432 = vld [vmem:[#allocation4 + $0xa00] sm:$0xff]
    %v433 = vld [vmem:[#allocation4 + $0xa08] sm:$0xff]
    %v434 = vld [vmem:[#allocation4 + $0xa10] sm:$0xff]
    %v435 = vld [vmem:[#allocation4 + $0xa18] sm:$0xff]
    %v436 = vld [vmem:[#allocation4 + $0xa20] sm:$0xff]
    %v437 = vld [vmem:[#allocation4 + $0xa28] sm:$0xff]
    %v438 = vld [vmem:[#allocation4 + $0xa30] sm:$0xff]
    %v439 = vld [vmem:[#allocation4 + $0xa38] sm:$0xff]
    %v440 = vld [vmem:[#allocation4 + $0xa40] sm:$0xff]
    %v441 = vld [vmem:[#allocation4 + $0xa48] sm:$0xff]
    %v442 = vld [vmem:[#allocation4 + $0xa50] sm:$0xff]
    %v443 = vld [vmem:[#allocation4 + $0xa58] sm:$0xff]
    %v444 = vld [vmem:[#allocation4 + $0xa60] sm:$0xff]
    %v445 = vld [vmem:[#allocation4 + $0xa68] sm:$0xff]
    %v446 = vld [vmem:[#allocation4 + $0xa70] sm:$0xff]
    %v447 = vld [vmem:[#allocation4 + $0xa78] sm:$0xff]
    %v448 = vld [vmem:[#allocation4 + $0xa80] sm:$0xff]
    %v449 = vld [vmem:[#allocation4 + $0xa88] sm:$0xff]
    %v450 = vld [vmem:[#allocation4 + $0xa90] sm:$0xff]
    %v451 = vld [vmem:[#allocation4 + $0xa98] sm:$0xff]
    %v452 = vld [vmem:[#allocation4 + $0xaa0] sm:$0xff]
    %v453 = vld [vmem:[#allocation4 + $0xaa8] sm:$0xff]
    %v454 = vld [vmem:[#allocation4 + $0xab0] sm:$0xff]
    %v455 = vld [vmem:[#allocation4 + $0xab8] sm:$0xff]
    %v456 = vld [vmem:[#allocation4 + $0xac0] sm:$0xff]
    %v457 = vld [vmem:[#allocation4 + $0xac8] sm:$0xff]
    %v458 = vld [vmem:[#allocation4 + $0xad0] sm:$0xff]
    %v459 = vld [vmem:[#allocation4 + $0xad8] sm:$0xff]
    %v460 = vld [vmem:[#allocation4 + $0xae0] sm:$0xff]
    %v461 = vld [vmem:[#allocation4 + $0xae8] sm:$0xff]
    %v462 = vld [vmem:[#allocation4 + $0xaf0] sm:$0xff]
    %v463 = vld [vmem:[#allocation4 + $0xaf8] sm:$0xff]
    %v464 = vld [vmem:[#allocation4 + $0xb00] sm:$0xff]
    %v465 = vld [vmem:[#allocation4 + $0xb08] sm:$0xff]
    %v466 = vld [vmem:[#allocation4 + $0xb10] sm:$0xff]
    %v467 = vld [vmem:[#allocation4 + $0xb18] sm:$0xff]
    %v468 = vld [vmem:[#allocation4 + $0xb20] sm:$0xff]
    %v469 = vld [vmem:[#allocation4 + $0xb28] sm:$0xff]
    %v470 = vld [vmem:[#allocation4 + $0xb30] sm:$0xff]
    %v471 = vld [vmem:[#allocation4 + $0xb38] sm:$0xff]
    %v472 = vld [vmem:[#allocation4 + $0xb40] sm:$0xff]
    %v473 = vld [vmem:[#allocation4 + $0xb48] sm:$0xff]
    %v474 = vld [vmem:[#allocation4 + $0xb50] sm:$0xff]
    %v475 = vld [vmem:[#allocation4 + $0xb58] sm:$0xff]
    %v476 = vld [vmem:[#allocation4 + $0xb60] sm:$0xff]
    %v477 = vld [vmem:[#allocation4 + $0xb68] sm:$0xff]
    %v478 = vld [vmem:[#allocation4 + $0xb70] sm:$0xff]
    %v479 = vld [vmem:[#allocation4 + $0xb78] sm:$0xff]
    %v480 = vld [vmem:[#allocation4 + $0xb80] sm:$0xff]
    %v481 = vld [vmem:[#allocation4 + $0xb88] sm:$0xff]
    %v482 = vld [vmem:[#allocation4 + $0xb90] sm:$0xff]
    %v483 = vld [vmem:[#allocation4 + $0xb98] sm:$0xff]
    %v484 = vld [vmem:[#allocation4 + $0xba0] sm:$0xff]
    %v485 = vld [vmem:[#allocation4 + $0xba8] sm:$0xff]
    %v486 = vld [vmem:[#allocation4 + $0xbb0] sm:$0xff]
    %v487 = vld [vmem:[#allocation4 + $0xbb8] sm:$0xff]
    %v488 = vld [vmem:[#allocation4 + $0xbc0] sm:$0xff]
    %v489 = vld [vmem:[#allocation4 + $0xbc8] sm:$0xff]
    %v490 = vld [vmem:[#allocation4 + $0xbd0] sm:$0xff]
    %v491 = vld [vmem:[#allocation4 + $0xbd8] sm:$0xff]
    %v492 = vld [vmem:[#allocation4 + $0xbe0] sm:$0xff]
    %v493 = vld [vmem:[#allocation4 + $0xbe8] sm:$0xff]
    %v494 = vld [vmem:[#allocation4 + $0xbf0] sm:$0xff]
    %v495 = vld [vmem:[#allocation4 + $0xbf8] sm:$0xff]
    %v496 = vld [vmem:[#allocation4 + $0xc00] sm:$0xff]
    %v497 = vld [vmem:[#allocation4 + $0xc08] sm:$0xff]
    %v498 = vld [vmem:[#allocation4 + $0xc10] sm:$0xff]
    %v499 = vld [vmem:[#allocation4 + $0xc18] sm:$0xff]
    %v500 = vld [vmem:[#allocation4 + $0xc20] sm:$0xff]
    %v501 = vld [vmem:[#allocation4 + $0xc28] sm:$0xff]
    %v502 = vld [vmem:[#allocation4 + $0xc30] sm:$0xff]
    %v503 = vld [vmem:[#allocation4 + $0xc38] sm:$0xff]
    %v504 = vld [vmem:[#allocation4 + $0xc40] sm:$0xff]
    %v505 = vld [vmem:[#allocation4 + $0xc48] sm:$0xff]
    %v506 = vld [vmem:[#allocation4 + $0xc50] sm:$0xff]
    %v507 = vld [vmem:[#allocation4 + $0xc58] sm:$0xff]
    %v508 = vld [vmem:[#allocation4 + $0xc60] sm:$0xff]
    %v509 = vld [vmem:[#allocation4 + $0xc68] sm:$0xff]
    %v510 = vld [vmem:[#allocation4 + $0xc70] sm:$0xff]
    %v511 = vld [vmem:[#allocation4 + $0xc78] sm:$0xff]
    %v512 = vld [vmem:[#allocation4 + $0xc80] sm:$0xff]
    %v513 = vld [vmem:[#allocation4 + $0xc88] sm:$0xff]
    %v514 = vld [vmem:[#allocation4 + $0xc90] sm:$0xff]
    %v515 = vld [vmem:[#allocation4 + $0xc98] sm:$0xff]
    %v516 = vld [vmem:[#allocation4 + $0xca0] sm:$0xff]
    %v517 = vld [vmem:[#allocation4 + $0xca8] sm:$0xff]
    %v518 = vld [vmem:[#allocation4 + $0xcb0] sm:$0xff]
    %v519 = vld [vmem:[#allocation4 + $0xcb8] sm:$0xff]
    %v520 = vld [vmem:[#allocation4 + $0xcc0] sm:$0xff]
    %v521 = vld [vmem:[#allocation4 + $0xcc8] sm:$0xff]
    %v522 = vld [vmem:[#allocation4 + $0xcd0] sm:$0xff]
    %v523 = vld [vmem:[#allocation4 + $0xcd8] sm:$0xff]
    %v524 = vld [vmem:[#allocation4 + $0xce0] sm:$0xff]
    %v525 = vld [vmem:[#allocation4 + $0xce8] sm:$0xff]
    %v526 = vld [vmem:[#allocation4 + $0xcf0] sm:$0xff]
    %v527 = vld [vmem:[#allocation4 + $0xcf8] sm:$0xff]
    %v528 = vld [vmem:[#allocation4 + $0xd00] sm:$0xff]
    %v529 = vld [vmem:[#allocation4 + $0xd08] sm:$0xff]
    %v530 = vld [vmem:[#allocation4 + $0xd10] sm:$0xff]
    %v531 = vld [vmem:[#allocation4 + $0xd18] sm:$0xff]
    %v532 = vld [vmem:[#allocation4 + $0xd20] sm:$0xff]
    %v533 = vld [vmem:[#allocation4 + $0xd28] sm:$0xff]
    %v534 = vld [vmem:[#allocation4 + $0xd30] sm:$0xff]
    %v535 = vld [vmem:[#allocation4 + $0xd38] sm:$0xff]
    %v536 = vld [vmem:[#allocation4 + $0xd40] sm:$0xff]
    %v537 = vld [vmem:[#allocation4 + $0xd48] sm:$0xff]
    %v538 = vld [vmem:[#allocation4 + $0xd50] sm:$0xff]
    %v539 = vld [vmem:[#allocation4 + $0xd58] sm:$0xff]
    %v540 = vld [vmem:[#allocation4 + $0xd60] sm:$0xff]
    %v541 = vld [vmem:[#allocation4 + $0xd68] sm:$0xff]
    %v542 = vld [vmem:[#allocation4 + $0xd70] sm:$0xff]
    %v543 = vld [vmem:[#allocation4 + $0xd78] sm:$0xff]
    %v544 = vld [vmem:[#allocation4 + $0xd80] sm:$0xff]
    %v545 = vld [vmem:[#allocation4 + $0xd88] sm:$0xff]
    %v546 = vld [vmem:[#allocation4 + $0xd90] sm:$0xff]
    %v547 = vld [vmem:[#allocation4 + $0xd98] sm:$0xff]
    %v548 = vld [vmem:[#allocation4 + $0xda0] sm:$0xff]
    %v549 = vld [vmem:[#allocation4 + $0xda8] sm:$0xff]
    %v550 = vld [vmem:[#allocation4 + $0xdb0] sm:$0xff]
    %v551 = vld [vmem:[#allocation4 + $0xdb8] sm:$0xff]
    %v552 = vld [vmem:[#allocation4 + $0xdc0] sm:$0xff]
    %v553 = vld [vmem:[#allocation4 + $0xdc8] sm:$0xff]
    %v554 = vld [vmem:[#allocation4 + $0xdd0] sm:$0xff]
    %v555 = vld [vmem:[#allocation4 + $0xdd8] sm:$0xff]
    %v556 = vld [vmem:[#allocation4 + $0xde0] sm:$0xff]
    %v557 = vld [vmem:[#allocation4 + $0xde8] sm:$0xff]
    %v558 = vld [vmem:[#allocation4 + $0xdf0] sm:$0xff]
    %v559 = vld [vmem:[#allocation4 + $0xdf8] sm:$0xff]
    %v560 = vld [vmem:[#allocation4 + $0xe00] sm:$0xff]
    %v561 = vld [vmem:[#allocation4 + $0xe08] sm:$0xff]
    %v562 = vld [vmem:[#allocation4 + $0xe10] sm:$0xff]
    %v563 = vld [vmem:[#allocation4 + $0xe18] sm:$0xff]
    %v564 = vld [vmem:[#allocation4 + $0xe20] sm:$0xff]
    %v565 = vld [vmem:[#allocation4 + $0xe28] sm:$0xff]
    %v566 = vld [vmem:[#allocation4 + $0xe30] sm:$0xff]
    %v567 = vld [vmem:[#allocation4 + $0xe38] sm:$0xff]
    %v568 = vld [vmem:[#allocation4 + $0xe40] sm:$0xff]
    %v569 = vld [vmem:[#allocation4 + $0xe48] sm:$0xff]
    %v570 = vld [vmem:[#allocation4 + $0xe50] sm:$0xff]
    %v571 = vld [vmem:[#allocation4 + $0xe58] sm:$0xff]
    %v572 = vld [vmem:[#allocation4 + $0xe60] sm:$0xff]
    %v573 = vld [vmem:[#allocation4 + $0xe68] sm:$0xff]
    %v574 = vld [vmem:[#allocation4 + $0xe70] sm:$0xff]
    %v575 = vld [vmem:[#allocation4 + $0xe78] sm:$0xff]
    %v576 = vld [vmem:[#allocation4 + $0xe80] sm:$0xff]
    %v577 = vld [vmem:[#allocation4 + $0xe88] sm:$0xff]
    %v578 = vld [vmem:[#allocation4 + $0xe90] sm:$0xff]
    %v579 = vld [vmem:[#allocation4 + $0xe98] sm:$0xff]
    %v580 = vld [vmem:[#allocation4 + $0xea0] sm:$0xff]
    %v581 = vld [vmem:[#allocation4 + $0xea8] sm:$0xff]
    %v582 = vld [vmem:[#allocation4 + $0xeb0] sm:$0xff]
    %v583 = vld [vmem:[#allocation4 + $0xeb8] sm:$0xff]
    %v584 = vld [vmem:[#allocation4 + $0xec0] sm:$0xff]
    %v585 = vld [vmem:[#allocation4 + $0xec8] sm:$0xff]
    %v586 = vld [vmem:[#allocation4 + $0xed0] sm:$0xff]
    %v587 = vld [vmem:[#allocation4 + $0xed8] sm:$0xff]
    %v588 = vld [vmem:[#allocation4 + $0xee0] sm:$0xff]
    %v589 = vld [vmem:[#allocation4 + $0xee8] sm:$0xff]
    %v590 = vld [vmem:[#allocation4 + $0xef0] sm:$0xff]
    %v591 = vld [vmem:[#allocation4 + $0xef8] sm:$0xff]
    %v592 = vld [vmem:[#allocation4 + $0xf00] sm:$0xff]
    %v593 = vld [vmem:[#allocation4 + $0xf08] sm:$0xff]
    %v594 = vld [vmem:[#allocation4 + $0xf10] sm:$0xff]
    %v595 = vld [vmem:[#allocation4 + $0xf18] sm:$0xff]
    %v596 = vld [vmem:[#allocation4 + $0xf20] sm:$0xff]
    %v597 = vld [vmem:[#allocation4 + $0xf28] sm:$0xff]
    %v598 = vld [vmem:[#allocation4 + $0xf30] sm:$0xff]
    %v599 = vld [vmem:[#allocation4 + $0xf38] sm:$0xff]
    %v600 = vld [vmem:[#allocation4 + $0xf40] sm:$0xff]
    %v601 = vld [vmem:[#allocation4 + $0xf48] sm:$0xff]
    %v602 = vld [vmem:[#allocation4 + $0xf50] sm:$0xff]
    %v603 = vld [vmem:[#allocation4 + $0xf58] sm:$0xff]
    %v604 = vld [vmem:[#allocation4 + $0xf60] sm:$0xff]
    %v605 = vld [vmem:[#allocation4 + $0xf68] sm:$0xff]
    %v606 = vld [vmem:[#allocation4 + $0xf70] sm:$0xff]
    %v607 = vld [vmem:[#allocation4 + $0xf78] sm:$0xff]
    %v608 = vld [vmem:[#allocation4 + $0xf80] sm:$0xff]
    %v609 = vld [vmem:[#allocation4 + $0xf88] sm:$0xff]
    %v610 = vld [vmem:[#allocation4 + $0xf90] sm:$0xff]
    %v611 = vld [vmem:[#allocation4 + $0xf98] sm:$0xff]
    %v612 = vld [vmem:[#allocation6] sm:$0xff]
    %v614 = vlaneseq
    %v615 = vshrl.u32 %v614, 7
    %v616 = vsub.s32 0, %v615
    %v617 = vrot.slane %v612, %v616
    %v618 = vlaneseq
    %v619 = vshrl.u32 %v618, 7
    %v620 = vsub.s32 1, %v619
    %v621 = vrot.slane %v612, %v620
    %v622 = vlaneseq
    %v623 = vshrl.u32 %v622, 7
    %v624 = vsub.s32 2, %v623
    %v625 = vrot.slane %v612, %v624
    %v626 = vlaneseq
    %v627 = vshrl.u32 %v626, 7
    %v628 = vsub.s32 3, %v627
    %v629 = vrot.slane %v612, %v628
    %v630 = vlaneseq
    %v631 = vshrl.u32 %v630, 7
    %v632 = vsub.s32 4, %v631
    %v633 = vrot.slane %v612, %v632
    %v634 = vlaneseq
    %v635 = vshrl.u32 %v634, 7
    %v636 = vsub.s32 5, %v635
    %v637 = vrot.slane %v612, %v636
    %v638 = vlaneseq
    %v639 = vshrl.u32 %v638, 7
    %v640 = vsub.s32 6, %v639
    %v641 = vrot.slane %v612, %v640
    %v642 = vlaneseq
    %v643 = vshrl.u32 %v642, 7
    %v644 = vsub.s32 7, %v643
    %v645 = vrot.slane %v612, %v644
    %v1154 = vunpack.c.l.b16 %v112
    %v1155 = vunpack.c.h.b16 %v112
    %v1156 = vunpack.c.l.b16 %v113
    %v1157 = vunpack.c.h.b16 %v113
    %v1158 = vunpack.c.l.b16 %v114
    %v1159 = vunpack.c.h.b16 %v114
    %v1160 = vunpack.c.l.b16 %v115
    %v1161 = vunpack.c.h.b16 %v115
    %v1162 = vunpack.c.l.b16 %v116
    %v1163 = vunpack.c.h.b16 %v116
    %v1164 = vunpack.c.l.b16 %v117
    %v1165 = vunpack.c.h.b16 %v117
    %v1166 = vunpack.c.l.b16 %v118
    %v1167 = vunpack.c.h.b16 %v118
    %v1168 = vunpack.c.l.b16 %v119
    %v1169 = vunpack.c.h.b16 %v119
    %v1170 = vunpack.c.l.b16 %v120
    %v1171 = vunpack.c.h.b16 %v120
    %v1172 = vunpack.c.l.b16 %v121
    %v1173 = vunpack.c.h.b16 %v121
    %v1174 = vunpack.c.l.b16 %v122
    %v1175 = vunpack.c.h.b16 %v122
    %v1176 = vunpack.c.l.b16 %v123
    %v1177 = vunpack.c.h.b16 %v123
    %v1178 = vunpack.c.l.b16 %v124
    %v1179 = vunpack.c.h.b16 %v124
    %v1180 = vunpack.c.l.b16 %v125
    %v1181 = vunpack.c.h.b16 %v125
    %v1182 = vunpack.c.l.b16 %v126
    %v1183 = vunpack.c.h.b16 %v126
    %v1184 = vunpack.c.l.b16 %v127
    %v1185 = vunpack.c.h.b16 %v127
    %v1186 = vunpack.c.l.b16 %v128
    %v1187 = vunpack.c.h.b16 %v128
    %v1188 = vunpack.c.l.b16 %v129
    %v1189 = vunpack.c.h.b16 %v129
    %v1190 = vunpack.c.l.b16 %v130
    %v1191 = vunpack.c.h.b16 %v130
    %v1192 = vunpack.c.l.b16 %v131
    %v1193 = vunpack.c.h.b16 %v131
    %v1194 = vunpack.c.l.b16 %v132
    %v1195 = vunpack.c.h.b16 %v132
    %v1196 = vunpack.c.l.b16 %v133
    %v1197 = vunpack.c.h.b16 %v133
    %v1198 = vunpack.c.l.b16 %v134
    %v1199 = vunpack.c.h.b16 %v134
    %v1200 = vunpack.c.l.b16 %v135
    %v1201 = vunpack.c.h.b16 %v135
    %v1202 = vunpack.c.l.b16 %v136
    %v1203 = vunpack.c.h.b16 %v136
    %v1204 = vunpack.c.l.b16 %v137
    %v1205 = vunpack.c.h.b16 %v137
    %v1206 = vunpack.c.l.b16 %v138
    %v1207 = vunpack.c.h.b16 %v138
    %v1208 = vunpack.c.l.b16 %v139
    %v1209 = vunpack.c.h.b16 %v139
    %v1210 = vunpack.c.l.b16 %v140
    %v1211 = vunpack.c.h.b16 %v140
    %v1212 = vunpack.c.l.b16 %v141
    %v1213 = vunpack.c.h.b16 %v141
    %v1214 = vunpack.c.l.b16 %v142
    %v1215 = vunpack.c.h.b16 %v142
    %v1216 = vunpack.c.l.b16 %v143
    %v1217 = vunpack.c.h.b16 %v143
    %v1218 = vunpack.c.l.b16 %v144
    %v1219 = vunpack.c.h.b16 %v144
    %v1220 = vunpack.c.l.b16 %v145
    %v1221 = vunpack.c.h.b16 %v145
    %v1222 = vunpack.c.l.b16 %v146
    %v1223 = vunpack.c.h.b16 %v146
    %v1224 = vunpack.c.l.b16 %v147
    %v1225 = vunpack.c.h.b16 %v147
    %v1226 = vunpack.c.l.b16 %v148
    %v1227 = vunpack.c.h.b16 %v148
    %v1228 = vunpack.c.l.b16 %v149
    %v1229 = vunpack.c.h.b16 %v149
    %v1230 = vunpack.c.l.b16 %v150
    %v1231 = vunpack.c.h.b16 %v150
    %v1232 = vunpack.c.l.b16 %v151
    %v1233 = vunpack.c.h.b16 %v151
    %v1234 = vunpack.c.l.b16 %v152
    %v1235 = vunpack.c.h.b16 %v152
    %v1236 = vunpack.c.l.b16 %v153
    %v1237 = vunpack.c.h.b16 %v153
    %v1238 = vunpack.c.l.b16 %v154
    %v1239 = vunpack.c.h.b16 %v154
    %v1240 = vunpack.c.l.b16 %v155
    %v1241 = vunpack.c.h.b16 %v155
    %v1242 = vunpack.c.l.b16 %v156
    %v1243 = vunpack.c.h.b16 %v156
    %v1244 = vunpack.c.l.b16 %v157
    %v1245 = vunpack.c.h.b16 %v157
    %v1246 = vunpack.c.l.b16 %v158
    %v1247 = vunpack.c.h.b16 %v158
    %v1248 = vunpack.c.l.b16 %v159
    %v1249 = vunpack.c.h.b16 %v159
    %v1250 = vunpack.c.l.b16 %v160
    %v1251 = vunpack.c.h.b16 %v160
    %v1252 = vunpack.c.l.b16 %v161
    %v1253 = vunpack.c.h.b16 %v161
    %v1254 = vunpack.c.l.b16 %v162
    %v1255 = vunpack.c.h.b16 %v162
    %v1256 = vunpack.c.l.b16 %v163
    %v1257 = vunpack.c.h.b16 %v163
    %v1258 = vunpack.c.l.b16 %v164
    %v1259 = vunpack.c.h.b16 %v164
    %v1260 = vunpack.c.l.b16 %v165
    %v1261 = vunpack.c.h.b16 %v165
    %v1262 = vunpack.c.l.b16 %v166
    %v1263 = vunpack.c.h.b16 %v166
    %v1264 = vunpack.c.l.b16 %v167
    %v1265 = vunpack.c.h.b16 %v167
    %v1266 = vunpack.c.l.b16 %v168
    %v1267 = vunpack.c.h.b16 %v168
    %v1268 = vunpack.c.l.b16 %v169
    %v1269 = vunpack.c.h.b16 %v169
    %v1270 = vunpack.c.l.b16 %v170
    %v1271 = vunpack.c.h.b16 %v170
    %v1272 = vunpack.c.l.b16 %v171
    %v1273 = vunpack.c.h.b16 %v171
    %v1274 = vunpack.c.l.b16 %v172
    %v1275 = vunpack.c.h.b16 %v172
    %v1276 = vunpack.c.l.b16 %v173
    %v1277 = vunpack.c.h.b16 %v173
    %v1278 = vunpack.c.l.b16 %v174
    %v1279 = vunpack.c.h.b16 %v174
    %v1280 = vunpack.c.l.b16 %v175
    %v1281 = vunpack.c.h.b16 %v175
    %v1282 = vunpack.c.l.b16 %v176
    %v1283 = vunpack.c.h.b16 %v176
    %v1284 = vunpack.c.l.b16 %v177
    %v1285 = vunpack.c.h.b16 %v177
    %v1286 = vunpack.c.l.b16 %v178
    %v1287 = vunpack.c.h.b16 %v178
    %v1288 = vunpack.c.l.b16 %v179
    %v1289 = vunpack.c.h.b16 %v179
    %v1290 = vunpack.c.l.b16 %v180
    %v1291 = vunpack.c.h.b16 %v180
    %v1292 = vunpack.c.l.b16 %v181
    %v1293 = vunpack.c.h.b16 %v181
    %v1294 = vunpack.c.l.b16 %v182
    %v1295 = vunpack.c.h.b16 %v182
    %v1296 = vunpack.c.l.b16 %v183
    %v1297 = vunpack.c.h.b16 %v183
    %v1298 = vunpack.c.l.b16 %v184
    %v1299 = vunpack.c.h.b16 %v184
    %v1300 = vunpack.c.l.b16 %v185
    %v1301 = vunpack.c.h.b16 %v185
    %v1302 = vunpack.c.l.b16 %v186
    %v1303 = vunpack.c.h.b16 %v186
    %v1304 = vunpack.c.l.b16 %v187
    %v1305 = vunpack.c.h.b16 %v187
    %v1306 = vunpack.c.l.b16 %v188
    %v1307 = vunpack.c.h.b16 %v188
    %v1308 = vunpack.c.l.b16 %v189
    %v1309 = vunpack.c.h.b16 %v189
    %v1310 = vunpack.c.l.b16 %v190
    %v1311 = vunpack.c.h.b16 %v190
    %v1312 = vunpack.c.l.b16 %v191
    %v1313 = vunpack.c.h.b16 %v191
    %v1314 = vunpack.c.l.b16 %v192
    %v1315 = vunpack.c.h.b16 %v192
    %v1316 = vunpack.c.l.b16 %v193
    %v1317 = vunpack.c.h.b16 %v193
    %v1318 = vunpack.c.l.b16 %v194
    %v1319 = vunpack.c.h.b16 %v194
    %v1320 = vunpack.c.l.b16 %v195
    %v1321 = vunpack.c.h.b16 %v195
    %v1322 = vunpack.c.l.b16 %v196
    %v1323 = vunpack.c.h.b16 %v196
    %v1324 = vunpack.c.l.b16 %v197
    %v1325 = vunpack.c.h.b16 %v197
    %v1326 = vunpack.c.l.b16 %v198
    %v1327 = vunpack.c.h.b16 %v198
    %v1328 = vunpack.c.l.b16 %v199
    %v1329 = vunpack.c.h.b16 %v199
    %v1330 = vunpack.c.l.b16 %v200
    %v1331 = vunpack.c.h.b16 %v200
    %v1332 = vunpack.c.l.b16 %v201
    %v1333 = vunpack.c.h.b16 %v201
    %v1334 = vunpack.c.l.b16 %v202
    %v1335 = vunpack.c.h.b16 %v202
    %v1336 = vunpack.c.l.b16 %v203
    %v1337 = vunpack.c.h.b16 %v203
    %v1338 = vunpack.c.l.b16 %v204
    %v1339 = vunpack.c.h.b16 %v204
    %v1340 = vunpack.c.l.b16 %v205
    %v1341 = vunpack.c.h.b16 %v205
    %v1342 = vunpack.c.l.b16 %v206
    %v1343 = vunpack.c.h.b16 %v206
    %v1344 = vunpack.c.l.b16 %v207
    %v1345 = vunpack.c.h.b16 %v207
    %v1346 = vunpack.c.l.b16 %v208
    %v1347 = vunpack.c.h.b16 %v208
    %v1348 = vunpack.c.l.b16 %v209
    %v1349 = vunpack.c.h.b16 %v209
    %v1350 = vunpack.c.l.b16 %v210
    %v1351 = vunpack.c.h.b16 %v210
    %v1352 = vunpack.c.l.b16 %v211
    %v1353 = vunpack.c.h.b16 %v211
    %v1354 = vunpack.c.l.b16 %v212
    %v1355 = vunpack.c.h.b16 %v212
    %v1356 = vunpack.c.l.b16 %v213
    %v1357 = vunpack.c.h.b16 %v213
    %v1358 = vunpack.c.l.b16 %v214
    %v1359 = vunpack.c.h.b16 %v214
    %v1360 = vunpack.c.l.b16 %v215
    %v1361 = vunpack.c.h.b16 %v215
    %v1362 = vunpack.c.l.b16 %v216
    %v1363 = vunpack.c.h.b16 %v216
    %v1364 = vunpack.c.l.b16 %v217
    %v1365 = vunpack.c.h.b16 %v217
    %v1366 = vunpack.c.l.b16 %v218
    %v1367 = vunpack.c.h.b16 %v218
    %v1368 = vunpack.c.l.b16 %v219
    %v1369 = vunpack.c.h.b16 %v219
    %v1370 = vunpack.c.l.b16 %v220
    %v1371 = vunpack.c.h.b16 %v220
    %v1372 = vunpack.c.l.b16 %v221
    %v1373 = vunpack.c.h.b16 %v221
    %v1374 = vunpack.c.l.b16 %v222
    %v1375 = vunpack.c.h.b16 %v222
    %v1376 = vunpack.c.l.b16 %v223
    %v1377 = vunpack.c.h.b16 %v223
    %v1378 = vunpack.c.l.b16 %v224
    %v1379 = vunpack.c.h.b16 %v224
    %v1380 = vunpack.c.l.b16 %v225
    %v1381 = vunpack.c.h.b16 %v225
    %v1382 = vunpack.c.l.b16 %v226
    %v1383 = vunpack.c.h.b16 %v226
    %v1384 = vunpack.c.l.b16 %v227
    %v1385 = vunpack.c.h.b16 %v227
    %v1386 = vunpack.c.l.b16 %v228
    %v1387 = vunpack.c.h.b16 %v228
    %v1388 = vunpack.c.l.b16 %v229
    %v1389 = vunpack.c.h.b16 %v229
    %v1390 = vunpack.c.l.b16 %v230
    %v1391 = vunpack.c.h.b16 %v230
    %v1392 = vunpack.c.l.b16 %v231
    %v1393 = vunpack.c.h.b16 %v231
    %v1394 = vunpack.c.l.b16 %v232
    %v1395 = vunpack.c.h.b16 %v232
    %v1396 = vunpack.c.l.b16 %v233
    %v1397 = vunpack.c.h.b16 %v233
    %v1398 = vunpack.c.l.b16 %v234
    %v1399 = vunpack.c.h.b16 %v234
    %v1400 = vunpack.c.l.b16 %v235
    %v1401 = vunpack.c.h.b16 %v235
    %v1402 = vunpack.c.l.b16 %v236
    %v1403 = vunpack.c.h.b16 %v236
    %v1404 = vunpack.c.l.b16 %v237
    %v1405 = vunpack.c.h.b16 %v237
    %v1406 = vunpack.c.l.b16 %v238
    %v1407 = vunpack.c.h.b16 %v238
    %v1408 = vunpack.c.l.b16 %v239
    %v1409 = vunpack.c.h.b16 %v239
    %v1410 = vunpack.c.l.b16 %v240
    %v1411 = vunpack.c.h.b16 %v240
    %v1412 = vunpack.c.l.b16 %v241
    %v1413 = vunpack.c.h.b16 %v241
    %v1414 = vunpack.c.l.b16 %v242
    %v1415 = vunpack.c.h.b16 %v242
    %v1416 = vunpack.c.l.b16 %v243
    %v1417 = vunpack.c.h.b16 %v243
    %v1418 = vunpack.c.l.b16 %v244
    %v1419 = vunpack.c.h.b16 %v244
    %v1420 = vunpack.c.l.b16 %v245
    %v1421 = vunpack.c.h.b16 %v245
    %v1422 = vunpack.c.l.b16 %v246
    %v1423 = vunpack.c.h.b16 %v246
    %v1424 = vunpack.c.l.b16 %v247
    %v1425 = vunpack.c.h.b16 %v247
    %v1426 = vunpack.c.l.b16 %v248
    %v1427 = vunpack.c.h.b16 %v248
    %v1428 = vunpack.c.l.b16 %v249
    %v1429 = vunpack.c.h.b16 %v249
    %v1430 = vunpack.c.l.b16 %v250
    %v1431 = vunpack.c.h.b16 %v250
    %v1432 = vunpack.c.l.b16 %v251
    %v1433 = vunpack.c.h.b16 %v251
    %v1434 = vunpack.c.l.b16 %v252
    %v1435 = vunpack.c.h.b16 %v252
    %v1436 = vunpack.c.l.b16 %v253
    %v1437 = vunpack.c.h.b16 %v253
    %v1438 = vunpack.c.l.b16 %v254
    %v1439 = vunpack.c.h.b16 %v254
    %v1440 = vunpack.c.l.b16 %v255
    %v1441 = vunpack.c.h.b16 %v255
    %v1442 = vunpack.c.l.b16 %v256
    %v1443 = vunpack.c.h.b16 %v256
    %v1444 = vunpack.c.l.b16 %v257
    %v1445 = vunpack.c.h.b16 %v257
    %v1446 = vunpack.c.l.b16 %v258
    %v1447 = vunpack.c.h.b16 %v258
    %v1448 = vunpack.c.l.b16 %v259
    %v1449 = vunpack.c.h.b16 %v259
    %v1450 = vunpack.c.l.b16 %v260
    %v1451 = vunpack.c.h.b16 %v260
    %v1452 = vunpack.c.l.b16 %v261
    %v1453 = vunpack.c.h.b16 %v261
    %v1454 = vunpack.c.l.b16 %v262
    %v1455 = vunpack.c.h.b16 %v262
    %v1456 = vunpack.c.l.b16 %v263
    %v1457 = vunpack.c.h.b16 %v263
    %v1458 = vunpack.c.l.b16 %v264
    %v1459 = vunpack.c.h.b16 %v264
    %v1460 = vunpack.c.l.b16 %v265
    %v1461 = vunpack.c.h.b16 %v265
    %v1462 = vunpack.c.l.b16 %v266
    %v1463 = vunpack.c.h.b16 %v266
    %v1464 = vunpack.c.l.b16 %v267
    %v1465 = vunpack.c.h.b16 %v267
    %v1466 = vunpack.c.l.b16 %v268
    %v1467 = vunpack.c.h.b16 %v268
    %v1468 = vunpack.c.l.b16 %v269
    %v1469 = vunpack.c.h.b16 %v269
    %v1470 = vunpack.c.l.b16 %v270
    %v1471 = vunpack.c.h.b16 %v270
    %v1472 = vunpack.c.l.b16 %v271
    %v1473 = vunpack.c.h.b16 %v271
    %v1474 = vunpack.c.l.b16 %v272
    %v1475 = vunpack.c.h.b16 %v272
    %v1476 = vunpack.c.l.b16 %v273
    %v1477 = vunpack.c.h.b16 %v273
    %v1478 = vunpack.c.l.b16 %v274
    %v1479 = vunpack.c.h.b16 %v274
    %v1480 = vunpack.c.l.b16 %v275
    %v1481 = vunpack.c.h.b16 %v275
    %v1482 = vunpack.c.l.b16 %v276
    %v1483 = vunpack.c.h.b16 %v276
    %v1484 = vunpack.c.l.b16 %v277
    %v1485 = vunpack.c.h.b16 %v277
    %v1486 = vunpack.c.l.b16 %v278
    %v1487 = vunpack.c.h.b16 %v278
    %v1488 = vunpack.c.l.b16 %v279
    %v1489 = vunpack.c.h.b16 %v279
    %v1490 = vunpack.c.l.b16 %v280
    %v1491 = vunpack.c.h.b16 %v280
    %v1492 = vunpack.c.l.b16 %v281
    %v1493 = vunpack.c.h.b16 %v281
    %v1494 = vunpack.c.l.b16 %v282
    %v1495 = vunpack.c.h.b16 %v282
    %v1496 = vunpack.c.l.b16 %v283
    %v1497 = vunpack.c.h.b16 %v283
    %v1498 = vunpack.c.l.b16 %v284
    %v1499 = vunpack.c.h.b16 %v284
    %v1500 = vunpack.c.l.b16 %v285
    %v1501 = vunpack.c.h.b16 %v285
    %v1502 = vunpack.c.l.b16 %v286
    %v1503 = vunpack.c.h.b16 %v286
    %v1504 = vunpack.c.l.b16 %v287
    %v1505 = vunpack.c.h.b16 %v287
    %v1506 = vunpack.c.l.b16 %v288
    %v1507 = vunpack.c.h.b16 %v288
    %v1508 = vunpack.c.l.b16 %v289
    %v1509 = vunpack.c.h.b16 %v289
    %v1510 = vunpack.c.l.b16 %v290
    %v1511 = vunpack.c.h.b16 %v290
    %v1512 = vunpack.c.l.b16 %v291
    %v1513 = vunpack.c.h.b16 %v291
    %v1514 = vunpack.c.l.b16 %v292
    %v1515 = vunpack.c.h.b16 %v292
    %v1516 = vunpack.c.l.b16 %v293
    %v1517 = vunpack.c.h.b16 %v293
    %v1518 = vunpack.c.l.b16 %v294
    %v1519 = vunpack.c.h.b16 %v294
    %v1520 = vunpack.c.l.b16 %v295
    %v1521 = vunpack.c.h.b16 %v295
    %v1522 = vunpack.c.l.b16 %v296
    %v1523 = vunpack.c.h.b16 %v296
    %v1524 = vunpack.c.l.b16 %v297
    %v1525 = vunpack.c.h.b16 %v297
    %v1526 = vunpack.c.l.b16 %v298
    %v1527 = vunpack.c.h.b16 %v298
    %v1528 = vunpack.c.l.b16 %v299
    %v1529 = vunpack.c.h.b16 %v299
    %v1530 = vunpack.c.l.b16 %v300
    %v1531 = vunpack.c.h.b16 %v300
    %v1532 = vunpack.c.l.b16 %v301
    %v1533 = vunpack.c.h.b16 %v301
    %v1534 = vunpack.c.l.b16 %v302
    %v1535 = vunpack.c.h.b16 %v302
    %v1536 = vunpack.c.l.b16 %v303
    %v1537 = vunpack.c.h.b16 %v303
    %v1538 = vunpack.c.l.b16 %v304
    %v1539 = vunpack.c.h.b16 %v304
    %v1540 = vunpack.c.l.b16 %v305
    %v1541 = vunpack.c.h.b16 %v305
    %v1542 = vunpack.c.l.b16 %v306
    %v1543 = vunpack.c.h.b16 %v306
    %v1544 = vunpack.c.l.b16 %v307
    %v1545 = vunpack.c.h.b16 %v307
    %v1546 = vunpack.c.l.b16 %v308
    %v1547 = vunpack.c.h.b16 %v308
    %v1548 = vunpack.c.l.b16 %v309
    %v1549 = vunpack.c.h.b16 %v309
    %v1550 = vunpack.c.l.b16 %v310
    %v1551 = vunpack.c.h.b16 %v310
    %v1552 = vunpack.c.l.b16 %v311
    %v1553 = vunpack.c.h.b16 %v311
    %v1554 = vunpack.c.l.b16 %v312
    %v1555 = vunpack.c.h.b16 %v312
    %v1556 = vunpack.c.l.b16 %v313
    %v1557 = vunpack.c.h.b16 %v313
    %v1558 = vunpack.c.l.b16 %v314
    %v1559 = vunpack.c.h.b16 %v314
    %v1560 = vunpack.c.l.b16 %v315
    %v1561 = vunpack.c.h.b16 %v315
    %v1562 = vunpack.c.l.b16 %v316
    %v1563 = vunpack.c.h.b16 %v316
    %v1564 = vunpack.c.l.b16 %v317
    %v1565 = vunpack.c.h.b16 %v317
    %v1566 = vunpack.c.l.b16 %v318
    %v1567 = vunpack.c.h.b16 %v318
    %v1568 = vunpack.c.l.b16 %v319
    %v1569 = vunpack.c.h.b16 %v319
    %v1570 = vunpack.c.l.b16 %v320
    %v1571 = vunpack.c.h.b16 %v320
    %v1572 = vunpack.c.l.b16 %v321
    %v1573 = vunpack.c.h.b16 %v321
    %v1574 = vunpack.c.l.b16 %v322
    %v1575 = vunpack.c.h.b16 %v322
    %v1576 = vunpack.c.l.b16 %v323
    %v1577 = vunpack.c.h.b16 %v323
    %v1578 = vunpack.c.l.b16 %v324
    %v1579 = vunpack.c.h.b16 %v324
    %v1580 = vunpack.c.l.b16 %v325
    %v1581 = vunpack.c.h.b16 %v325
    %v1582 = vunpack.c.l.b16 %v326
    %v1583 = vunpack.c.h.b16 %v326
    %v1584 = vunpack.c.l.b16 %v327
    %v1585 = vunpack.c.h.b16 %v327
    %v1586 = vunpack.c.l.b16 %v328
    %v1587 = vunpack.c.h.b16 %v328
    %v1588 = vunpack.c.l.b16 %v329
    %v1589 = vunpack.c.h.b16 %v329
    %v1590 = vunpack.c.l.b16 %v330
    %v1591 = vunpack.c.h.b16 %v330
    %v1592 = vunpack.c.l.b16 %v331
    %v1593 = vunpack.c.h.b16 %v331
    %v1594 = vunpack.c.l.b16 %v332
    %v1595 = vunpack.c.h.b16 %v332
    %v1596 = vunpack.c.l.b16 %v333
    %v1597 = vunpack.c.h.b16 %v333
    %v1598 = vunpack.c.l.b16 %v334
    %v1599 = vunpack.c.h.b16 %v334
    %v1600 = vunpack.c.l.b16 %v335
    %v1601 = vunpack.c.h.b16 %v335
    %v1602 = vunpack.c.l.b16 %v336
    %v1603 = vunpack.c.h.b16 %v336
    %v1604 = vunpack.c.l.b16 %v337
    %v1605 = vunpack.c.h.b16 %v337
    %v1606 = vunpack.c.l.b16 %v338
    %v1607 = vunpack.c.h.b16 %v338
    %v1608 = vunpack.c.l.b16 %v339
    %v1609 = vunpack.c.h.b16 %v339
    %v1610 = vunpack.c.l.b16 %v340
    %v1611 = vunpack.c.h.b16 %v340
    %v1612 = vunpack.c.l.b16 %v341
    %v1613 = vunpack.c.h.b16 %v341
    %v1614 = vunpack.c.l.b16 %v342
    %v1615 = vunpack.c.h.b16 %v342
    %v1616 = vunpack.c.l.b16 %v343
    %v1617 = vunpack.c.h.b16 %v343
    %v1618 = vunpack.c.l.b16 %v344
    %v1619 = vunpack.c.h.b16 %v344
    %v1620 = vunpack.c.l.b16 %v345
    %v1621 = vunpack.c.h.b16 %v345
    %v1622 = vunpack.c.l.b16 %v346
    %v1623 = vunpack.c.h.b16 %v346
    %v1624 = vunpack.c.l.b16 %v347
    %v1625 = vunpack.c.h.b16 %v347
    %v1626 = vunpack.c.l.b16 %v348
    %v1627 = vunpack.c.h.b16 %v348
    %v1628 = vunpack.c.l.b16 %v349
    %v1629 = vunpack.c.h.b16 %v349
    %v1630 = vunpack.c.l.b16 %v350
    %v1631 = vunpack.c.h.b16 %v350
    %v1632 = vunpack.c.l.b16 %v351
    %v1633 = vunpack.c.h.b16 %v351
    %v1634 = vunpack.c.l.b16 %v352
    %v1635 = vunpack.c.h.b16 %v352
    %v1636 = vunpack.c.l.b16 %v353
    %v1637 = vunpack.c.h.b16 %v353
    %v1638 = vunpack.c.l.b16 %v354
    %v1639 = vunpack.c.h.b16 %v354
    %v1640 = vunpack.c.l.b16 %v355
    %v1641 = vunpack.c.h.b16 %v355
    %v1642 = vunpack.c.l.b16 %v356
    %v1643 = vunpack.c.h.b16 %v356
    %v1644 = vunpack.c.l.b16 %v357
    %v1645 = vunpack.c.h.b16 %v357
    %v1646 = vunpack.c.l.b16 %v358
    %v1647 = vunpack.c.h.b16 %v358
    %v1648 = vunpack.c.l.b16 %v359
    %v1649 = vunpack.c.h.b16 %v359
    %v1650 = vunpack.c.l.b16 %v360
    %v1651 = vunpack.c.h.b16 %v360
    %v1652 = vunpack.c.l.b16 %v361
    %v1653 = vunpack.c.h.b16 %v361
    %v1654 = vunpack.c.l.b16 %v362
    %v1655 = vunpack.c.h.b16 %v362
    %v1656 = vunpack.c.l.b16 %v363
    %v1657 = vunpack.c.h.b16 %v363
    %v1658 = vunpack.c.l.b16 %v364
    %v1659 = vunpack.c.h.b16 %v364
    %v1660 = vunpack.c.l.b16 %v365
    %v1661 = vunpack.c.h.b16 %v365
    %v1662 = vunpack.c.l.b16 %v366
    %v1663 = vunpack.c.h.b16 %v366
    %v1664 = vunpack.c.l.b16 %v367
    %v1665 = vunpack.c.h.b16 %v367
    %v1666 = vunpack.c.l.b16 %v368
    %v1667 = vunpack.c.h.b16 %v368
    %v1668 = vunpack.c.l.b16 %v369
    %v1669 = vunpack.c.h.b16 %v369
    %v1670 = vunpack.c.l.b16 %v370
    %v1671 = vunpack.c.h.b16 %v370
    %v1672 = vunpack.c.l.b16 %v371
    %v1673 = vunpack.c.h.b16 %v371
    %v1674 = vunpack.c.l.b16 %v372
    %v1675 = vunpack.c.h.b16 %v372
    %v1676 = vunpack.c.l.b16 %v373
    %v1677 = vunpack.c.h.b16 %v373
    %v1678 = vunpack.c.l.b16 %v374
    %v1679 = vunpack.c.h.b16 %v374
    %v1680 = vunpack.c.l.b16 %v375
    %v1681 = vunpack.c.h.b16 %v375
    %v1682 = vunpack.c.l.b16 %v376
    %v1683 = vunpack.c.h.b16 %v376
    %v1684 = vunpack.c.l.b16 %v377
    %v1685 = vunpack.c.h.b16 %v377
    %v1686 = vunpack.c.l.b16 %v378
    %v1687 = vunpack.c.h.b16 %v378
    %v1688 = vunpack.c.l.b16 %v379
    %v1689 = vunpack.c.h.b16 %v379
    %v1690 = vunpack.c.l.b16 %v380
    %v1691 = vunpack.c.h.b16 %v380
    %v1692 = vunpack.c.l.b16 %v381
    %v1693 = vunpack.c.h.b16 %v381
    %v1694 = vunpack.c.l.b16 %v382
    %v1695 = vunpack.c.h.b16 %v382
    %v1696 = vunpack.c.l.b16 %v383
    %v1697 = vunpack.c.h.b16 %v383
    %v1698 = vunpack.c.l.b16 %v384
    %v1699 = vunpack.c.h.b16 %v384
    %v1700 = vunpack.c.l.b16 %v385
    %v1701 = vunpack.c.h.b16 %v385
    %v1702 = vunpack.c.l.b16 %v386
    %v1703 = vunpack.c.h.b16 %v386
    %v1704 = vunpack.c.l.b16 %v387
    %v1705 = vunpack.c.h.b16 %v387
    %v1706 = vunpack.c.l.b16 %v388
    %v1707 = vunpack.c.h.b16 %v388
    %v1708 = vunpack.c.l.b16 %v389
    %v1709 = vunpack.c.h.b16 %v389
    %v1710 = vunpack.c.l.b16 %v390
    %v1711 = vunpack.c.h.b16 %v390
    %v1712 = vunpack.c.l.b16 %v391
    %v1713 = vunpack.c.h.b16 %v391
    %v1714 = vunpack.c.l.b16 %v392
    %v1715 = vunpack.c.h.b16 %v392
    %v1716 = vunpack.c.l.b16 %v393
    %v1717 = vunpack.c.h.b16 %v393
    %v1718 = vunpack.c.l.b16 %v394
    %v1719 = vunpack.c.h.b16 %v394
    %v1720 = vunpack.c.l.b16 %v395
    %v1721 = vunpack.c.h.b16 %v395
    %v1722 = vunpack.c.l.b16 %v396
    %v1723 = vunpack.c.h.b16 %v396
    %v1724 = vunpack.c.l.b16 %v397
    %v1725 = vunpack.c.h.b16 %v397
    %v1726 = vunpack.c.l.b16 %v398
    %v1727 = vunpack.c.h.b16 %v398
    %v1728 = vunpack.c.l.b16 %v399
    %v1729 = vunpack.c.h.b16 %v399
    %v1730 = vunpack.c.l.b16 %v400
    %v1731 = vunpack.c.h.b16 %v400
    %v1732 = vunpack.c.l.b16 %v401
    %v1733 = vunpack.c.h.b16 %v401
    %v1734 = vunpack.c.l.b16 %v402
    %v1735 = vunpack.c.h.b16 %v402
    %v1736 = vunpack.c.l.b16 %v403
    %v1737 = vunpack.c.h.b16 %v403
    %v1738 = vunpack.c.l.b16 %v404
    %v1739 = vunpack.c.h.b16 %v404
    %v1740 = vunpack.c.l.b16 %v405
    %v1741 = vunpack.c.h.b16 %v405
    %v1742 = vunpack.c.l.b16 %v406
    %v1743 = vunpack.c.h.b16 %v406
    %v1744 = vunpack.c.l.b16 %v407
    %v1745 = vunpack.c.h.b16 %v407
    %v1746 = vunpack.c.l.b16 %v408
    %v1747 = vunpack.c.h.b16 %v408
    %v1748 = vunpack.c.l.b16 %v409
    %v1749 = vunpack.c.h.b16 %v409
    %v1750 = vunpack.c.l.b16 %v410
    %v1751 = vunpack.c.h.b16 %v410
    %v1752 = vunpack.c.l.b16 %v411
    %v1753 = vunpack.c.h.b16 %v411
    %v1754 = vunpack.c.l.b16 %v412
    %v1755 = vunpack.c.h.b16 %v412
    %v1756 = vunpack.c.l.b16 %v413
    %v1757 = vunpack.c.h.b16 %v413
    %v1758 = vunpack.c.l.b16 %v414
    %v1759 = vunpack.c.h.b16 %v414
    %v1760 = vunpack.c.l.b16 %v415
    %v1761 = vunpack.c.h.b16 %v415
    %v1762 = vunpack.c.l.b16 %v416
    %v1763 = vunpack.c.h.b16 %v416
    %v1764 = vunpack.c.l.b16 %v417
    %v1765 = vunpack.c.h.b16 %v417
    %v1766 = vunpack.c.l.b16 %v418
    %v1767 = vunpack.c.h.b16 %v418
    %v1768 = vunpack.c.l.b16 %v419
    %v1769 = vunpack.c.h.b16 %v419
    %v1770 = vunpack.c.l.b16 %v420
    %v1771 = vunpack.c.h.b16 %v420
    %v1772 = vunpack.c.l.b16 %v421
    %v1773 = vunpack.c.h.b16 %v421
    %v1774 = vunpack.c.l.b16 %v422
    %v1775 = vunpack.c.h.b16 %v422
    %v1776 = vunpack.c.l.b16 %v423
    %v1777 = vunpack.c.h.b16 %v423
    %v1778 = vunpack.c.l.b16 %v424
    %v1779 = vunpack.c.h.b16 %v424
    %v1780 = vunpack.c.l.b16 %v425
    %v1781 = vunpack.c.h.b16 %v425
    %v1782 = vunpack.c.l.b16 %v426
    %v1783 = vunpack.c.h.b16 %v426
    %v1784 = vunpack.c.l.b16 %v427
    %v1785 = vunpack.c.h.b16 %v427
    %v1786 = vunpack.c.l.b16 %v428
    %v1787 = vunpack.c.h.b16 %v428
    %v1788 = vunpack.c.l.b16 %v429
    %v1789 = vunpack.c.h.b16 %v429
    %v1790 = vunpack.c.l.b16 %v430
    %v1791 = vunpack.c.h.b16 %v430
    %v1792 = vunpack.c.l.b16 %v431
    %v1793 = vunpack.c.h.b16 %v431
    %v1794 = vunpack.c.l.b16 %v432
    %v1795 = vunpack.c.h.b16 %v432
    %v1796 = vunpack.c.l.b16 %v433
    %v1797 = vunpack.c.h.b16 %v433
    %v1798 = vunpack.c.l.b16 %v434
    %v1799 = vunpack.c.h.b16 %v434
    %v1800 = vunpack.c.l.b16 %v435
    %v1801 = vunpack.c.h.b16 %v435
    %v1802 = vunpack.c.l.b16 %v436
    %v1803 = vunpack.c.h.b16 %v436
    %v1804 = vunpack.c.l.b16 %v437
    %v1805 = vunpack.c.h.b16 %v437
    %v1806 = vunpack.c.l.b16 %v438
    %v1807 = vunpack.c.h.b16 %v438
    %v1808 = vunpack.c.l.b16 %v439
    %v1809 = vunpack.c.h.b16 %v439
    %v1810 = vunpack.c.l.b16 %v440
    %v1811 = vunpack.c.h.b16 %v440
    %v1812 = vunpack.c.l.b16 %v441
    %v1813 = vunpack.c.h.b16 %v441
    %v1814 = vunpack.c.l.b16 %v442
    %v1815 = vunpack.c.h.b16 %v442
    %v1816 = vunpack.c.l.b16 %v443
    %v1817 = vunpack.c.h.b16 %v443
    %v1818 = vunpack.c.l.b16 %v444
    %v1819 = vunpack.c.h.b16 %v444
    %v1820 = vunpack.c.l.b16 %v445
    %v1821 = vunpack.c.h.b16 %v445
    %v1822 = vunpack.c.l.b16 %v446
    %v1823 = vunpack.c.h.b16 %v446
    %v1824 = vunpack.c.l.b16 %v447
    %v1825 = vunpack.c.h.b16 %v447
    %v1826 = vunpack.c.l.b16 %v448
    %v1827 = vunpack.c.h.b16 %v448
    %v1828 = vunpack.c.l.b16 %v449
    %v1829 = vunpack.c.h.b16 %v449
    %v1830 = vunpack.c.l.b16 %v450
    %v1831 = vunpack.c.h.b16 %v450
    %v1832 = vunpack.c.l.b16 %v451
    %v1833 = vunpack.c.h.b16 %v451
    %v1834 = vunpack.c.l.b16 %v452
    %v1835 = vunpack.c.h.b16 %v452
    %v1836 = vunpack.c.l.b16 %v453
    %v1837 = vunpack.c.h.b16 %v453
    %v1838 = vunpack.c.l.b16 %v454
    %v1839 = vunpack.c.h.b16 %v454
    %v1840 = vunpack.c.l.b16 %v455
    %v1841 = vunpack.c.h.b16 %v455
    %v1842 = vunpack.c.l.b16 %v456
    %v1843 = vunpack.c.h.b16 %v456
    %v1844 = vunpack.c.l.b16 %v457
    %v1845 = vunpack.c.h.b16 %v457
    %v1846 = vunpack.c.l.b16 %v458
    %v1847 = vunpack.c.h.b16 %v458
    %v1848 = vunpack.c.l.b16 %v459
    %v1849 = vunpack.c.h.b16 %v459
    %v1850 = vunpack.c.l.b16 %v460
    %v1851 = vunpack.c.h.b16 %v460
    %v1852 = vunpack.c.l.b16 %v461
    %v1853 = vunpack.c.h.b16 %v461
    %v1854 = vunpack.c.l.b16 %v462
    %v1855 = vunpack.c.h.b16 %v462
    %v1856 = vunpack.c.l.b16 %v463
    %v1857 = vunpack.c.h.b16 %v463
    %v1858 = vunpack.c.l.b16 %v464
    %v1859 = vunpack.c.h.b16 %v464
    %v1860 = vunpack.c.l.b16 %v465
    %v1861 = vunpack.c.h.b16 %v465
    %v1862 = vunpack.c.l.b16 %v466
    %v1863 = vunpack.c.h.b16 %v466
    %v1864 = vunpack.c.l.b16 %v467
    %v1865 = vunpack.c.h.b16 %v467
    %v1866 = vunpack.c.l.b16 %v468
    %v1867 = vunpack.c.h.b16 %v468
    %v1868 = vunpack.c.l.b16 %v469
    %v1869 = vunpack.c.h.b16 %v469
    %v1870 = vunpack.c.l.b16 %v470
    %v1871 = vunpack.c.h.b16 %v470
    %v1872 = vunpack.c.l.b16 %v471
    %v1873 = vunpack.c.h.b16 %v471
    %v1874 = vunpack.c.l.b16 %v472
    %v1875 = vunpack.c.h.b16 %v472
    %v1876 = vunpack.c.l.b16 %v473
    %v1877 = vunpack.c.h.b16 %v473
    %v1878 = vunpack.c.l.b16 %v474
    %v1879 = vunpack.c.h.b16 %v474
    %v1880 = vunpack.c.l.b16 %v475
    %v1881 = vunpack.c.h.b16 %v475
    %v1882 = vunpack.c.l.b16 %v476
    %v1883 = vunpack.c.h.b16 %v476
    %v1884 = vunpack.c.l.b16 %v477
    %v1885 = vunpack.c.h.b16 %v477
    %v1886 = vunpack.c.l.b16 %v478
    %v1887 = vunpack.c.h.b16 %v478
    %v1888 = vunpack.c.l.b16 %v479
    %v1889 = vunpack.c.h.b16 %v479
    %v1890 = vunpack.c.l.b16 %v480
    %v1891 = vunpack.c.h.b16 %v480
    %v1892 = vunpack.c.l.b16 %v481
    %v1893 = vunpack.c.h.b16 %v481
    %v1894 = vunpack.c.l.b16 %v482
    %v1895 = vunpack.c.h.b16 %v482
    %v1896 = vunpack.c.l.b16 %v483
    %v1897 = vunpack.c.h.b16 %v483
    %v1898 = vunpack.c.l.b16 %v484
    %v1899 = vunpack.c.h.b16 %v484
    %v1900 = vunpack.c.l.b16 %v485
    %v1901 = vunpack.c.h.b16 %v485
    %v1902 = vunpack.c.l.b16 %v486
    %v1903 = vunpack.c.h.b16 %v486
    %v1904 = vunpack.c.l.b16 %v487
    %v1905 = vunpack.c.h.b16 %v487
    %v1906 = vunpack.c.l.b16 %v488
    %v1907 = vunpack.c.h.b16 %v488
    %v1908 = vunpack.c.l.b16 %v489
    %v1909 = vunpack.c.h.b16 %v489
    %v1910 = vunpack.c.l.b16 %v490
    %v1911 = vunpack.c.h.b16 %v490
    %v1912 = vunpack.c.l.b16 %v491
    %v1913 = vunpack.c.h.b16 %v491
    %v1914 = vunpack.c.l.b16 %v492
    %v1915 = vunpack.c.h.b16 %v492
    %v1916 = vunpack.c.l.b16 %v493
    %v1917 = vunpack.c.h.b16 %v493
    %v1918 = vunpack.c.l.b16 %v494
    %v1919 = vunpack.c.h.b16 %v494
    %v1920 = vunpack.c.l.b16 %v495
    %v1921 = vunpack.c.h.b16 %v495
    %v1922 = vunpack.c.l.b16 %v496
    %v1923 = vunpack.c.h.b16 %v496
    %v1924 = vunpack.c.l.b16 %v497
    %v1925 = vunpack.c.h.b16 %v497
    %v1926 = vunpack.c.l.b16 %v498
    %v1927 = vunpack.c.h.b16 %v498
    %v1928 = vunpack.c.l.b16 %v499
    %v1929 = vunpack.c.h.b16 %v499
    %v1930 = vunpack.c.l.b16 %v500
    %v1931 = vunpack.c.h.b16 %v500
    %v1932 = vunpack.c.l.b16 %v501
    %v1933 = vunpack.c.h.b16 %v501
    %v1934 = vunpack.c.l.b16 %v502
    %v1935 = vunpack.c.h.b16 %v502
    %v1936 = vunpack.c.l.b16 %v503
    %v1937 = vunpack.c.h.b16 %v503
    %v1938 = vunpack.c.l.b16 %v504
    %v1939 = vunpack.c.h.b16 %v504
    %v1940 = vunpack.c.l.b16 %v505
    %v1941 = vunpack.c.h.b16 %v505
    %v1942 = vunpack.c.l.b16 %v506
    %v1943 = vunpack.c.h.b16 %v506
    %v1944 = vunpack.c.l.b16 %v507
    %v1945 = vunpack.c.h.b16 %v507
    %v1946 = vunpack.c.l.b16 %v508
    %v1947 = vunpack.c.h.b16 %v508
    %v1948 = vunpack.c.l.b16 %v509
    %v1949 = vunpack.c.h.b16 %v509
    %v1950 = vunpack.c.l.b16 %v510
    %v1951 = vunpack.c.h.b16 %v510
    %v1952 = vunpack.c.l.b16 %v511
    %v1953 = vunpack.c.h.b16 %v511
    %v1954 = vunpack.c.l.b16 %v512
    %v1955 = vunpack.c.h.b16 %v512
    %v1956 = vunpack.c.l.b16 %v513
    %v1957 = vunpack.c.h.b16 %v513
    %v1958 = vunpack.c.l.b16 %v514
    %v1959 = vunpack.c.h.b16 %v514
    %v1960 = vunpack.c.l.b16 %v515
    %v1961 = vunpack.c.h.b16 %v515
    %v1962 = vunpack.c.l.b16 %v516
    %v1963 = vunpack.c.h.b16 %v516
    %v1964 = vunpack.c.l.b16 %v517
    %v1965 = vunpack.c.h.b16 %v517
    %v1966 = vunpack.c.l.b16 %v518
    %v1967 = vunpack.c.h.b16 %v518
    %v1968 = vunpack.c.l.b16 %v519
    %v1969 = vunpack.c.h.b16 %v519
    %v1970 = vunpack.c.l.b16 %v520
    %v1971 = vunpack.c.h.b16 %v520
    %v1972 = vunpack.c.l.b16 %v521
    %v1973 = vunpack.c.h.b16 %v521
    %v1974 = vunpack.c.l.b16 %v522
    %v1975 = vunpack.c.h.b16 %v522
    %v1976 = vunpack.c.l.b16 %v523
    %v1977 = vunpack.c.h.b16 %v523
    %v1978 = vunpack.c.l.b16 %v524
    %v1979 = vunpack.c.h.b16 %v524
    %v1980 = vunpack.c.l.b16 %v525
    %v1981 = vunpack.c.h.b16 %v525
    %v1982 = vunpack.c.l.b16 %v526
    %v1983 = vunpack.c.h.b16 %v526
    %v1984 = vunpack.c.l.b16 %v527
    %v1985 = vunpack.c.h.b16 %v527
    %v1986 = vunpack.c.l.b16 %v528
    %v1987 = vunpack.c.h.b16 %v528
    %v1988 = vunpack.c.l.b16 %v529
    %v1989 = vunpack.c.h.b16 %v529
    %v1990 = vunpack.c.l.b16 %v530
    %v1991 = vunpack.c.h.b16 %v530
    %v1992 = vunpack.c.l.b16 %v531
    %v1993 = vunpack.c.h.b16 %v531
    %v1994 = vunpack.c.l.b16 %v532
    %v1995 = vunpack.c.h.b16 %v532
    %v1996 = vunpack.c.l.b16 %v533
    %v1997 = vunpack.c.h.b16 %v533
    %v1998 = vunpack.c.l.b16 %v534
    %v1999 = vunpack.c.h.b16 %v534
    %v2000 = vunpack.c.l.b16 %v535
    %v2001 = vunpack.c.h.b16 %v535
    %v2002 = vunpack.c.l.b16 %v536
    %v2003 = vunpack.c.h.b16 %v536
    %v2004 = vunpack.c.l.b16 %v537
    %v2005 = vunpack.c.h.b16 %v537
    %v2006 = vunpack.c.l.b16 %v538
    %v2007 = vunpack.c.h.b16 %v538
    %v2008 = vunpack.c.l.b16 %v539
    %v2009 = vunpack.c.h.b16 %v539
    %v2010 = vunpack.c.l.b16 %v540
    %v2011 = vunpack.c.h.b16 %v540
    %v2012 = vunpack.c.l.b16 %v541
    %v2013 = vunpack.c.h.b16 %v541
    %v2014 = vunpack.c.l.b16 %v542
    %v2015 = vunpack.c.h.b16 %v542
    %v2016 = vunpack.c.l.b16 %v543
    %v2017 = vunpack.c.h.b16 %v543
    %v2018 = vunpack.c.l.b16 %v544
    %v2019 = vunpack.c.h.b16 %v544
    %v2020 = vunpack.c.l.b16 %v545
    %v2021 = vunpack.c.h.b16 %v545
    %v2022 = vunpack.c.l.b16 %v546
    %v2023 = vunpack.c.h.b16 %v546
    %v2024 = vunpack.c.l.b16 %v547
    %v2025 = vunpack.c.h.b16 %v547
    %v2026 = vunpack.c.l.b16 %v548
    %v2027 = vunpack.c.h.b16 %v548
    %v2028 = vunpack.c.l.b16 %v549
    %v2029 = vunpack.c.h.b16 %v549
    %v2030 = vunpack.c.l.b16 %v550
    %v2031 = vunpack.c.h.b16 %v550
    %v2032 = vunpack.c.l.b16 %v551
    %v2033 = vunpack.c.h.b16 %v551
    %v2034 = vunpack.c.l.b16 %v552
    %v2035 = vunpack.c.h.b16 %v552
    %v2036 = vunpack.c.l.b16 %v553
    %v2037 = vunpack.c.h.b16 %v553
    %v2038 = vunpack.c.l.b16 %v554
    %v2039 = vunpack.c.h.b16 %v554
    %v2040 = vunpack.c.l.b16 %v555
    %v2041 = vunpack.c.h.b16 %v555
    %v2042 = vunpack.c.l.b16 %v556
    %v2043 = vunpack.c.h.b16 %v556
    %v2044 = vunpack.c.l.b16 %v557
    %v2045 = vunpack.c.h.b16 %v557
    %v2046 = vunpack.c.l.b16 %v558
    %v2047 = vunpack.c.h.b16 %v558
    %v2048 = vunpack.c.l.b16 %v559
    %v2049 = vunpack.c.h.b16 %v559
    %v2050 = vunpack.c.l.b16 %v560
    %v2051 = vunpack.c.h.b16 %v560
    %v2052 = vunpack.c.l.b16 %v561
    %v2053 = vunpack.c.h.b16 %v561
    %v2054 = vunpack.c.l.b16 %v562
    %v2055 = vunpack.c.h.b16 %v562
    %v2056 = vunpack.c.l.b16 %v563
    %v2057 = vunpack.c.h.b16 %v563
    %v2058 = vunpack.c.l.b16 %v564
    %v2059 = vunpack.c.h.b16 %v564
    %v2060 = vunpack.c.l.b16 %v565
    %v2061 = vunpack.c.h.b16 %v565
    %v2062 = vunpack.c.l.b16 %v566
    %v2063 = vunpack.c.h.b16 %v566
    %v2064 = vunpack.c.l.b16 %v567
    %v2065 = vunpack.c.h.b16 %v567
    %v2066 = vunpack.c.l.b16 %v568
    %v2067 = vunpack.c.h.b16 %v568
    %v2068 = vunpack.c.l.b16 %v569
    %v2069 = vunpack.c.h.b16 %v569
    %v2070 = vunpack.c.l.b16 %v570
    %v2071 = vunpack.c.h.b16 %v570
    %v2072 = vunpack.c.l.b16 %v571
    %v2073 = vunpack.c.h.b16 %v571
    %v2074 = vunpack.c.l.b16 %v572
    %v2075 = vunpack.c.h.b16 %v572
    %v2076 = vunpack.c.l.b16 %v573
    %v2077 = vunpack.c.h.b16 %v573
    %v2078 = vunpack.c.l.b16 %v574
    %v2079 = vunpack.c.h.b16 %v574
    %v2080 = vunpack.c.l.b16 %v575
    %v2081 = vunpack.c.h.b16 %v575
    %v2082 = vunpack.c.l.b16 %v576
    %v2083 = vunpack.c.h.b16 %v576
    %v2084 = vunpack.c.l.b16 %v577
    %v2085 = vunpack.c.h.b16 %v577
    %v2086 = vunpack.c.l.b16 %v578
    %v2087 = vunpack.c.h.b16 %v578
    %v2088 = vunpack.c.l.b16 %v579
    %v2089 = vunpack.c.h.b16 %v579
    %v2090 = vunpack.c.l.b16 %v580
    %v2091 = vunpack.c.h.b16 %v580
    %v2092 = vunpack.c.l.b16 %v581
    %v2093 = vunpack.c.h.b16 %v581
    %v2094 = vunpack.c.l.b16 %v582
    %v2095 = vunpack.c.h.b16 %v582
    %v2096 = vunpack.c.l.b16 %v583
    %v2097 = vunpack.c.h.b16 %v583
    %v2098 = vunpack.c.l.b16 %v584
    %v2099 = vunpack.c.h.b16 %v584
    %v2100 = vunpack.c.l.b16 %v585
    %v2101 = vunpack.c.h.b16 %v585
    %v2102 = vunpack.c.l.b16 %v586
    %v2103 = vunpack.c.h.b16 %v586
    %v2104 = vunpack.c.l.b16 %v587
    %v2105 = vunpack.c.h.b16 %v587
    %v2106 = vunpack.c.l.b16 %v588
    %v2107 = vunpack.c.h.b16 %v588
    %v2108 = vunpack.c.l.b16 %v589
    %v2109 = vunpack.c.h.b16 %v589
    %v2110 = vunpack.c.l.b16 %v590
    %v2111 = vunpack.c.h.b16 %v590
    %v2112 = vunpack.c.l.b16 %v591
    %v2113 = vunpack.c.h.b16 %v591
    %v2114 = vunpack.c.l.b16 %v592
    %v2115 = vunpack.c.h.b16 %v592
    %v2116 = vunpack.c.l.b16 %v593
    %v2117 = vunpack.c.h.b16 %v593
    %v2118 = vunpack.c.l.b16 %v594
    %v2119 = vunpack.c.h.b16 %v594
    %v2120 = vunpack.c.l.b16 %v595
    %v2121 = vunpack.c.h.b16 %v595
    %v2122 = vunpack.c.l.b16 %v596
    %v2123 = vunpack.c.h.b16 %v596
    %v2124 = vunpack.c.l.b16 %v597
    %v2125 = vunpack.c.h.b16 %v597
    %v2126 = vunpack.c.l.b16 %v598
    %v2127 = vunpack.c.h.b16 %v598
    %v2128 = vunpack.c.l.b16 %v599
    %v2129 = vunpack.c.h.b16 %v599
    %v2130 = vunpack.c.l.b16 %v600
    %v2131 = vunpack.c.h.b16 %v600
    %v2132 = vunpack.c.l.b16 %v601
    %v2133 = vunpack.c.h.b16 %v601
    %v2134 = vunpack.c.l.b16 %v602
    %v2135 = vunpack.c.h.b16 %v602
    %v2136 = vunpack.c.l.b16 %v603
    %v2137 = vunpack.c.h.b16 %v603
    %v2138 = vunpack.c.l.b16 %v604
    %v2139 = vunpack.c.h.b16 %v604
    %v2140 = vunpack.c.l.b16 %v605
    %v2141 = vunpack.c.h.b16 %v605
    %v2142 = vunpack.c.l.b16 %v606
    %v2143 = vunpack.c.h.b16 %v606
    %v2144 = vunpack.c.l.b16 %v607
    %v2145 = vunpack.c.h.b16 %v607
    %v2146 = vunpack.c.l.b16 %v608
    %v2147 = vunpack.c.h.b16 %v608
    %v2148 = vunpack.c.l.b16 %v609
    %v2149 = vunpack.c.h.b16 %v609
    %v2150 = vunpack.c.l.b16 %v610
    %v2151 = vunpack.c.h.b16 %v610
    %v2152 = vunpack.c.l.b16 %v611
    %v2153 = vunpack.c.h.b16 %v611
    %v2154 = vpack.c.b16 %v1162, %v1154
    %v2155 = vpack.c.b16 %v1163, %v1155
    %v2156 = vpack.c.b16 %v1164, %v1156
    %v2157 = vpack.c.b16 %v1165, %v1157
    %v2158 = vpack.c.b16 %v1166, %v1158
    %v2159 = vpack.c.b16 %v1167, %v1159
    %v2160 = vpack.c.b16 %v1168, %v1160
    %v2161 = vpack.c.b16 %v1169, %v1161
    %v2162 = vpack.c.b16 %v1178, %v1170
    %v2163 = vpack.c.b16 %v1179, %v1171
    %v2164 = vpack.c.b16 %v1180, %v1172
    %v2165 = vpack.c.b16 %v1181, %v1173
    %v2166 = vpack.c.b16 %v1182, %v1174
    %v2167 = vpack.c.b16 %v1183, %v1175
    %v2168 = vpack.c.b16 %v1184, %v1176
    %v2169 = vpack.c.b16 %v1185, %v1177
    %v2170 = vpack.c.b16 %v1194, %v1186
    %v2171 = vpack.c.b16 %v1195, %v1187
    %v2172 = vpack.c.b16 %v1196, %v1188
    %v2173 = vpack.c.b16 %v1197, %v1189
    %v2174 = vpack.c.b16 %v1198, %v1190
    %v2175 = vpack.c.b16 %v1199, %v1191
    %v2176 = vpack.c.b16 %v1200, %v1192
    %v2177 = vpack.c.b16 %v1201, %v1193
    %v2178 = vpack.c.b16 %v1210, %v1202
    %v2179 = vpack.c.b16 %v1211, %v1203
    %v2180 = vpack.c.b16 %v1212, %v1204
    %v2181 = vpack.c.b16 %v1213, %v1205
    %v2182 = vpack.c.b16 %v1214, %v1206
    %v2183 = vpack.c.b16 %v1215, %v1207
    %v2184 = vpack.c.b16 %v1216, %v1208
    %v2185 = vpack.c.b16 %v1217, %v1209
    %v2186 = vpack.c.b16 %v1226, %v1218
    %v2187 = vpack.c.b16 %v1227, %v1219
    %v2188 = vpack.c.b16 %v1228, %v1220
    %v2189 = vpack.c.b16 %v1229, %v1221
    %v2190 = vpack.c.b16 %v1230, %v1222
    %v2191 = vpack.c.b16 %v1231, %v1223
    %v2192 = vpack.c.b16 %v1232, %v1224
    %v2193 = vpack.c.b16 %v1233, %v1225
    %v2194 = vpack.c.b16 %v1242, %v1234
    %v2195 = vpack.c.b16 %v1243, %v1235
    %v2196 = vpack.c.b16 %v1244, %v1236
    %v2197 = vpack.c.b16 %v1245, %v1237
    %v2198 = vpack.c.b16 %v1246, %v1238
    %v2199 = vpack.c.b16 %v1247, %v1239
    %v2200 = vpack.c.b16 %v1248, %v1240
    %v2201 = vpack.c.b16 %v1249, %v1241
    %v2202 = vpack.c.b16 %v1258, %v1250
    %v2203 = vpack.c.b16 %v1259, %v1251
    %v2204 = vpack.c.b16 %v1260, %v1252
    %v2205 = vpack.c.b16 %v1261, %v1253
    %v2206 = vpack.c.b16 %v1262, %v1254
    %v2207 = vpack.c.b16 %v1263, %v1255
    %v2208 = vpack.c.b16 %v1264, %v1256
    %v2209 = vpack.c.b16 %v1265, %v1257
    %v2210 = vpack.c.b16 %v1274, %v1266
    %v2211 = vpack.c.b16 %v1275, %v1267
    %v2212 = vpack.c.b16 %v1276, %v1268
    %v2213 = vpack.c.b16 %v1277, %v1269
    %v2214 = vpack.c.b16 %v1278, %v1270
    %v2215 = vpack.c.b16 %v1279, %v1271
    %v2216 = vpack.c.b16 %v1280, %v1272
    %v2217 = vpack.c.b16 %v1281, %v1273
    %v2218 = vpack.c.b16 %v1290, %v1282
    %v2219 = vpack.c.b16 %v1291, %v1283
    %v2220 = vpack.c.b16 %v1292, %v1284
    %v2221 = vpack.c.b16 %v1293, %v1285
    %v2222 = vpack.c.b16 %v1294, %v1286
    %v2223 = vpack.c.b16 %v1295, %v1287
    %v2224 = vpack.c.b16 %v1296, %v1288
    %v2225 = vpack.c.b16 %v1297, %v1289
    %v2226 = vpack.c.b16 %v1306, %v1298
    %v2227 = vpack.c.b16 %v1307, %v1299
    %v2228 = vpack.c.b16 %v1308, %v1300
    %v2229 = vpack.c.b16 %v1309, %v1301
    %v2230 = vpack.c.b16 %v1310, %v1302
    %v2231 = vpack.c.b16 %v1311, %v1303
    %v2232 = vpack.c.b16 %v1312, %v1304
    %v2233 = vpack.c.b16 %v1313, %v1305
    %v2234 = vpack.c.b16 %v1322, %v1314
    %v2235 = vpack.c.b16 %v1323, %v1315
    %v2236 = vpack.c.b16 %v1324, %v1316
    %v2237 = vpack.c.b16 %v1325, %v1317
    %v2238 = vpack.c.b16 %v1326, %v1318
    %v2239 = vpack.c.b16 %v1327, %v1319
    %v2240 = vpack.c.b16 %v1328, %v1320
    %v2241 = vpack.c.b16 %v1329, %v1321
    %v2242 = vpack.c.b16 %v1338, %v1330
    %v2243 = vpack.c.b16 %v1339, %v1331
    %v2244 = vpack.c.b16 %v1340, %v1332
    %v2245 = vpack.c.b16 %v1341, %v1333
    %v2246 = vpack.c.b16 %v1342, %v1334
    %v2247 = vpack.c.b16 %v1343, %v1335
    %v2248 = vpack.c.b16 %v1344, %v1336
    %v2249 = vpack.c.b16 %v1345, %v1337
    %v2250 = vpack.c.b16 %v1354, %v1346
    %v2251 = vpack.c.b16 %v1355, %v1347
    %v2252 = vpack.c.b16 %v1356, %v1348
    %v2253 = vpack.c.b16 %v1357, %v1349
    %v2254 = vpack.c.b16 %v1358, %v1350
    %v2255 = vpack.c.b16 %v1359, %v1351
    %v2256 = vpack.c.b16 %v1360, %v1352
    %v2257 = vpack.c.b16 %v1361, %v1353
    %v2258 = vpack.c.b16 %v1370, %v1362
    %v2259 = vpack.c.b16 %v1371, %v1363
    %v2260 = vpack.c.b16 %v1372, %v1364
    %v2261 = vpack.c.b16 %v1373, %v1365
    %v2262 = vpack.c.b16 %v1374, %v1366
    %v2263 = vpack.c.b16 %v1375, %v1367
    %v2264 = vpack.c.b16 %v1376, %v1368
    %v2265 = vpack.c.b16 %v1377, %v1369
    %v2266 = vpack.c.b16 %v1386, %v1378
    %v2267 = vpack.c.b16 %v1387, %v1379
    %v2268 = vpack.c.b16 %v1388, %v1380
    %v2269 = vpack.c.b16 %v1389, %v1381
    %v2270 = vpack.c.b16 %v1390, %v1382
    %v2271 = vpack.c.b16 %v1391, %v1383
    %v2272 = vpack.c.b16 %v1392, %v1384
    %v2273 = vpack.c.b16 %v1393, %v1385
    %v2274 = vpack.c.b16 %v1402, %v1394
    %v2275 = vpack.c.b16 %v1403, %v1395
    %v2276 = vpack.c.b16 %v1404, %v1396
    %v2277 = vpack.c.b16 %v1405, %v1397
    %v2278 = vpack.c.b16 %v1406, %v1398
    %v2279 = vpack.c.b16 %v1407, %v1399
    %v2280 = vpack.c.b16 %v1408, %v1400
    %v2281 = vpack.c.b16 %v1409, %v1401
    %v2282 = vpack.c.b16 %v1418, %v1410
    %v2283 = vpack.c.b16 %v1419, %v1411
    %v2284 = vpack.c.b16 %v1420, %v1412
    %v2285 = vpack.c.b16 %v1421, %v1413
    %v2286 = vpack.c.b16 %v1422, %v1414
    %v2287 = vpack.c.b16 %v1423, %v1415
    %v2288 = vpack.c.b16 %v1424, %v1416
    %v2289 = vpack.c.b16 %v1425, %v1417
    %v2290 = vpack.c.b16 %v1434, %v1426
    %v2291 = vpack.c.b16 %v1435, %v1427
    %v2292 = vpack.c.b16 %v1436, %v1428
    %v2293 = vpack.c.b16 %v1437, %v1429
    %v2294 = vpack.c.b16 %v1438, %v1430
    %v2295 = vpack.c.b16 %v1439, %v1431
    %v2296 = vpack.c.b16 %v1440, %v1432
    %v2297 = vpack.c.b16 %v1441, %v1433
    %v2298 = vpack.c.b16 %v1450, %v1442
    %v2299 = vpack.c.b16 %v1451, %v1443
    %v2300 = vpack.c.b16 %v1452, %v1444
    %v2301 = vpack.c.b16 %v1453, %v1445
    %v2302 = vpack.c.b16 %v1454, %v1446
    %v2303 = vpack.c.b16 %v1455, %v1447
    %v2304 = vpack.c.b16 %v1456, %v1448
    %v2305 = vpack.c.b16 %v1457, %v1449
    %v2306 = vpack.c.b16 %v1466, %v1458
    %v2307 = vpack.c.b16 %v1467, %v1459
    %v2308 = vpack.c.b16 %v1468, %v1460
    %v2309 = vpack.c.b16 %v1469, %v1461
    %v2310 = vpack.c.b16 %v1470, %v1462
    %v2311 = vpack.c.b16 %v1471, %v1463
    %v2312 = vpack.c.b16 %v1472, %v1464
    %v2313 = vpack.c.b16 %v1473, %v1465
    %v2314 = vpack.c.b16 %v1482, %v1474
    %v2315 = vpack.c.b16 %v1483, %v1475
    %v2316 = vpack.c.b16 %v1484, %v1476
    %v2317 = vpack.c.b16 %v1485, %v1477
    %v2318 = vpack.c.b16 %v1486, %v1478
    %v2319 = vpack.c.b16 %v1487, %v1479
    %v2320 = vpack.c.b16 %v1488, %v1480
    %v2321 = vpack.c.b16 %v1489, %v1481
    %v2322 = vpack.c.b16 %v1498, %v1490
    %v2323 = vpack.c.b16 %v1499, %v1491
    %v2324 = vpack.c.b16 %v1500, %v1492
    %v2325 = vpack.c.b16 %v1501, %v1493
    %v2326 = vpack.c.b16 %v1502, %v1494
    %v2327 = vpack.c.b16 %v1503, %v1495
    %v2328 = vpack.c.b16 %v1504, %v1496
    %v2329 = vpack.c.b16 %v1505, %v1497
    %v2330 = vpack.c.b16 %v1514, %v1506
    %v2331 = vpack.c.b16 %v1515, %v1507
    %v2332 = vpack.c.b16 %v1516, %v1508
    %v2333 = vpack.c.b16 %v1517, %v1509
    %v2334 = vpack.c.b16 %v1518, %v1510
    %v2335 = vpack.c.b16 %v1519, %v1511
    %v2336 = vpack.c.b16 %v1520, %v1512
    %v2337 = vpack.c.b16 %v1521, %v1513
    %v2338 = vpack.c.b16 %v1530, %v1522
    %v2339 = vpack.c.b16 %v1531, %v1523
    %v2340 = vpack.c.b16 %v1532, %v1524
    %v2341 = vpack.c.b16 %v1533, %v1525
    %v2342 = vpack.c.b16 %v1534, %v1526
    %v2343 = vpack.c.b16 %v1535, %v1527
    %v2344 = vpack.c.b16 %v1536, %v1528
    %v2345 = vpack.c.b16 %v1537, %v1529
    %v2346 = vpack.c.b16 %v1546, %v1538
    %v2347 = vpack.c.b16 %v1547, %v1539
    %v2348 = vpack.c.b16 %v1548, %v1540
    %v2349 = vpack.c.b16 %v1549, %v1541
    %v2350 = vpack.c.b16 %v1550, %v1542
    %v2351 = vpack.c.b16 %v1551, %v1543
    %v2352 = vpack.c.b16 %v1552, %v1544
    %v2353 = vpack.c.b16 %v1553, %v1545
    %v2354 = vpack.c.b16 %v1562, %v1554
    %v2355 = vpack.c.b16 %v1563, %v1555
    %v2356 = vpack.c.b16 %v1564, %v1556
    %v2357 = vpack.c.b16 %v1565, %v1557
    %v2358 = vpack.c.b16 %v1566, %v1558
    %v2359 = vpack.c.b16 %v1567, %v1559
    %v2360 = vpack.c.b16 %v1568, %v1560
    %v2361 = vpack.c.b16 %v1569, %v1561
    %v2362 = vpack.c.b16 %v1578, %v1570
    %v2363 = vpack.c.b16 %v1579, %v1571
    %v2364 = vpack.c.b16 %v1580, %v1572
    %v2365 = vpack.c.b16 %v1581, %v1573
    %v2366 = vpack.c.b16 %v1582, %v1574
    %v2367 = vpack.c.b16 %v1583, %v1575
    %v2368 = vpack.c.b16 %v1584, %v1576
    %v2369 = vpack.c.b16 %v1585, %v1577
    %v2370 = vpack.c.b16 %v1594, %v1586
    %v2371 = vpack.c.b16 %v1595, %v1587
    %v2372 = vpack.c.b16 %v1596, %v1588
    %v2373 = vpack.c.b16 %v1597, %v1589
    %v2374 = vpack.c.b16 %v1598, %v1590
    %v2375 = vpack.c.b16 %v1599, %v1591
    %v2376 = vpack.c.b16 %v1600, %v1592
    %v2377 = vpack.c.b16 %v1601, %v1593
    %v2378 = vpack.c.b16 %v1610, %v1602
    %v2379 = vpack.c.b16 %v1611, %v1603
    %v2380 = vpack.c.b16 %v1612, %v1604
    %v2381 = vpack.c.b16 %v1613, %v1605
    %v2382 = vpack.c.b16 %v1614, %v1606
    %v2383 = vpack.c.b16 %v1615, %v1607
    %v2384 = vpack.c.b16 %v1616, %v1608
    %v2385 = vpack.c.b16 %v1617, %v1609
    %v2386 = vpack.c.b16 %v1626, %v1618
    %v2387 = vpack.c.b16 %v1627, %v1619
    %v2388 = vpack.c.b16 %v1628, %v1620
    %v2389 = vpack.c.b16 %v1629, %v1621
    %v2390 = vpack.c.b16 %v1630, %v1622
    %v2391 = vpack.c.b16 %v1631, %v1623
    %v2392 = vpack.c.b16 %v1632, %v1624
    %v2393 = vpack.c.b16 %v1633, %v1625
    %v2394 = vpack.c.b16 %v1642, %v1634
    %v2395 = vpack.c.b16 %v1643, %v1635
    %v2396 = vpack.c.b16 %v1644, %v1636
    %v2397 = vpack.c.b16 %v1645, %v1637
    %v2398 = vpack.c.b16 %v1646, %v1638
    %v2399 = vpack.c.b16 %v1647, %v1639
    %v2400 = vpack.c.b16 %v1648, %v1640
    %v2401 = vpack.c.b16 %v1649, %v1641
    %v2402 = vpack.c.b16 %v1658, %v1650
    %v2403 = vpack.c.b16 %v1659, %v1651
    %v2404 = vpack.c.b16 %v1660, %v1652
    %v2405 = vpack.c.b16 %v1661, %v1653
    %v2406 = vpack.c.b16 %v1662, %v1654
    %v2407 = vpack.c.b16 %v1663, %v1655
    %v2408 = vpack.c.b16 %v1664, %v1656
    %v2409 = vpack.c.b16 %v1665, %v1657
    %v2410 = vpack.c.b16 %v1674, %v1666
    %v2411 = vpack.c.b16 %v1675, %v1667
    %v2412 = vpack.c.b16 %v1676, %v1668
    %v2413 = vpack.c.b16 %v1677, %v1669
    %v2414 = vpack.c.b16 %v1678, %v1670
    %v2415 = vpack.c.b16 %v1679, %v1671
    %v2416 = vpack.c.b16 %v1680, %v1672
    %v2417 = vpack.c.b16 %v1681, %v1673
    %v2418 = vpack.c.b16 %v1690, %v1682
    %v2419 = vpack.c.b16 %v1691, %v1683
    %v2420 = vpack.c.b16 %v1692, %v1684
    %v2421 = vpack.c.b16 %v1693, %v1685
    %v2422 = vpack.c.b16 %v1694, %v1686
    %v2423 = vpack.c.b16 %v1695, %v1687
    %v2424 = vpack.c.b16 %v1696, %v1688
    %v2425 = vpack.c.b16 %v1697, %v1689
    %v2426 = vpack.c.b16 %v1706, %v1698
    %v2427 = vpack.c.b16 %v1707, %v1699
    %v2428 = vpack.c.b16 %v1708, %v1700
    %v2429 = vpack.c.b16 %v1709, %v1701
    %v2430 = vpack.c.b16 %v1710, %v1702
    %v2431 = vpack.c.b16 %v1711, %v1703
    %v2432 = vpack.c.b16 %v1712, %v1704
    %v2433 = vpack.c.b16 %v1713, %v1705
    %v2434 = vpack.c.b16 %v1722, %v1714
    %v2435 = vpack.c.b16 %v1723, %v1715
    %v2436 = vpack.c.b16 %v1724, %v1716
    %v2437 = vpack.c.b16 %v1725, %v1717
    %v2438 = vpack.c.b16 %v1726, %v1718
    %v2439 = vpack.c.b16 %v1727, %v1719
    %v2440 = vpack.c.b16 %v1728, %v1720
    %v2441 = vpack.c.b16 %v1729, %v1721
    %v2442 = vpack.c.b16 %v1738, %v1730
    %v2443 = vpack.c.b16 %v1739, %v1731
    %v2444 = vpack.c.b16 %v1740, %v1732
    %v2445 = vpack.c.b16 %v1741, %v1733
    %v2446 = vpack.c.b16 %v1742, %v1734
    %v2447 = vpack.c.b16 %v1743, %v1735
    %v2448 = vpack.c.b16 %v1744, %v1736
    %v2449 = vpack.c.b16 %v1745, %v1737
    %v2450 = vpack.c.b16 %v1754, %v1746
    %v2451 = vpack.c.b16 %v1755, %v1747
    %v2452 = vpack.c.b16 %v1756, %v1748
    %v2453 = vpack.c.b16 %v1757, %v1749
    %v2454 = vpack.c.b16 %v1758, %v1750
    %v2455 = vpack.c.b16 %v1759, %v1751
    %v2456 = vpack.c.b16 %v1760, %v1752
    %v2457 = vpack.c.b16 %v1761, %v1753
    %v2458 = vpack.c.b16 %v1770, %v1762
    %v2459 = vpack.c.b16 %v1771, %v1763
    %v2460 = vpack.c.b16 %v1772, %v1764
    %v2461 = vpack.c.b16 %v1773, %v1765
    %v2462 = vpack.c.b16 %v1774, %v1766
    %v2463 = vpack.c.b16 %v1775, %v1767
    %v2464 = vpack.c.b16 %v1776, %v1768
    %v2465 = vpack.c.b16 %v1777, %v1769
    %v2466 = vpack.c.b16 %v1786, %v1778
    %v2467 = vpack.c.b16 %v1787, %v1779
    %v2468 = vpack.c.b16 %v1788, %v1780
    %v2469 = vpack.c.b16 %v1789, %v1781
    %v2470 = vpack.c.b16 %v1790, %v1782
    %v2471 = vpack.c.b16 %v1791, %v1783
    %v2472 = vpack.c.b16 %v1792, %v1784
    %v2473 = vpack.c.b16 %v1793, %v1785
    %v2474 = vpack.c.b16 %v1802, %v1794
    %v2475 = vpack.c.b16 %v1803, %v1795
    %v2476 = vpack.c.b16 %v1804, %v1796
    %v2477 = vpack.c.b16 %v1805, %v1797
    %v2478 = vpack.c.b16 %v1806, %v1798
    %v2479 = vpack.c.b16 %v1807, %v1799
    %v2480 = vpack.c.b16 %v1808, %v1800
    %v2481 = vpack.c.b16 %v1809, %v1801
    %v2482 = vpack.c.b16 %v1818, %v1810
    %v2483 = vpack.c.b16 %v1819, %v1811
    %v2484 = vpack.c.b16 %v1820, %v1812
    %v2485 = vpack.c.b16 %v1821, %v1813
    %v2486 = vpack.c.b16 %v1822, %v1814
    %v2487 = vpack.c.b16 %v1823, %v1815
    %v2488 = vpack.c.b16 %v1824, %v1816
    %v2489 = vpack.c.b16 %v1825, %v1817
    %v2490 = vpack.c.b16 %v1834, %v1826
    %v2491 = vpack.c.b16 %v1835, %v1827
    %v2492 = vpack.c.b16 %v1836, %v1828
    %v2493 = vpack.c.b16 %v1837, %v1829
    %v2494 = vpack.c.b16 %v1838, %v1830
    %v2495 = vpack.c.b16 %v1839, %v1831
    %v2496 = vpack.c.b16 %v1840, %v1832
    %v2497 = vpack.c.b16 %v1841, %v1833
    %v2498 = vpack.c.b16 %v1850, %v1842
    %v2499 = vpack.c.b16 %v1851, %v1843
    %v2500 = vpack.c.b16 %v1852, %v1844
    %v2501 = vpack.c.b16 %v1853, %v1845
    %v2502 = vpack.c.b16 %v1854, %v1846
    %v2503 = vpack.c.b16 %v1855, %v1847
    %v2504 = vpack.c.b16 %v1856, %v1848
    %v2505 = vpack.c.b16 %v1857, %v1849
    %v2506 = vpack.c.b16 %v1866, %v1858
    %v2507 = vpack.c.b16 %v1867, %v1859
    %v2508 = vpack.c.b16 %v1868, %v1860
    %v2509 = vpack.c.b16 %v1869, %v1861
    %v2510 = vpack.c.b16 %v1870, %v1862
    %v2511 = vpack.c.b16 %v1871, %v1863
    %v2512 = vpack.c.b16 %v1872, %v1864
    %v2513 = vpack.c.b16 %v1873, %v1865
    %v2514 = vpack.c.b16 %v1882, %v1874
    %v2515 = vpack.c.b16 %v1883, %v1875
    %v2516 = vpack.c.b16 %v1884, %v1876
    %v2517 = vpack.c.b16 %v1885, %v1877
    %v2518 = vpack.c.b16 %v1886, %v1878
    %v2519 = vpack.c.b16 %v1887, %v1879
    %v2520 = vpack.c.b16 %v1888, %v1880
    %v2521 = vpack.c.b16 %v1889, %v1881
    %v2522 = vpack.c.b16 %v1898, %v1890
    %v2523 = vpack.c.b16 %v1899, %v1891
    %v2524 = vpack.c.b16 %v1900, %v1892
    %v2525 = vpack.c.b16 %v1901, %v1893
    %v2526 = vpack.c.b16 %v1902, %v1894
    %v2527 = vpack.c.b16 %v1903, %v1895
    %v2528 = vpack.c.b16 %v1904, %v1896
    %v2529 = vpack.c.b16 %v1905, %v1897
    %v2530 = vpack.c.b16 %v1914, %v1906
    %v2531 = vpack.c.b16 %v1915, %v1907
    %v2532 = vpack.c.b16 %v1916, %v1908
    %v2533 = vpack.c.b16 %v1917, %v1909
    %v2534 = vpack.c.b16 %v1918, %v1910
    %v2535 = vpack.c.b16 %v1919, %v1911
    %v2536 = vpack.c.b16 %v1920, %v1912
    %v2537 = vpack.c.b16 %v1921, %v1913
    %v2538 = vpack.c.b16 %v1930, %v1922
    %v2539 = vpack.c.b16 %v1931, %v1923
    %v2540 = vpack.c.b16 %v1932, %v1924
    %v2541 = vpack.c.b16 %v1933, %v1925
    %v2542 = vpack.c.b16 %v1934, %v1926
    %v2543 = vpack.c.b16 %v1935, %v1927
    %v2544 = vpack.c.b16 %v1936, %v1928
    %v2545 = vpack.c.b16 %v1937, %v1929
    %v2546 = vpack.c.b16 %v1946, %v1938
    %v2547 = vpack.c.b16 %v1947, %v1939
    %v2548 = vpack.c.b16 %v1948, %v1940
    %v2549 = vpack.c.b16 %v1949, %v1941
    %v2550 = vpack.c.b16 %v1950, %v1942
    %v2551 = vpack.c.b16 %v1951, %v1943
    %v2552 = vpack.c.b16 %v1952, %v1944
    %v2553 = vpack.c.b16 %v1953, %v1945
    %v2554 = vpack.c.b16 %v1962, %v1954
    %v2555 = vpack.c.b16 %v1963, %v1955
    %v2556 = vpack.c.b16 %v1964, %v1956
    %v2557 = vpack.c.b16 %v1965, %v1957
    %v2558 = vpack.c.b16 %v1966, %v1958
    %v2559 = vpack.c.b16 %v1967, %v1959
    %v2560 = vpack.c.b16 %v1968, %v1960
    %v2561 = vpack.c.b16 %v1969, %v1961
    %v2562 = vpack.c.b16 %v1978, %v1970
    %v2563 = vpack.c.b16 %v1979, %v1971
    %v2564 = vpack.c.b16 %v1980, %v1972
    %v2565 = vpack.c.b16 %v1981, %v1973
    %v2566 = vpack.c.b16 %v1982, %v1974
    %v2567 = vpack.c.b16 %v1983, %v1975
    %v2568 = vpack.c.b16 %v1984, %v1976
    %v2569 = vpack.c.b16 %v1985, %v1977
    %v2570 = vpack.c.b16 %v1994, %v1986
    %v2571 = vpack.c.b16 %v1995, %v1987
    %v2572 = vpack.c.b16 %v1996, %v1988
    %v2573 = vpack.c.b16 %v1997, %v1989
    %v2574 = vpack.c.b16 %v1998, %v1990
    %v2575 = vpack.c.b16 %v1999, %v1991
    %v2576 = vpack.c.b16 %v2000, %v1992
    %v2577 = vpack.c.b16 %v2001, %v1993
    %v2578 = vpack.c.b16 %v2010, %v2002
    %v2579 = vpack.c.b16 %v2011, %v2003
    %v2580 = vpack.c.b16 %v2012, %v2004
    %v2581 = vpack.c.b16 %v2013, %v2005
    %v2582 = vpack.c.b16 %v2014, %v2006
    %v2583 = vpack.c.b16 %v2015, %v2007
    %v2584 = vpack.c.b16 %v2016, %v2008
    %v2585 = vpack.c.b16 %v2017, %v2009
    %v2586 = vpack.c.b16 %v2026, %v2018
    %v2587 = vpack.c.b16 %v2027, %v2019
    %v2588 = vpack.c.b16 %v2028, %v2020
    %v2589 = vpack.c.b16 %v2029, %v2021
    %v2590 = vpack.c.b16 %v2030, %v2022
    %v2591 = vpack.c.b16 %v2031, %v2023
    %v2592 = vpack.c.b16 %v2032, %v2024
    %v2593 = vpack.c.b16 %v2033, %v2025
    %v2594 = vpack.c.b16 %v2042, %v2034
    %v2595 = vpack.c.b16 %v2043, %v2035
    %v2596 = vpack.c.b16 %v2044, %v2036
    %v2597 = vpack.c.b16 %v2045, %v2037
    %v2598 = vpack.c.b16 %v2046, %v2038
    %v2599 = vpack.c.b16 %v2047, %v2039
    %v2600 = vpack.c.b16 %v2048, %v2040
    %v2601 = vpack.c.b16 %v2049, %v2041
    %v2602 = vpack.c.b16 %v2058, %v2050
    %v2603 = vpack.c.b16 %v2059, %v2051
    %v2604 = vpack.c.b16 %v2060, %v2052
    %v2605 = vpack.c.b16 %v2061, %v2053
    %v2606 = vpack.c.b16 %v2062, %v2054
    %v2607 = vpack.c.b16 %v2063, %v2055
    %v2608 = vpack.c.b16 %v2064, %v2056
    %v2609 = vpack.c.b16 %v2065, %v2057
    %v2610 = vpack.c.b16 %v2074, %v2066
    %v2611 = vpack.c.b16 %v2075, %v2067
    %v2612 = vpack.c.b16 %v2076, %v2068
    %v2613 = vpack.c.b16 %v2077, %v2069
    %v2614 = vpack.c.b16 %v2078, %v2070
    %v2615 = vpack.c.b16 %v2079, %v2071
    %v2616 = vpack.c.b16 %v2080, %v2072
    %v2617 = vpack.c.b16 %v2081, %v2073
    %v2618 = vpack.c.b16 %v2090, %v2082
    %v2619 = vpack.c.b16 %v2091, %v2083
    %v2620 = vpack.c.b16 %v2092, %v2084
    %v2621 = vpack.c.b16 %v2093, %v2085
    %v2622 = vpack.c.b16 %v2094, %v2086
    %v2623 = vpack.c.b16 %v2095, %v2087
    %v2624 = vpack.c.b16 %v2096, %v2088
    %v2625 = vpack.c.b16 %v2097, %v2089
    %v2626 = vpack.c.b16 %v2106, %v2098
    %v2627 = vpack.c.b16 %v2107, %v2099
    %v2628 = vpack.c.b16 %v2108, %v2100
    %v2629 = vpack.c.b16 %v2109, %v2101
    %v2630 = vpack.c.b16 %v2110, %v2102
    %v2631 = vpack.c.b16 %v2111, %v2103
    %v2632 = vpack.c.b16 %v2112, %v2104
    %v2633 = vpack.c.b16 %v2113, %v2105
    %v2634 = vpack.c.b16 %v2122, %v2114
    %v2635 = vpack.c.b16 %v2123, %v2115
    %v2636 = vpack.c.b16 %v2124, %v2116
    %v2637 = vpack.c.b16 %v2125, %v2117
    %v2638 = vpack.c.b16 %v2126, %v2118
    %v2639 = vpack.c.b16 %v2127, %v2119
    %v2640 = vpack.c.b16 %v2128, %v2120
    %v2641 = vpack.c.b16 %v2129, %v2121
    %v2642 = vpack.c.b16 %v2138, %v2130
    %v2643 = vpack.c.b16 %v2139, %v2131
    %v2644 = vpack.c.b16 %v2140, %v2132
    %v2645 = vpack.c.b16 %v2141, %v2133
    %v2646 = vpack.c.b16 %v2142, %v2134
    %v2647 = vpack.c.b16 %v2143, %v2135
    %v2648 = vpack.c.b16 %v2144, %v2136
    %v2649 = vpack.c.b16 %v2145, %v2137
    %v2650 = vpack.c.b16 %v2146, %v2146
    %v2651 = vpack.c.b16 %v2147, %v2147
    %v2652 = vpack.c.b16 %v2148, %v2148
    %v2653 = vpack.c.b16 %v2149, %v2149
    %v2654 = vpack.c.b16 %v2150, %v2150
    %v2655 = vpack.c.b16 %v2151, %v2151
    %v2656 = vpack.c.b16 %v2152, %v2152
    %v2657 = vpack.c.b16 %v2153, %v2153
    %vm3154 = vcmask 850944
    %v3156 = vsel %vm3154, %v103, 0
    %v3159 = vsel %vm3154, %v111, 0
    %vm3161 = vcmask 1043456
    %v3163 = vsel %vm3161, %v2650, 0
    %v3166 = vsel %vm3161, %v2651, 0
    %v3169 = vsel %vm3161, %v2652, 0
    %v3172 = vsel %vm3161, %v2653, 0
    %v3175 = vsel %vm3161, %v2654, 0
    %v3178 = vsel %vm3161, %v2655, 0
    %v3181 = vsel %vm3161, %v2656, 0
    %v3184 = vsel %vm3161, %v2657, 0
    %3186 = vmatprep.subr.bf16.mxu0 %v2155
    %3187 = vmatpush1.bf16.msra.mxu0 %v2154
    %3188 = vmatprep.subr.bf16.mxu0 %v2163
    %3189 = vmatpush1.bf16.msra.mxu0 %v2162
    %3190 = vmatprep.subr.bf16.mxu0 %v2171
    %3191 = vmatpush1.bf16.msra.mxu0 %v2170
    %3192 = vmatprep.subr.bf16.mxu0 %v2179
    %3193 = vmatpush1.bf16.msra.mxu0 %v2178
    %3194 = vmatprep.subr.bf16.mxu0 %v2187
    %3195 = vmatpush1.bf16.msra.mxu0 %v2186
    %3196 = vmatprep.subr.bf16.mxu0 %v2195
    %3197 = vmatpush1.bf16.msra.mxu0 %v2194
    %3198 = vmatprep.subr.bf16.mxu0 %v2203
    %3199 = vmatpush1.bf16.msra.mxu0 %v2202
    %3200 = vmatprep.subr.bf16.mxu0 %v2211
    %3201 = vmatpush1.bf16.msra.mxu0 %v2210
    %3202 = vmatprep.subr.bf16.mxu0 %v2219
    %3203 = vmatpush1.bf16.msra.mxu0 %v2218
    %3204 = vmatprep.subr.bf16.mxu0 %v2227
    %3205 = vmatpush1.bf16.msra.mxu0 %v2226
    %3206 = vmatprep.subr.bf16.mxu0 %v2235
    %3207 = vmatpush1.bf16.msra.mxu0 %v2234
    %3208 = vmatprep.subr.bf16.mxu0 %v2243
    %3209 = vmatpush1.bf16.msra.mxu0 %v2242
    %3210 = vmatprep.subr.bf16.mxu0 %v2251
    %3211 = vmatpush1.bf16.msra.mxu0 %v2250
    %3212 = vmatprep.subr.bf16.mxu0 %v2259
    %3213 = vmatpush1.bf16.msra.mxu0 %v2258
    %3214 = vmatprep.subr.bf16.mxu0 %v2267
    %3215 = vmatpush1.bf16.msra.mxu0 %v2266
    %3216 = vmatprep.subr.bf16.mxu0 %v2275
    %3217 = vmatpush1.bf16.msra.mxu0 %v2274
    %3218 = vmatprep.mubr.bf16.mxu0 %v97
    %3219 = vmatmul.mubr.bf16.gmra.mrb[0].mxu0 %v96
    %v3220 = vpop.f32.mrb[0].mxu0
    %v3221 = vadd.f32 %v617, %v3220
    %v3222 = vpop.f32.mrb[0].mxu0
    %v3223 = vadd.f32 %v621, %v3222
    %v3224 = vpop.f32.mrb[0].mxu0
    %v3225 = vadd.f32 %v617, %v3224
    %v3226 = vpop.f32.mrb[0].mxu0
    %v3227 = vadd.f32 %v621, %v3226
    %3228 = vmatprep.mubr.bf16.mxu0 %v105
    %3229 = vmatmul.mubr.bf16.gmra.mrb[0].mxu0 %v104
    %v3230 = vpop.f32.mrb[0].mxu0
    %v3231 = vadd.f32 %v617, %v3230
    %v3232 = vpop.f32.mrb[0].mxu0
    %v3233 = vadd.f32 %v621, %v3232
    %v3234 = vpop.f32.mrb[0].mxu0
    %v3235 = vpop.f32.mrb[0].mxu0
    %3236 = vdwg.mxu0
    %3237 = vmatprep.subr.bf16.mxu0 %v2283
    %3238 = vmatpush1.bf16.msra.mxu0 %v2282
    %3239 = vmatprep.subr.bf16.mxu0 %v2291
    %3240 = vmatpush1.bf16.msra.mxu0 %v2290
    %3241 = vmatprep.subr.bf16.mxu0 %v2299
    %3242 = vmatpush1.bf16.msra.mxu0 %v2298
    %3243 = vmatprep.subr.bf16.mxu0 %v2307
    %3244 = vmatpush1.bf16.msra.mxu0 %v2306
    %3245 = vmatprep.subr.bf16.mxu0 %v2315
    %3246 = vmatpush1.bf16.msra.mxu0 %v2314
    %3247 = vmatprep.subr.bf16.mxu0 %v2323
    %3248 = vmatpush1.bf16.msra.mxu0 %v2322
    %3249 = vmatprep.subr.bf16.mxu0 %v2331
    %3250 = vmatpush1.bf16.msra.mxu0 %v2330
    %3251 = vmatprep.subr.bf16.mxu0 %v2339
    %3252 = vmatpush1.bf16.msra.mxu0 %v2338
    %3253 = vmatprep.subr.bf16.mxu0 %v2347
    %3254 = vmatpush1.bf16.msra.mxu0 %v2346
    %3255 = vmatprep.subr.bf16.mxu0 %v2355
    %3256 = vmatpush1.bf16.msra.mxu0 %v2354
    %3257 = vmatprep.subr.bf16.mxu0 %v2363
    %3258 = vmatpush1.bf16.msra.mxu0 %v2362
    %3259 = vmatprep.subr.bf16.mxu0 %v2371
    %3260 = vmatpush1.bf16.msra.mxu0 %v2370
    %3261 = vmatprep.subr.bf16.mxu0 %v2379
    %3262 = vmatpush1.bf16.msra.mxu0 %v2378
    %3263 = vmatprep.subr.bf16.mxu0 %v2387
    %3264 = vmatpush1.bf16.msra.mxu0 %v2386
    %3265 = vmatprep.subr.bf16.mxu0 %v2395
    %3266 = vmatpush1.bf16.msra.mxu0 %v2394
    %3267 = vmatprep.subr.bf16.mxu0 %v2403
    %3268 = vmatpush1.bf16.msra.mxu0 %v2402
    %3269 = vmatprep.mubr.bf16.mxu0 %v99
    %3270 = vmatmul.mubr.bf16.gmra.mrb[0].mxu0 %v98
    %v3271 = vpop.f32.mrb[0].mxu0
    %v3272 = vadd.f32 %v3221, %v3271
    %v3273 = vpop.f32.mrb[0].mxu0
    %v3274 = vadd.f32 %v3223, %v3273
    %v3275 = vpop.f32.mrb[0].mxu0
    %v3276 = vadd.f32 %v3225, %v3275
    %v3277 = vpop.f32.mrb[0].mxu0
    %v3278 = vadd.f32 %v3227, %v3277
    %3279 = vmatprep.mubr.bf16.mxu0 %v107
    %3280 = vmatmul.mubr.bf16.gmra.mrb[0].mxu0 %v106
    %v3281 = vpop.f32.mrb[0].mxu0
    %v3282 = vadd.f32 %v3231, %v3281
    %v3283 = vpop.f32.mrb[0].mxu0
    %v3284 = vadd.f32 %v3233, %v3283
    %v3285 = vpop.f32.mrb[0].mxu0
    %v3286 = vpop.f32.mrb[0].mxu0
    %3287 = vdwg.mxu0
    %3288 = vmatprep.subr.bf16.mxu0 %v2411
    %3289 = vmatpush1.bf16.msra.mxu0 %v2410
    %3290 = vmatprep.subr.bf16.mxu0 %v2419
    %3291 = vmatpush1.bf16.msra.mxu0 %v2418
    %3292 = vmatprep.subr.bf16.mxu0 %v2427
    %3293 = vmatpush1.bf16.msra.mxu0 %v2426
    %3294 = vmatprep.subr.bf16.mxu0 %v2435
    %3295 = vmatpush1.bf16.msra.mxu0 %v2434
    %3296 = vmatprep.subr.bf16.mxu0 %v2443
    %3297 = vmatpush1.bf16.msra.mxu0 %v2442
    %3298 = vmatprep.subr.bf16.mxu0 %v2451
    %3299 = vmatpush1.bf16.msra.mxu0 %v2450
    %3300 = vmatprep.subr.bf16.mxu0 %v2459
    %3301 = vmatpush1.bf16.msra.mxu0 %v2458
    %3302 = vmatprep.subr.bf16.mxu0 %v2467
    %3303 = vmatpush1.bf16.msra.mxu0 %v2466
    %3304 = vmatprep.subr.bf16.mxu0 %v2475
    %3305 = vmatpush1.bf16.msra.mxu0 %v2474
    %3306 = vmatprep.subr.bf16.mxu0 %v2483
    %3307 = vmatpush1.bf16.msra.mxu0 %v2482
    %3308 = vmatprep.subr.bf16.mxu0 %v2491
    %3309 = vmatpush1.bf16.msra.mxu0 %v2490
    %3310 = vmatprep.subr.bf16.mxu0 %v2499
    %3311 = vmatpush1.bf16.msra.mxu0 %v2498
    %3312 = vmatprep.subr.bf16.mxu0 %v2507
    %3313 = vmatpush1.bf16.msra.mxu0 %v2506
    %3314 = vmatprep.subr.bf16.mxu0 %v2515
    %3315 = vmatpush1.bf16.msra.mxu0 %v2514
    %3316 = vmatprep.subr.bf16.mxu0 %v2523
    %3317 = vmatpush1.bf16.msra.mxu0 %v2522
    %3318 = vmatprep.subr.bf16.mxu0 %v2531
    %3319 = vmatpush1.bf16.msra.mxu0 %v2530
    %3320 = vmatprep.mubr.bf16.mxu0 %v101
    %3321 = vmatmul.mubr.bf16.gmra.mrb[0].mxu0 %v100
    %v3322 = vpop.f32.mrb[0].mxu0
    %v3323 = vadd.f32 %v3272, %v3322
    %v3324 = vpop.f32.mrb[0].mxu0
    %v3325 = vadd.f32 %v3274, %v3324
    %v3326 = vpop.f32.mrb[0].mxu0
    %v3327 = vadd.f32 %v3276, %v3326
    %v3328 = vpop.f32.mrb[0].mxu0
    %v3329 = vadd.f32 %v3278, %v3328
    %3330 = vmatprep.mubr.bf16.mxu0 %v109
    %3331 = vmatmul.mubr.bf16.gmra.mrb[0].mxu0 %v108
    %v3332 = vpop.f32.mrb[0].mxu0
    %v3333 = vadd.f32 %v3282, %v3332
    %v3334 = vpop.f32.mrb[0].mxu0
    %v3335 = vadd.f32 %v3284, %v3334
    %v3336 = vpop.f32.mrb[0].mxu0
    %v3337 = vpop.f32.mrb[0].mxu0
    %3338 = vdwg.mxu0
    %3339 = vmatprep.subr.bf16.mxu0 %v2539
    %3340 = vmatpush1.bf16.msra.mxu0 %v2538
    %3341 = vmatprep.subr.bf16.mxu0 %v2547
    %3342 = vmatpush1.bf16.msra.mxu0 %v2546
    %3343 = vmatprep.subr.bf16.mxu0 %v2555
    %3344 = vmatpush1.bf16.msra.mxu0 %v2554
    %3345 = vmatprep.subr.bf16.mxu0 %v2563
    %3346 = vmatpush1.bf16.msra.mxu0 %v2562
    %3347 = vmatprep.subr.bf16.mxu0 %v2571
    %3348 = vmatpush1.bf16.msra.mxu0 %v2570
    %3349 = vmatprep.subr.bf16.mxu0 %v2579
    %3350 = vmatpush1.bf16.msra.mxu0 %v2578
    %3351 = vmatprep.subr.bf16.mxu0 %v2587
    %3352 = vmatpush1.bf16.msra.mxu0 %v2586
    %3353 = vmatprep.subr.bf16.mxu0 %v2595
    %3354 = vmatpush1.bf16.msra.mxu0 %v2594
    %3355 = vmatprep.subr.bf16.mxu0 %v2603
    %3356 = vmatpush1.bf16.msra.mxu0 %v2602
    %3357 = vmatprep.subr.bf16.mxu0 %v2611
    %3358 = vmatpush1.bf16.msra.mxu0 %v2610
    %3359 = vmatprep.subr.bf16.mxu0 %v2619
    %3360 = vmatpush1.bf16.msra.mxu0 %v2618
    %3361 = vmatprep.subr.bf16.mxu0 %v2627
    %3362 = vmatpush1.bf16.msra.mxu0 %v2626
    %3363 = vmatprep.subr.bf16.mxu0 %v2635
    %3364 = vmatpush1.bf16.msra.mxu0 %v2634
    %3365 = vmatprep.subr.bf16.mxu0 %v2643
    %3366 = vmatpush1.bf16.msra.mxu0 %v2642
    %3367 = vmatprep.subr.bf16.mxu0 %v3166
    %3368 = vmatpush1.bf16.msra.mxu0 %v3163
    %3369 = vmatprep.subr.bf16.mxu0 0
    %3370 = vmatpush1.bf16.msra.mxu0 0
    %3371 = vmatprep.mubr.bf16.mxu0 %v3156
    %3372 = vmatmul.mubr.bf16.gmra.mrb[0].mxu0 %v102
    %v3373 = vpop.f32.mrb[0].mxu0
    %v3374 = vadd.f32 %v3323, %v3373
    %v3375 = vpop.f32.mrb[0].mxu0
    %v3376 = vadd.f32 %v3325, %v3375
    %v3377 = vpop.f32.mrb[0].mxu0
    %v3378 = vadd.f32 %v3327, %v3377
    %v3379 = vpop.f32.mrb[0].mxu0
    %v3380 = vadd.f32 %v3329, %v3379
    %3381 = vmatprep.mubr.bf16.mxu0 %v3159
    %3382 = vmatmul.mubr.bf16.gmra.mrb[0].mxu0 %v110
    %v3383 = vpop.f32.mrb[0].mxu0
    %v3384 = vadd.f32 %v3333, %v3383
    %v3385 = vpop.f32.mrb[0].mxu0
    %v3386 = vadd.f32 %v3335, %v3385
    %v3387 = vpop.f32.mrb[0].mxu0
    %v3388 = vpop.f32.mrb[0].mxu0
    %3389 = vdwg.mxu0
    %3390 = vmatprep.subr.bf16.mxu0 %v2157
    %3391 = vmatpush1.bf16.msra.mxu0 %v2156
    %3392 = vmatprep.subr.bf16.mxu0 %v2165
    %3393 = vmatpush1.bf16.msra.mxu0 %v2164
    %3394 = vmatprep.subr.bf16.mxu0 %v2173
    %3395 = vmatpush1.bf16.msra.mxu0 %v2172
    %3396 = vmatprep.subr.bf16.mxu0 %v2181
    %3397 = vmatpush1.bf16.msra.mxu0 %v2180
    %3398 = vmatprep.subr.bf16.mxu0 %v2189
    %3399 = vmatpush1.bf16.msra.mxu0 %v2188
    %3400 = vmatprep.subr.bf16.mxu0 %v2197
    %3401 = vmatpush1.bf16.msra.mxu0 %v2196
    %3402 = vmatprep.subr.bf16.mxu0 %v2205
    %3403 = vmatpush1.bf16.msra.mxu0 %v2204
    %3404 = vmatprep.subr.bf16.mxu0 %v2213
    %3405 = vmatpush1.bf16.msra.mxu0 %v2212
    %3406 = vmatprep.subr.bf16.mxu0 %v2221
    %3407 = vmatpush1.bf16.msra.mxu0 %v2220
    %3408 = vmatprep.subr.bf16.mxu0 %v2229
    %3409 = vmatpush1.bf16.msra.mxu0 %v2228
    %3410 = vmatprep.subr.bf16.mxu0 %v2237
    %3411 = vmatpush1.bf16.msra.mxu0 %v2236
    %3412 = vmatprep.subr.bf16.mxu0 %v2245
    %3413 = vmatpush1.bf16.msra.mxu0 %v2244
    %3414 = vmatprep.subr.bf16.mxu0 %v2253
    %3415 = vmatpush1.bf16.msra.mxu0 %v2252
    %3416 = vmatprep.subr.bf16.mxu0 %v2261
    %3417 = vmatpush1.bf16.msra.mxu0 %v2260
    %3418 = vmatprep.subr.bf16.mxu0 %v2269
    %3419 = vmatpush1.bf16.msra.mxu0 %v2268
    %3420 = vmatprep.subr.bf16.mxu0 %v2277
    %3421 = vmatpush1.bf16.msra.mxu0 %v2276
    %3422 = vmatprep.mubr.bf16.mxu0 %v97
    %3423 = vmatmul.mubr.bf16.gmra.mrb[0].mxu0 %v96
    %v3424 = vpop.f32.mrb[0].mxu0
    %v3425 = vadd.f32 %v625, %v3424
    %v3426 = vpop.f32.mrb[0].mxu0
    %v3427 = vadd.f32 %v629, %v3426
    %v3428 = vpop.f32.mrb[0].mxu0
    %v3429 = vadd.f32 %v625, %v3428
    %v3430 = vpop.f32.mrb[0].mxu0
    %v3431 = vadd.f32 %v629, %v3430
    %3432 = vmatprep.mubr.bf16.mxu0 %v105
    %3433 = vmatmul.mubr.bf16.gmra.mrb[0].mxu0 %v104
    %v3434 = vpop.f32.mrb[0].mxu0
    %v3435 = vadd.f32 %v625, %v3434
    %v3436 = vpop.f32.mrb[0].mxu0
    %v3437 = vadd.f32 %v629, %v3436
    %v3438 = vpop.f32.mrb[0].mxu0
    %v3439 = vpop.f32.mrb[0].mxu0
    %3440 = vdwg.mxu0
    %3441 = vmatprep.subr.bf16.mxu0 %v2285
    %3442 = vmatpush1.bf16.msra.mxu0 %v2284
    %3443 = vmatprep.subr.bf16.mxu0 %v2293
    %3444 = vmatpush1.bf16.msra.mxu0 %v2292
    %3445 = vmatprep.subr.bf16.mxu0 %v2301
    %3446 = vmatpush1.bf16.msra.mxu0 %v2300
    %3447 = vmatprep.subr.bf16.mxu0 %v2309
    %3448 = vmatpush1.bf16.msra.mxu0 %v2308
    %3449 = vmatprep.subr.bf16.mxu0 %v2317
    %3450 = vmatpush1.bf16.msra.mxu0 %v2316
    %3451 = vmatprep.subr.bf16.mxu0 %v2325
    %3452 = vmatpush1.bf16.msra.mxu0 %v2324
    %3453 = vmatprep.subr.bf16.mxu0 %v2333
    %3454 = vmatpush1.bf16.msra.mxu0 %v2332
    %3455 = vmatprep.subr.bf16.mxu0 %v2341
    %3456 = vmatpush1.bf16.msra.mxu0 %v2340
    %3457 = vmatprep.subr.bf16.mxu0 %v2349
    %3458 = vmatpush1.bf16.msra.mxu0 %v2348
    %3459 = vmatprep.subr.bf16.mxu0 %v2357
    %3460 = vmatpush1.bf16.msra.mxu0 %v2356
    %3461 = vmatprep.subr.bf16.mxu0 %v2365
    %3462 = vmatpush1.bf16.msra.mxu0 %v2364
    %3463 = vmatprep.subr.bf16.mxu0 %v2373
    %3464 = vmatpush1.bf16.msra.mxu0 %v2372
    %3465 = vmatprep.subr.bf16.mxu0 %v2381
    %3466 = vmatpush1.bf16.msra.mxu0 %v2380
    %3467 = vmatprep.subr.bf16.mxu0 %v2389
    %3468 = vmatpush1.bf16.msra.mxu0 %v2388
    %3469 = vmatprep.subr.bf16.mxu0 %v2397
    %3470 = vmatpush1.bf16.msra.mxu0 %v2396
    %3471 = vmatprep.subr.bf16.mxu0 %v2405
    %3472 = vmatpush1.bf16.msra.mxu0 %v2404
    %3473 = vmatprep.mubr.bf16.mxu0 %v99
    %3474 = vmatmul.mubr.bf16.gmra.mrb[0].mxu0 %v98
    %v3475 = vpop.f32.mrb[0].mxu0
    %v3476 = vadd.f32 %v3425, %v3475
    %v3477 = vpop.f32.mrb[0].mxu0
    %v3478 = vadd.f32 %v3427, %v3477
    %v3479 = vpop.f32.mrb[0].mxu0
    %v3480 = vadd.f32 %v3429, %v3479
    %v3481 = vpop.f32.mrb[0].mxu0
    %v3482 = vadd.f32 %v3431, %v3481
    %3483 = vmatprep.mubr.bf16.mxu0 %v107
    %3484 = vmatmul.mubr.bf16.gmra.mrb[0].mxu0 %v106
    %v3485 = vpop.f32.mrb[0].mxu0
    %v3486 = vadd.f32 %v3435, %v3485
    %v3487 = vpop.f32.mrb[0].mxu0
    %v3488 = vadd.f32 %v3437, %v3487
    %v3489 = vpop.f32.mrb[0].mxu0
    %v3490 = vpop.f32.mrb[0].mxu0
    %3491 = vdwg.mxu0
    %3492 = vmatprep.subr.bf16.mxu0 %v2413
    %3493 = vmatpush1.bf16.msra.mxu0 %v2412
    %3494 = vmatprep.subr.bf16.mxu0 %v2421
    %3495 = vmatpush1.bf16.msra.mxu0 %v2420
    %3496 = vmatprep.subr.bf16.mxu0 %v2429
    %3497 = vmatpush1.bf16.msra.mxu0 %v2428
    %3498 = vmatprep.subr.bf16.mxu0 %v2437
    %3499 = vmatpush1.bf16.msra.mxu0 %v2436
    %3500 = vmatprep.subr.bf16.mxu0 %v2445
    %3501 = vmatpush1.bf16.msra.mxu0 %v2444
    %3502 = vmatprep.subr.bf16.mxu0 %v2453
    %3503 = vmatpush1.bf16.msra.mxu0 %v2452
    %3504 = vmatprep.subr.bf16.mxu0 %v2461
    %3505 = vmatpush1.bf16.msra.mxu0 %v2460
    %3506 = vmatprep.subr.bf16.mxu0 %v2469
    %3507 = vmatpush1.bf16.msra.mxu0 %v2468
    %3508 = vmatprep.subr.bf16.mxu0 %v2477
    %3509 = vmatpush1.bf16.msra.mxu0 %v2476
    %3510 = vmatprep.subr.bf16.mxu0 %v2485
    %3511 = vmatpush1.bf16.msra.mxu0 %v2484
    %3512 = vmatprep.subr.bf16.mxu0 %v2493
    %3513 = vmatpush1.bf16.msra.mxu0 %v2492
    %3514 = vmatprep.subr.bf16.mxu0 %v2501
    %3515 = vmatpush1.bf16.msra.mxu0 %v2500
    %3516 = vmatprep.subr.bf16.mxu0 %v2509
    %3517 = vmatpush1.bf16.msra.mxu0 %v2508
    %3518 = vmatprep.subr.bf16.mxu0 %v2517
    %3519 = vmatpush1.bf16.msra.mxu0 %v2516
    %3520 = vmatprep.subr.bf16.mxu0 %v2525
    %3521 = vmatpush1.bf16.msra.mxu0 %v2524
    %3522 = vmatprep.subr.bf16.mxu0 %v2533
    %3523 = vmatpush1.bf16.msra.mxu0 %v2532
    %3524 = vmatprep.mubr.bf16.mxu0 %v101
    %3525 = vmatmul.mubr.bf16.gmra.mrb[0].mxu0 %v100
    %v3526 = vpop.f32.mrb[0].mxu0
    %v3527 = vadd.f32 %v3476, %v3526
    %v3528 = vpop.f32.mrb[0].mxu0
    %v3529 = vadd.f32 %v3478, %v3528
    %v3530 = vpop.f32.mrb[0].mxu0
    %v3531 = vadd.f32 %v3480, %v3530
    %v3532 = vpop.f32.mrb[0].mxu0
    %v3533 = vadd.f32 %v3482, %v3532
    %3534 = vmatprep.mubr.bf16.mxu0 %v109
    %3535 = vmatmul.mubr.bf16.gmra.mrb[0].mxu0 %v108
    %v3536 = vpop.f32.mrb[0].mxu0
    %v3537 = vadd.f32 %v3486, %v3536
    %v3538 = vpop.f32.mrb[0].mxu0
    %v3539 = vadd.f32 %v3488, %v3538
    %v3540 = vpop.f32.mrb[0].mxu0
    %v3541 = vpop.f32.mrb[0].mxu0
    %3542 = vdwg.mxu0
    %3543 = vmatprep.subr.bf16.mxu0 %v2541
    %3544 = vmatpush1.bf16.msra.mxu0 %v2540
    %3545 = vmatprep.subr.bf16.mxu0 %v2549
    %3546 = vmatpush1.bf16.msra.mxu0 %v2548
    %3547 = vmatprep.subr.bf16.mxu0 %v2557
    %3548 = vmatpush1.bf16.msra.mxu0 %v2556
    %3549 = vmatprep.subr.bf16.mxu0 %v2565
    %3550 = vmatpush1.bf16.msra.mxu0 %v2564
    %3551 = vmatprep.subr.bf16.mxu0 %v2573
    %3552 = vmatpush1.bf16.msra.mxu0 %v2572
    %3553 = vmatprep.subr.bf16.mxu0 %v2581
    %3554 = vmatpush1.bf16.msra.mxu0 %v2580
    %3555 = vmatprep.subr.bf16.mxu0 %v2589
    %3556 = vmatpush1.bf16.msra.mxu0 %v2588
    %3557 = vmatprep.subr.bf16.mxu0 %v2597
    %3558 = vmatpush1.bf16.msra.mxu0 %v2596
    %3559 = vmatprep.subr.bf16.mxu0 %v2605
    %3560 = vmatpush1.bf16.msra.mxu0 %v2604
    %3561 = vmatprep.subr.bf16.mxu0 %v2613
    %3562 = vmatpush1.bf16.msra.mxu0 %v2612
    %3563 = vmatprep.subr.bf16.mxu0 %v2621
    %3564 = vmatpush1.bf16.msra.mxu0 %v2620
    %3565 = vmatprep.subr.bf16.mxu0 %v2629
    %3566 = vmatpush1.bf16.msra.mxu0 %v2628
    %3567 = vmatprep.subr.bf16.mxu0 %v2637
    %3568 = vmatpush1.bf16.msra.mxu0 %v2636
    %3569 = vmatprep.subr.bf16.mxu0 %v2645
    %3570 = vmatpush1.bf16.msra.mxu0 %v2644
    %3571 = vmatprep.subr.bf16.mxu0 %v3172
    %3572 = vmatpush1.bf16.msra.mxu0 %v3169
    %3573 = vmatprep.subr.bf16.mxu0 0
    %3574 = vmatpush1.bf16.msra.mxu0 0
    %3575 = vmatprep.mubr.bf16.mxu0 %v3156
    %3576 = vmatmul.mubr.bf16.gmra.mrb[0].mxu0 %v102
    %v3577 = vpop.f32.mrb[0].mxu0
    %v3578 = vadd.f32 %v3527, %v3577
    %v3579 = vpop.f32.mrb[0].mxu0
    %v3580 = vadd.f32 %v3529, %v3579
    %v3581 = vpop.f32.mrb[0].mxu0
    %v3582 = vadd.f32 %v3531, %v3581
    %v3583 = vpop.f32.mrb[0].mxu0
    %v3584 = vadd.f32 %v3533, %v3583
    %3585 = vmatprep.mubr.bf16.mxu0 %v3159
    %3586 = vmatmul.mubr.bf16.gmra.mrb[0].mxu0 %v110
    %v3587 = vpop.f32.mrb[0].mxu0
    %v3588 = vadd.f32 %v3537, %v3587
    %v3589 = vpop.f32.mrb[0].mxu0
    %v3590 = vadd.f32 %v3539, %v3589
    %v3591 = vpop.f32.mrb[0].mxu0
    %v3592 = vpop.f32.mrb[0].mxu0
    %3593 = vdwg.mxu0
    %3594 = vmatprep.subr.bf16.mxu0 %v2159
    %3595 = vmatpush1.bf16.msra.mxu0 %v2158
    %3596 = vmatprep.subr.bf16.mxu0 %v2167
    %3597 = vmatpush1.bf16.msra.mxu0 %v2166
    %3598 = vmatprep.subr.bf16.mxu0 %v2175
    %3599 = vmatpush1.bf16.msra.mxu0 %v2174
    %3600 = vmatprep.subr.bf16.mxu0 %v2183
    %3601 = vmatpush1.bf16.msra.mxu0 %v2182
    %3602 = vmatprep.subr.bf16.mxu0 %v2191
    %3603 = vmatpush1.bf16.msra.mxu0 %v2190
    %3604 = vmatprep.subr.bf16.mxu0 %v2199
    %3605 = vmatpush1.bf16.msra.mxu0 %v2198
    %3606 = vmatprep.subr.bf16.mxu0 %v2207
    %3607 = vmatpush1.bf16.msra.mxu0 %v2206
    %3608 = vmatprep.subr.bf16.mxu0 %v2215
    %3609 = vmatpush1.bf16.msra.mxu0 %v2214
    %3610 = vmatprep.subr.bf16.mxu0 %v2223
    %3611 = vmatpush1.bf16.msra.mxu0 %v2222
    %3612 = vmatprep.subr.bf16.mxu0 %v2231
    %3613 = vmatpush1.bf16.msra.mxu0 %v2230
    %3614 = vmatprep.subr.bf16.mxu0 %v2239
    %3615 = vmatpush1.bf16.msra.mxu0 %v2238
    %3616 = vmatprep.subr.bf16.mxu0 %v2247
    %3617 = vmatpush1.bf16.msra.mxu0 %v2246
    %3618 = vmatprep.subr.bf16.mxu0 %v2255
    %3619 = vmatpush1.bf16.msra.mxu0 %v2254
    %3620 = vmatprep.subr.bf16.mxu0 %v2263
    %3621 = vmatpush1.bf16.msra.mxu0 %v2262
    %3622 = vmatprep.subr.bf16.mxu0 %v2271
    %3623 = vmatpush1.bf16.msra.mxu0 %v2270
    %3624 = vmatprep.subr.bf16.mxu0 %v2279
    %3625 = vmatpush1.bf16.msra.mxu0 %v2278
    %3626 = vmatprep.mubr.bf16.mxu0 %v97
    %3627 = vmatmul.mubr.bf16.gmra.mrb[0].mxu0 %v96
    %v3628 = vpop.f32.mrb[0].mxu0
    %v3629 = vadd.f32 %v633, %v3628
    %v3630 = vpop.f32.mrb[0].mxu0
    %v3631 = vadd.f32 %v637, %v3630
    %v3632 = vpop.f32.mrb[0].mxu0
    %v3633 = vadd.f32 %v633, %v3632
    %v3634 = vpop.f32.mrb[0].mxu0
    %v3635 = vadd.f32 %v637, %v3634
    %3636 = vmatprep.mubr.bf16.mxu0 %v105
    %3637 = vmatmul.mubr.bf16.gmra.mrb[0].mxu0 %v104
    %v3638 = vpop.f32.mrb[0].mxu0
    %v3639 = vadd.f32 %v633, %v3638
    %v3640 = vpop.f32.mrb[0].mxu0
    %v3641 = vadd.f32 %v637, %v3640
    %v3642 = vpop.f32.mrb[0].mxu0
    %v3643 = vpop.f32.mrb[0].mxu0
    %3644 = vdwg.mxu0
    %3645 = vmatprep.subr.bf16.mxu0 %v2287
    %3646 = vmatpush1.bf16.msra.mxu0 %v2286
    %3647 = vmatprep.subr.bf16.mxu0 %v2295
    %3648 = vmatpush1.bf16.msra.mxu0 %v2294
    %3649 = vmatprep.subr.bf16.mxu0 %v2303
    %3650 = vmatpush1.bf16.msra.mxu0 %v2302
    %3651 = vmatprep.subr.bf16.mxu0 %v2311
    %3652 = vmatpush1.bf16.msra.mxu0 %v2310
    %3653 = vmatprep.subr.bf16.mxu0 %v2319
    %3654 = vmatpush1.bf16.msra.mxu0 %v2318
    %3655 = vmatprep.subr.bf16.mxu0 %v2327
    %3656 = vmatpush1.bf16.msra.mxu0 %v2326
    %3657 = vmatprep.subr.bf16.mxu0 %v2335
    %3658 = vmatpush1.bf16.msra.mxu0 %v2334
    %3659 = vmatprep.subr.bf16.mxu0 %v2343
    %3660 = vmatpush1.bf16.msra.mxu0 %v2342
    %3661 = vmatprep.subr.bf16.mxu0 %v2351
    %3662 = vmatpush1.bf16.msra.mxu0 %v2350
    %3663 = vmatprep.subr.bf16.mxu0 %v2359
    %3664 = vmatpush1.bf16.msra.mxu0 %v2358
    %3665 = vmatprep.subr.bf16.mxu0 %v2367
    %3666 = vmatpush1.bf16.msra.mxu0 %v2366
    %3667 = vmatprep.subr.bf16.mxu0 %v2375
    %3668 = vmatpush1.bf16.msra.mxu0 %v2374
    %3669 = vmatprep.subr.bf16.mxu0 %v2383
    %3670 = vmatpush1.bf16.msra.mxu0 %v2382
    %3671 = vmatprep.subr.bf16.mxu0 %v2391
    %3672 = vmatpush1.bf16.msra.mxu0 %v2390
    %3673 = vmatprep.subr.bf16.mxu0 %v2399
    %3674 = vmatpush1.bf16.msra.mxu0 %v2398
    %3675 = vmatprep.subr.bf16.mxu0 %v2407
    %3676 = vmatpush1.bf16.msra.mxu0 %v2406
    %3677 = vmatprep.mubr.bf16.mxu0 %v99
    %3678 = vmatmul.mubr.bf16.gmra.mrb[0].mxu0 %v98
    %v3679 = vpop.f32.mrb[0].mxu0
    %v3680 = vadd.f32 %v3629, %v3679
    %v3681 = vpop.f32.mrb[0].mxu0
    %v3682 = vadd.f32 %v3631, %v3681
    %v3683 = vpop.f32.mrb[0].mxu0
    %v3684 = vadd.f32 %v3633, %v3683
    %v3685 = vpop.f32.mrb[0].mxu0
    %v3686 = vadd.f32 %v3635, %v3685
    %3687 = vmatprep.mubr.bf16.mxu0 %v107
    %3688 = vmatmul.mubr.bf16.gmra.mrb[0].mxu0 %v106
    %v3689 = vpop.f32.mrb[0].mxu0
    %v3690 = vadd.f32 %v3639, %v3689
    %v3691 = vpop.f32.mrb[0].mxu0
    %v3692 = vadd.f32 %v3641, %v3691
    %v3693 = vpop.f32.mrb[0].mxu0
    %v3694 = vpop.f32.mrb[0].mxu0
    %3695 = vdwg.mxu0
    %3696 = vmatprep.subr.bf16.mxu0 %v2415
    %3697 = vmatpush1.bf16.msra.mxu0 %v2414
    %3698 = vmatprep.subr.bf16.mxu0 %v2423
    %3699 = vmatpush1.bf16.msra.mxu0 %v2422
    %3700 = vmatprep.subr.bf16.mxu0 %v2431
    %3701 = vmatpush1.bf16.msra.mxu0 %v2430
    %3702 = vmatprep.subr.bf16.mxu0 %v2439
    %3703 = vmatpush1.bf16.msra.mxu0 %v2438
    %3704 = vmatprep.subr.bf16.mxu0 %v2447
    %3705 = vmatpush1.bf16.msra.mxu0 %v2446
    %3706 = vmatprep.subr.bf16.mxu0 %v2455
    %3707 = vmatpush1.bf16.msra.mxu0 %v2454
    %3708 = vmatprep.subr.bf16.mxu0 %v2463
    %3709 = vmatpush1.bf16.msra.mxu0 %v2462
    %3710 = vmatprep.subr.bf16.mxu0 %v2471
    %3711 = vmatpush1.bf16.msra.mxu0 %v2470
    %3712 = vmatprep.subr.bf16.mxu0 %v2479
    %3713 = vmatpush1.bf16.msra.mxu0 %v2478
    %3714 = vmatprep.subr.bf16.mxu0 %v2487
    %3715 = vmatpush1.bf16.msra.mxu0 %v2486
    %3716 = vmatprep.subr.bf16.mxu0 %v2495
    %3717 = vmatpush1.bf16.msra.mxu0 %v2494
    %3718 = vmatprep.subr.bf16.mxu0 %v2503
    %3719 = vmatpush1.bf16.msra.mxu0 %v2502
    %3720 = vmatprep.subr.bf16.mxu0 %v2511
    %3721 = vmatpush1.bf16.msra.mxu0 %v2510
    %3722 = vmatprep.subr.bf16.mxu0 %v2519
    %3723 = vmatpush1.bf16.msra.mxu0 %v2518
    %3724 = vmatprep.subr.bf16.mxu0 %v2527
    %3725 = vmatpush1.bf16.msra.mxu0 %v2526
    %3726 = vmatprep.subr.bf16.mxu0 %v2535
    %3727 = vmatpush1.bf16.msra.mxu0 %v2534
    %3728 = vmatprep.mubr.bf16.mxu0 %v101
    %3729 = vmatmul.mubr.bf16.gmra.mrb[0].mxu0 %v100
    %v3730 = vpop.f32.mrb[0].mxu0
    %v3731 = vadd.f32 %v3680, %v3730
    %v3732 = vpop.f32.mrb[0].mxu0
    %v3733 = vadd.f32 %v3682, %v3732
    %v3734 = vpop.f32.mrb[0].mxu0
    %v3735 = vadd.f32 %v3684, %v3734
    %v3736 = vpop.f32.mrb[0].mxu0
    %v3737 = vadd.f32 %v3686, %v3736
    %3738 = vmatprep.mubr.bf16.mxu0 %v109
    %3739 = vmatmul.mubr.bf16.gmra.mrb[0].mxu0 %v108
    %v3740 = vpop.f32.mrb[0].mxu0
    %v3741 = vadd.f32 %v3690, %v3740
    %v3742 = vpop.f32.mrb[0].mxu0
    %v3743 = vadd.f32 %v3692, %v3742
    %v3744 = vpop.f32.mrb[0].mxu0
    %v3745 = vpop.f32.mrb[0].mxu0
    %3746 = vdwg.mxu0
    %3747 = vmatprep.subr.bf16.mxu0 %v2543
    %3748 = vmatpush1.bf16.msra.mxu0 %v2542
    %3749 = vmatprep.subr.bf16.mxu0 %v2551
    %3750 = vmatpush1.bf16.msra.mxu0 %v2550
    %3751 = vmatprep.subr.bf16.mxu0 %v2559
    %3752 = vmatpush1.bf16.msra.mxu0 %v2558
    %3753 = vmatprep.subr.bf16.mxu0 %v2567
    %3754 = vmatpush1.bf16.msra.mxu0 %v2566
    %3755 = vmatprep.subr.bf16.mxu0 %v2575
    %3756 = vmatpush1.bf16.msra.mxu0 %v2574
    %3757 = vmatprep.subr.bf16.mxu0 %v2583
    %3758 = vmatpush1.bf16.msra.mxu0 %v2582
    %3759 = vmatprep.subr.bf16.mxu0 %v2591
    %3760 = vmatpush1.bf16.msra.mxu0 %v2590
    %3761 = vmatprep.subr.bf16.mxu0 %v2599
    %3762 = vmatpush1.bf16.msra.mxu0 %v2598
    %3763 = vmatprep.subr.bf16.mxu0 %v2607
    %3764 = vmatpush1.bf16.msra.mxu0 %v2606
    %3765 = vmatprep.subr.bf16.mxu0 %v2615
    %3766 = vmatpush1.bf16.msra.mxu0 %v2614
    %3767 = vmatprep.subr.bf16.mxu0 %v2623
    %3768 = vmatpush1.bf16.msra.mxu0 %v2622
    %3769 = vmatprep.subr.bf16.mxu0 %v2631
    %3770 = vmatpush1.bf16.msra.mxu0 %v2630
    %3771 = vmatprep.subr.bf16.mxu0 %v2639
    %3772 = vmatpush1.bf16.msra.mxu0 %v2638
    %3773 = vmatprep.subr.bf16.mxu0 %v2647
    %3774 = vmatpush1.bf16.msra.mxu0 %v2646
    %3775 = vmatprep.subr.bf16.mxu0 %v3178
    %3776 = vmatpush1.bf16.msra.mxu0 %v3175
    %3777 = vmatprep.subr.bf16.mxu0 0
    %3778 = vmatpush1.bf16.msra.mxu0 0
    %3779 = vmatprep.mubr.bf16.mxu0 %v3156
    %3780 = vmatmul.mubr.bf16.gmra.mrb[0].mxu0 %v102
    %v3781 = vpop.f32.mrb[0].mxu0
    %v3782 = vadd.f32 %v3731, %v3781
    %v3783 = vpop.f32.mrb[0].mxu0
    %v3784 = vadd.f32 %v3733, %v3783
    %v3785 = vpop.f32.mrb[0].mxu0
    %v3786 = vadd.f32 %v3735, %v3785
    %v3787 = vpop.f32.mrb[0].mxu0
    %v3788 = vadd.f32 %v3737, %v3787
    %3789 = vmatprep.mubr.bf16.mxu0 %v3159
    %3790 = vmatmul.mubr.bf16.gmra.mrb[0].mxu0 %v110
    %v3791 = vpop.f32.mrb[0].mxu0
    %v3792 = vadd.f32 %v3741, %v3791
    %v3793 = vpop.f32.mrb[0].mxu0
    %v3794 = vadd.f32 %v3743, %v3793
    %v3795 = vpop.f32.mrb[0].mxu0
    %v3796 = vpop.f32.mrb[0].mxu0
    %3797 = vdwg.mxu0
    %3798 = vmatprep.subr.bf16.mxu0 %v2161
    %3799 = vmatpush1.bf16.msra.mxu0 %v2160
    %3800 = vmatprep.subr.bf16.mxu0 %v2169
    %3801 = vmatpush1.bf16.msra.mxu0 %v2168
    %3802 = vmatprep.subr.bf16.mxu0 %v2177
    %3803 = vmatpush1.bf16.msra.mxu0 %v2176
    %3804 = vmatprep.subr.bf16.mxu0 %v2185
    %3805 = vmatpush1.bf16.msra.mxu0 %v2184
    %3806 = vmatprep.subr.bf16.mxu0 %v2193
    %3807 = vmatpush1.bf16.msra.mxu0 %v2192
    %3808 = vmatprep.subr.bf16.mxu0 %v2201
    %3809 = vmatpush1.bf16.msra.mxu0 %v2200
    %3810 = vmatprep.subr.bf16.mxu0 %v2209
    %3811 = vmatpush1.bf16.msra.mxu0 %v2208
    %3812 = vmatprep.subr.bf16.mxu0 %v2217
    %3813 = vmatpush1.bf16.msra.mxu0 %v2216
    %3814 = vmatprep.subr.bf16.mxu0 %v2225
    %3815 = vmatpush1.bf16.msra.mxu0 %v2224
    %3816 = vmatprep.subr.bf16.mxu0 %v2233
    %3817 = vmatpush1.bf16.msra.mxu0 %v2232
    %3818 = vmatprep.subr.bf16.mxu0 %v2241
    %3819 = vmatpush1.bf16.msra.mxu0 %v2240
    %3820 = vmatprep.subr.bf16.mxu0 %v2249
    %3821 = vmatpush1.bf16.msra.mxu0 %v2248
    %3822 = vmatprep.subr.bf16.mxu0 %v2257
    %3823 = vmatpush1.bf16.msra.mxu0 %v2256
    %3824 = vmatprep.subr.bf16.mxu0 %v2265
    %3825 = vmatpush1.bf16.msra.mxu0 %v2264
    %3826 = vmatprep.subr.bf16.mxu0 %v2273
    %3827 = vmatpush1.bf16.msra.mxu0 %v2272
    %3828 = vmatprep.subr.bf16.mxu0 %v2281
    %3829 = vmatpush1.bf16.msra.mxu0 %v2280
    %3830 = vmatprep.mubr.bf16.mxu0 %v97
    %3831 = vmatmul.mubr.bf16.gmra.mrb[0].mxu0 %v96
    %v3832 = vpop.f32.mrb[0].mxu0
    %v3833 = vadd.f32 %v641, %v3832
    %v3834 = vpop.f32.mrb[0].mxu0
    %v3835 = vadd.f32 %v645, %v3834
    %v3836 = vpop.f32.mrb[0].mxu0
    %v3837 = vadd.f32 %v641, %v3836
    %v3838 = vpop.f32.mrb[0].mxu0
    %v3839 = vadd.f32 %v645, %v3838
    %3840 = vmatprep.mubr.bf16.mxu0 %v105
    %3841 = vmatmul.mubr.bf16.gmra.mrb[0].mxu0 %v104
    %v3842 = vpop.f32.mrb[0].mxu0
    %v3843 = vadd.f32 %v641, %v3842
    %v3844 = vpop.f32.mrb[0].mxu0
    %v3845 = vadd.f32 %v645, %v3844
    %v3846 = vpop.f32.mrb[0].mxu0
    %v3847 = vpop.f32.mrb[0].mxu0
    %3848 = vdwg.mxu0
    %3849 = vmatprep.subr.bf16.mxu0 %v2289
    %3850 = vmatpush1.bf16.msra.mxu0 %v2288
    %3851 = vmatprep.subr.bf16.mxu0 %v2297
    %3852 = vmatpush1.bf16.msra.mxu0 %v2296
    %3853 = vmatprep.subr.bf16.mxu0 %v2305
    %3854 = vmatpush1.bf16.msra.mxu0 %v2304
    %3855 = vmatprep.subr.bf16.mxu0 %v2313
    %3856 = vmatpush1.bf16.msra.mxu0 %v2312
    %3857 = vmatprep.subr.bf16.mxu0 %v2321
    %3858 = vmatpush1.bf16.msra.mxu0 %v2320
    %3859 = vmatprep.subr.bf16.mxu0 %v2329
    %3860 = vmatpush1.bf16.msra.mxu0 %v2328
    %3861 = vmatprep.subr.bf16.mxu0 %v2337
    %3862 = vmatpush1.bf16.msra.mxu0 %v2336
    %3863 = vmatprep.subr.bf16.mxu0 %v2345
    %3864 = vmatpush1.bf16.msra.mxu0 %v2344
    %3865 = vmatprep.subr.bf16.mxu0 %v2353
    %3866 = vmatpush1.bf16.msra.mxu0 %v2352
    %3867 = vmatprep.subr.bf16.mxu0 %v2361
    %3868 = vmatpush1.bf16.msra.mxu0 %v2360
    %3869 = vmatprep.subr.bf16.mxu0 %v2369
    %3870 = vmatpush1.bf16.msra.mxu0 %v2368
    %3871 = vmatprep.subr.bf16.mxu0 %v2377
    %3872 = vmatpush1.bf16.msra.mxu0 %v2376
    %3873 = vmatprep.subr.bf16.mxu0 %v2385
    %3874 = vmatpush1.bf16.msra.mxu0 %v2384
    %3875 = vmatprep.subr.bf16.mxu0 %v2393
    %3876 = vmatpush1.bf16.msra.mxu0 %v2392
    %3877 = vmatprep.subr.bf16.mxu0 %v2401
    %3878 = vmatpush1.bf16.msra.mxu0 %v2400
    %3879 = vmatprep.subr.bf16.mxu0 %v2409
    %3880 = vmatpush1.bf16.msra.mxu0 %v2408
    %3881 = vmatprep.mubr.bf16.mxu0 %v99
    %3882 = vmatmul.mubr.bf16.gmra.mrb[0].mxu0 %v98
    %v3883 = vpop.f32.mrb[0].mxu0
    %v3884 = vadd.f32 %v3833, %v3883
    %v3885 = vpop.f32.mrb[0].mxu0
    %v3886 = vadd.f32 %v3835, %v3885
    %v3887 = vpop.f32.mrb[0].mxu0
    %v3888 = vadd.f32 %v3837, %v3887
    %v3889 = vpop.f32.mrb[0].mxu0
    %v3890 = vadd.f32 %v3839, %v3889
    %3891 = vmatprep.mubr.bf16.mxu0 %v107
    %3892 = vmatmul.mubr.bf16.gmra.mrb[0].mxu0 %v106
    %v3893 = vpop.f32.mrb[0].mxu0
    %v3894 = vadd.f32 %v3843, %v3893
    %v3895 = vpop.f32.mrb[0].mxu0
    %v3896 = vadd.f32 %v3845, %v3895
    %v3897 = vpop.f32.mrb[0].mxu0
    %v3898 = vpop.f32.mrb[0].mxu0
    %3899 = vdwg.mxu0
    %3900 = vmatprep.subr.bf16.mxu0 %v2417
    %3901 = vmatpush1.bf16.msra.mxu0 %v2416
    %3902 = vmatprep.subr.bf16.mxu0 %v2425
    %3903 = vmatpush1.bf16.msra.mxu0 %v2424
    %3904 = vmatprep.subr.bf16.mxu0 %v2433
    %3905 = vmatpush1.bf16.msra.mxu0 %v2432
    %3906 = vmatprep.subr.bf16.mxu0 %v2441
    %3907 = vmatpush1.bf16.msra.mxu0 %v2440
    %3908 = vmatprep.subr.bf16.mxu0 %v2449
    %3909 = vmatpush1.bf16.msra.mxu0 %v2448
    %3910 = vmatprep.subr.bf16.mxu0 %v2457
    %3911 = vmatpush1.bf16.msra.mxu0 %v2456
    %3912 = vmatprep.subr.bf16.mxu0 %v2465
    %3913 = vmatpush1.bf16.msra.mxu0 %v2464
    %3914 = vmatprep.subr.bf16.mxu0 %v2473
    %3915 = vmatpush1.bf16.msra.mxu0 %v2472
    %3916 = vmatprep.subr.bf16.mxu0 %v2481
    %3917 = vmatpush1.bf16.msra.mxu0 %v2480
    %3918 = vmatprep.subr.bf16.mxu0 %v2489
    %3919 = vmatpush1.bf16.msra.mxu0 %v2488
    %3920 = vmatprep.subr.bf16.mxu0 %v2497
    %3921 = vmatpush1.bf16.msra.mxu0 %v2496
    %3922 = vmatprep.subr.bf16.mxu0 %v2505
    %3923 = vmatpush1.bf16.msra.mxu0 %v2504
    %3924 = vmatprep.subr.bf16.mxu0 %v2513
    %3925 = vmatpush1.bf16.msra.mxu0 %v2512
    %3926 = vmatprep.subr.bf16.mxu0 %v2521
    %3927 = vmatpush1.bf16.msra.mxu0 %v2520
    %3928 = vmatprep.subr.bf16.mxu0 %v2529
    %3929 = vmatpush1.bf16.msra.mxu0 %v2528
    %3930 = vmatprep.subr.bf16.mxu0 %v2537
    %3931 = vmatpush1.bf16.msra.mxu0 %v2536
    %3932 = vmatprep.mubr.bf16.mxu0 %v101
    %3933 = vmatmul.mubr.bf16.gmra.mrb[0].mxu0 %v100
    %v3934 = vpop.f32.mrb[0].mxu0
    %v3935 = vadd.f32 %v3884, %v3934
    %v3936 = vpop.f32.mrb[0].mxu0
    %v3937 = vadd.f32 %v3886, %v3936
    %v3938 = vpop.f32.mrb[0].mxu0
    %v3939 = vadd.f32 %v3888, %v3938
    %v3940 = vpop.f32.mrb[0].mxu0
    %v3941 = vadd.f32 %v3890, %v3940
    %3942 = vmatprep.mubr.bf16.mxu0 %v109
    %3943 = vmatmul.mubr.bf16.gmra.mrb[0].mxu0 %v108
    %v3944 = vpop.f32.mrb[0].mxu0
    %v3945 = vadd.f32 %v3894, %v3944
    %v3946 = vpop.f32.mrb[0].mxu0
    %v3947 = vadd.f32 %v3896, %v3946
    %v3948 = vpop.f32.mrb[0].mxu0
    %v3949 = vpop.f32.mrb[0].mxu0
    %3950 = vdwg.mxu0
    %3951 = vmatprep.subr.bf16.mxu0 %v2545
    %3952 = vmatpush1.bf16.msra.mxu0 %v2544
    %3953 = vmatprep.subr.bf16.mxu0 %v2553
    %3954 = vmatpush1.bf16.msra.mxu0 %v2552
    %3955 = vmatprep.subr.bf16.mxu0 %v2561
    %3956 = vmatpush1.bf16.msra.mxu0 %v2560
    %3957 = vmatprep.subr.bf16.mxu0 %v2569
    %3958 = vmatpush1.bf16.msra.mxu0 %v2568
    %3959 = vmatprep.subr.bf16.mxu0 %v2577
    %3960 = vmatpush1.bf16.msra.mxu0 %v2576
    %3961 = vmatprep.subr.bf16.mxu0 %v2585
    %3962 = vmatpush1.bf16.msra.mxu0 %v2584
    %3963 = vmatprep.subr.bf16.mxu0 %v2593
    %3964 = vmatpush1.bf16.msra.mxu0 %v2592
    %3965 = vmatprep.subr.bf16.mxu0 %v2601
    %3966 = vmatpush1.bf16.msra.mxu0 %v2600
    %3967 = vmatprep.subr.bf16.mxu0 %v2609
    %3968 = vmatpush1.bf16.msra.mxu0 %v2608
    %3969 = vmatprep.subr.bf16.mxu0 %v2617
    %3970 = vmatpush1.bf16.msra.mxu0 %v2616
    %3971 = vmatprep.subr.bf16.mxu0 %v2625
    %3972 = vmatpush1.bf16.msra.mxu0 %v2624
    %3973 = vmatprep.subr.bf16.mxu0 %v2633
    %3974 = vmatpush1.bf16.msra.mxu0 %v2632
    %3975 = vmatprep.subr.bf16.mxu0 %v2641
    %3976 = vmatpush1.bf16.msra.mxu0 %v2640
    %3977 = vmatprep.subr.bf16.mxu0 %v2649
    %3978 = vmatpush1.bf16.msra.mxu0 %v2648
    %3979 = vmatprep.subr.bf16.mxu0 %v3184
    %3980 = vmatpush1.bf16.msra.mxu0 %v3181
    %3981 = vmatprep.subr.bf16.mxu0 0
    %3982 = vmatpush1.bf16.msra.mxu0 0
    %3983 = vmatprep.mubr.bf16.mxu0 %v3156
    %3984 = vmatmul.mubr.bf16.gmra.mrb[0].mxu0 %v102
    %v3985 = vpop.f32.mrb[0].mxu0
    %v3986 = vadd.f32 %v3935, %v3985
    %v3987 = vpop.f32.mrb[0].mxu0
    %v3988 = vadd.f32 %v3937, %v3987
    %v3989 = vpop.f32.mrb[0].mxu0
    %v3990 = vadd.f32 %v3939, %v3989
    %v3991 = vpop.f32.mrb[0].mxu0
    %v3992 = vadd.f32 %v3941, %v3991
    %3993 = vmatprep.mubr.bf16.mxu0 %v3159
    %3994 = vmatmul.mubr.bf16.gmra.mrb[0].mxu0 %v110
    %v3995 = vpop.f32.mrb[0].mxu0
    %v3996 = vadd.f32 %v3945, %v3995
    %v3997 = vpop.f32.mrb[0].mxu0
    %v3998 = vadd.f32 %v3947, %v3997
    %v3999 = vpop.f32.mrb[0].mxu0
    %v4000 = vpop.f32.mrb[0].mxu0
    %4001 = vdwg.mxu0
    %v4002 = vmax.f32 %v3374, 0.0
    %v4003 = vmax.f32 %v3376, 0.0
    %v4004 = vmax.f32 %v3578, 0.0
    %v4005 = vmax.f32 %v3580, 0.0
    %v4006 = vmax.f32 %v3782, 0.0
    %v4007 = vmax.f32 %v3784, 0.0
    %v4008 = vmax.f32 %v3986, 0.0
    %v4009 = vmax.f32 %v3988, 0.0
    %v4010 = vmax.f32 %v3378, 0.0
    %v4011 = vmax.f32 %v3380, 0.0
    %v4012 = vmax.f32 %v3582, 0.0
    %v4013 = vmax.f32 %v3584, 0.0
    %v4014 = vmax.f32 %v3786, 0.0
    %v4015 = vmax.f32 %v3788, 0.0
    %v4016 = vmax.f32 %v3990, 0.0
    %v4017 = vmax.f32 %v3992, 0.0
    %v4018 = vmax.f32 %v3384, 0.0
    %v4019 = vmax.f32 %v3386, 0.0
    %v4020 = vmax.f32 %v3588, 0.0
    %v4021 = vmax.f32 %v3590, 0.0
    %v4022 = vmax.f32 %v3792, 0.0
    %v4023 = vmax.f32 %v3794, 0.0
    %v4024 = vmax.f32 %v3996, 0.0
    %v4025 = vmax.f32 %v3998, 0.0
    %4026 = vrot.lane.b32.xlu0 %v4002, 127
    %v4027 = vpop.permute.xlu0 %4026
    %4028 = vrot.lane.b32.xlu0 %v4010, 127
    %v4029 = vpop.permute.xlu0 %4028
    %4030 = vrot.lane.b32.xlu0 %v4018, 127
    %v4031 = vpop.permute.xlu0 %4030
    %4032 = vrot.lane.b32.xlu0 %v4003, 127
    %v4033 = vpop.permute.xlu0 %4032
    %4034 = vrot.lane.b32.xlu0 %v4011, 127
    %v4035 = vpop.permute.xlu0 %4034
    %4036 = vrot.lane.b32.xlu0 %v4019, 127
    %v4037 = vpop.permute.xlu0 %4036
    %4038 = vrot.lane.b32.xlu0 %v4004, 127
    %v4039 = vpop.permute.xlu0 %4038
    %4040 = vrot.lane.b32.xlu0 %v4012, 127
    %v4041 = vpop.permute.xlu0 %4040
    %4042 = vrot.lane.b32.xlu0 %v4020, 127
    %v4043 = vpop.permute.xlu0 %4042
    %4044 = vrot.lane.b32.xlu0 %v4005, 127
    %v4045 = vpop.permute.xlu0 %4044
    %4046 = vrot.lane.b32.xlu0 %v4013, 127
    %v4047 = vpop.permute.xlu0 %4046
    %4048 = vrot.lane.b32.xlu0 %v4021, 127
    %v4049 = vpop.permute.xlu0 %4048
    %4050 = vrot.lane.b32.xlu0 %v4006, 127
    %v4051 = vpop.permute.xlu0 %4050
    %4052 = vrot.lane.b32.xlu0 %v4014, 127
    %v4053 = vpop.permute.xlu0 %4052
    %4054 = vrot.lane.b32.xlu0 %v4022, 127
    %v4055 = vpop.permute.xlu0 %4054
    %4056 = vrot.lane.b32.xlu0 %v4007, 127
    %v4057 = vpop.permute.xlu0 %4056
    %4058 = vrot.lane.b32.xlu0 %v4015, 127
    %v4059 = vpop.permute.xlu0 %4058
    %4060 = vrot.lane.b32.xlu0 %v4023, 127
    %v4061 = vpop.permute.xlu0 %4060
    %4062 = vrot.lane.b32.xlu0 %v4008, 127
    %v4063 = vpop.permute.xlu0 %4062
    %4064 = vrot.lane.b32.xlu0 %v4016, 127
    %v4065 = vpop.permute.xlu0 %4064
    %4066 = vrot.lane.b32.xlu0 %v4024, 127
    %v4067 = vpop.permute.xlu0 %4066
    %4068 = vrot.lane.b32.xlu0 %v4009, 127
    %v4069 = vpop.permute.xlu0 %4068
    %4070 = vrot.lane.b32.xlu0 %v4017, 127
    %v4071 = vpop.permute.xlu0 %4070
    %4072 = vrot.lane.b32.xlu0 %v4025, 127
    %v4073 = vpop.permute.xlu0 %4072
    %v4074 = vlaneseq
    %v4075 = vand.u32 %v4074, 127
    %vm4076 = vcmp.lt.s32.totalorder %v4075, 127
    %v4077 = vsel %vm4076, %v4063, %v4069
    %v4078 = vsel %vm4076, %v4065, %v4071
    %v4079 = vsel %vm4076, %v4067, %v4073
    %v4080 = vsel %vm4076, %v4057, %v4063
    %v4081 = vsel %vm4076, %v4059, %v4065
    %v4082 = vsel %vm4076, %v4061, %v4067
    %v4083 = vsel %vm4076, %v4051, %v4057
    %v4084 = vsel %vm4076, %v4053, %v4059
    %v4085 = vsel %vm4076, %v4055, %v4061
    %v4086 = vsel %vm4076, %v4045, %v4051
    %v4087 = vsel %vm4076, %v4047, %v4053
    %v4088 = vsel %vm4076, %v4049, %v4055
    %v4089 = vsel %vm4076, %v4039, %v4045
    %v4090 = vsel %vm4076, %v4041, %v4047
    %v4091 = vsel %vm4076, %v4043, %v4049
    %v4092 = vsel %vm4076, %v4033, %v4039
    %v4093 = vsel %vm4076, %v4035, %v4041
    %v4094 = vsel %vm4076, %v4037, %v4043
    %v4095 = vsel %vm4076, %v4027, %v4033
    %v4096 = vsel %vm4076, %v4029, %v4035
    %v4097 = vsel %vm4076, %v4031, %v4037
    %v4098 = vsel %vm4076, %v4069, %v4027
    %v4099 = vsel %vm4076, %v4071, %v4029
    %v4100 = vsel %vm4076, %v4073, %v4031
    %v4101 = vmax.f32 %v4002, %v4095
    %v4102 = vmax.f32 %v4003, %v4092
    %v4103 = vmax.f32 %v4004, %v4089
    %v4104 = vmax.f32 %v4005, %v4086
    %v4105 = vmax.f32 %v4006, %v4083
    %v4106 = vmax.f32 %v4007, %v4080
    %v4107 = vmax.f32 %v4008, %v4077
    %v4108 = vmax.f32 %v4009, %v4098
    %v4109 = vmax.f32 %v4010, %v4096
    %v4110 = vmax.f32 %v4011, %v4093
    %v4111 = vmax.f32 %v4012, %v4090
    %v4112 = vmax.f32 %v4013, %v4087
    %v4113 = vmax.f32 %v4014, %v4084
    %v4114 = vmax.f32 %v4015, %v4081
    %v4115 = vmax.f32 %v4016, %v4078
    %v4116 = vmax.f32 %v4017, %v4099
    %v4117 = vmax.f32 %v4018, %v4097
    %v4118 = vmax.f32 %v4019, %v4094
    %v4119 = vmax.f32 %v4020, %v4091
    %v4120 = vmax.f32 %v4021, %v4088
    %v4121 = vmax.f32 %v4022, %v4085
    %v4122 = vmax.f32 %v4023, %v4082
    %v4123 = vmax.f32 %v4024, %v4079
    %v4124 = vmax.f32 %v4025, %v4100
    %v4125 = vpack.c.bf16 %v4109, %v4101
    %v4126 = vpack.c.bf16 %v4110, %v4102
    %v4127 = vpack.c.bf16 %v4111, %v4103
    %v4128 = vpack.c.bf16 %v4112, %v4104
    %v4129 = vpack.c.bf16 %v4113, %v4105
    %v4130 = vpack.c.bf16 %v4114, %v4106
    %v4131 = vpack.c.bf16 %v4115, %v4107
    %v4132 = vpack.c.bf16 %v4116, %v4108
    %v4133 = vpack.c.bf16 %v4117, %v4117
    %v4134 = vpack.c.bf16 %v4118, %v4118
    %v4135 = vpack.c.bf16 %v4119, %v4119
    %v4136 = vpack.c.bf16 %v4120, %v4120
    %v4137 = vpack.c.bf16 %v4121, %v4121
    %v4138 = vpack.c.bf16 %v4122, %v4122
    %v4139 = vpack.c.bf16 %v4123, %v4123
    %v4140 = vpack.c.bf16 %v4124, %v4124
    %v4141 = vld [vmem:[%s3] sm:$0xf]
    %v4142 = vld [vmem:[%s3 + $0x4] sm:$0xf]
    %v4143 = vld [vmem:[%s3 + $0x8] sm:$0xf]
    %v4144 = vld [vmem:[%s3 + $0xc] sm:$0xf]
    %v4145 = vld [vmem:[%s3 + $0x10] sm:$0xf]
    %v4146 = vld [vmem:[%s3 + $0x14] sm:$0xf]
    %v4147 = vld [vmem:[%s3 + $0x18] sm:$0xf]
    %v4148 = vld [vmem:[%s3 + $0x1c] sm:$0xf]
    %v4149 = vld [vmem:[%s3 + $0x20] sm:$0xf]
    %v4150 = vld [vmem:[%s3 + $0x24] sm:$0xf]
    %v4151 = vld [vmem:[%s3 + $0x28] sm:$0xf]
    %v4152 = vld [vmem:[%s3 + $0x2c] sm:$0xf]
    %v4153 = vld [vmem:[%s3 + $0x30] sm:$0xf]
    %v4154 = vld [vmem:[%s3 + $0x34] sm:$0xf]
    %v4155 = vld [vmem:[%s3 + $0x38] sm:$0xf]
    %v4156 = vld [vmem:[%s3 + $0x3c] sm:$0xf]
    %v4157 = vld [vmem:[%s3 + $0x40] sm:$0xf]
    %v4158 = vld [vmem:[%s3 + $0x44] sm:$0xf]
    %v4159 = vld [vmem:[%s3 + $0x48] sm:$0xf]
    %v4160 = vld [vmem:[%s3 + $0x4c] sm:$0xf]
    %v4161 = vld [vmem:[%s3 + $0x50] sm:$0xf]
    %v4162 = vld [vmem:[%s3 + $0x54] sm:$0xf]
    %v4163 = vld [vmem:[%s3 + $0x58] sm:$0xf]
    %v4164 = vld [vmem:[%s3 + $0x5c] sm:$0xf]
    %v4165 = vld [vmem:[%s3 + $0x60] sm:$0xf]
    %v4166 = vld [vmem:[%s3 + $0x64] sm:$0xf]
    %v4167 = vld [vmem:[%s3 + $0x68] sm:$0xf]
    %v4168 = vld [vmem:[%s3 + $0x6c] sm:$0xf]
    %v4169 = vld [vmem:[%s3 + $0x70] sm:$0xf]
    %v4170 = vld [vmem:[%s3 + $0x74] sm:$0xf]
    %v4171 = vld [vmem:[%s3 + $0x78] sm:$0xf]
    %v4172 = vld [vmem:[%s3 + $0x7c] sm:$0xf]
    %v4173 = vld [vmem:[%s3 + $0x80] sm:$0xf]
    %v4174 = vld [vmem:[%s3 + $0x84] sm:$0xf]
    %v4175 = vld [vmem:[%s3 + $0x88] sm:$0xf]
    %v4176 = vld [vmem:[%s3 + $0x8c] sm:$0xf]
    %v4177 = vld [vmem:[%s3 + $0x90] sm:$0xf]
    %v4178 = vld [vmem:[%s3 + $0x94] sm:$0xf]
    %v4179 = vld [vmem:[%s3 + $0x98] sm:$0xf]
    %v4180 = vld [vmem:[%s3 + $0x9c] sm:$0xf]
    %v4181 = vld [vmem:[%s3 + $0xa0] sm:$0xf]
    %v4182 = vld [vmem:[%s3 + $0xa4] sm:$0xf]
    %v4183 = vld [vmem:[%s3 + $0xa8] sm:$0xf]
    %v4184 = vld [vmem:[%s3 + $0xac] sm:$0xf]
    %v4185 = vld [vmem:[%s3 + $0xb0] sm:$0xf]
    %v4186 = vld [vmem:[%s3 + $0xb4] sm:$0xf]
    %v4187 = vld [vmem:[%s3 + $0xb8] sm:$0xf]
    %v4188 = vld [vmem:[%s3 + $0xbc] sm:$0xf]
    %v4189 = vld [vmem:[%s3 + $0xc0] sm:$0xf]
    %v4190 = vld [vmem:[%s3 + $0xc4] sm:$0xf]
    %v4191 = vld [vmem:[%s3 + $0xc8] sm:$0xf]
    %v4192 = vld [vmem:[%s3 + $0xcc] sm:$0xf]
    %v4193 = vld [vmem:[%s3 + $0xd0] sm:$0xf]
    %v4194 = vld [vmem:[%s3 + $0xd4] sm:$0xf]
    %v4195 = vld [vmem:[%s3 + $0xd8] sm:$0xf]
    %v4196 = vld [vmem:[%s3 + $0xdc] sm:$0xf]
    %v4197 = vld [vmem:[%s3 + $0xe0] sm:$0xf]
    %v4198 = vld [vmem:[%s3 + $0xe4] sm:$0xf]
    %v4199 = vld [vmem:[%s3 + $0xe8] sm:$0xf]
    %v4200 = vld [vmem:[%s3 + $0xec] sm:$0xf]
    %v4201 = vld [vmem:[%s3 + $0xf0] sm:$0xf]
    %v4202 = vld [vmem:[%s3 + $0xf4] sm:$0xf]
    %v4203 = vld [vmem:[%s3 + $0xf8] sm:$0xf]
    %v4204 = vld [vmem:[%s3 + $0xfc] sm:$0xf]
    %v4205 = vld [vmem:[%s3 + $0x100] sm:$0xf]
    %v4206 = vld [vmem:[%s3 + $0x104] sm:$0xf]
    %v4207 = vld [vmem:[%s3 + $0x108] sm:$0xf]
    %v4208 = vld [vmem:[%s3 + $0x10c] sm:$0xf]
    %v4209 = vld [vmem:[%s3 + $0x110] sm:$0xf]
    %v4210 = vld [vmem:[%s3 + $0x114] sm:$0xf]
    %v4211 = vld [vmem:[%s3 + $0x118] sm:$0xf]
    %v4212 = vld [vmem:[%s3 + $0x11c] sm:$0xf]
    %v4213 = vld [vmem:[%s3 + $0x120] sm:$0xf]
    %v4214 = vld [vmem:[%s3 + $0x124] sm:$0xf]
    %v4215 = vld [vmem:[%s3 + $0x128] sm:$0xf]
    %v4216 = vld [vmem:[%s3 + $0x12c] sm:$0xf]
    %v4217 = vld [vmem:[%s3 + $0x130] sm:$0xf]
    %v4218 = vld [vmem:[%s3 + $0x134] sm:$0xf]
    %v4219 = vld [vmem:[%s3 + $0x138] sm:$0xf]
    %v4220 = vld [vmem:[%s3 + $0x13c] sm:$0xf]
    %v4221 = vld [vmem:[%s3 + $0x140] sm:$0xf]
    %v4222 = vld [vmem:[%s3 + $0x144] sm:$0xf]
    %v4223 = vld [vmem:[%s3 + $0x148] sm:$0xf]
    %v4224 = vld [vmem:[%s3 + $0x14c] sm:$0xf]
    %v4225 = vld [vmem:[%s3 + $0x150] sm:$0xf]
    %v4226 = vld [vmem:[%s3 + $0x154] sm:$0xf]
    %v4227 = vld [vmem:[%s3 + $0x158] sm:$0xf]
    %v4228 = vld [vmem:[%s3 + $0x15c] sm:$0xf]
    %v4229 = vld [vmem:[%s3 + $0x160] sm:$0xf]
    %v4230 = vld [vmem:[%s3 + $0x164] sm:$0xf]
    %v4231 = vld [vmem:[%s3 + $0x168] sm:$0xf]
    %v4232 = vld [vmem:[%s3 + $0x16c] sm:$0xf]
    %v4233 = vld [vmem:[%s3 + $0x170] sm:$0xf]
    %v4234 = vld [vmem:[%s3 + $0x174] sm:$0xf]
    %v4235 = vld [vmem:[%s3 + $0x178] sm:$0xf]
    %v4236 = vld [vmem:[%s3 + $0x17c] sm:$0xf]
    %v4237 = vld [vmem:[%s3 + $0x180] sm:$0xf]
    %v4238 = vld [vmem:[%s3 + $0x184] sm:$0xf]
    %v4239 = vld [vmem:[%s3 + $0x188] sm:$0xf]
    %v4240 = vld [vmem:[%s3 + $0x18c] sm:$0xf]
    %v4241 = vld [vmem:[%s3 + $0x190] sm:$0xf]
    %v4242 = vld [vmem:[%s3 + $0x194] sm:$0xf]
    %v4243 = vld [vmem:[%s3 + $0x198] sm:$0xf]
    %v4244 = vld [vmem:[%s3 + $0x19c] sm:$0xf]
    %v4245 = vld [vmem:[%s3 + $0x1a0] sm:$0xf]
    %v4246 = vld [vmem:[%s3 + $0x1a4] sm:$0xf]
    %v4247 = vld [vmem:[%s3 + $0x1a8] sm:$0xf]
    %v4248 = vld [vmem:[%s3 + $0x1ac] sm:$0xf]
    %v4249 = vld [vmem:[%s3 + $0x1b0] sm:$0xf]
    %v4250 = vld [vmem:[%s3 + $0x1b4] sm:$0xf]
    %v4251 = vld [vmem:[%s3 + $0x1b8] sm:$0xf]
    %v4252 = vld [vmem:[%s3 + $0x1bc] sm:$0xf]
    %v4253 = vld [vmem:[%s3 + $0x1c0] sm:$0xf]
    %v4254 = vld [vmem:[%s3 + $0x1c4] sm:$0xf]
    %v4255 = vld [vmem:[%s3 + $0x1c8] sm:$0xf]
    %v4256 = vld [vmem:[%s3 + $0x1cc] sm:$0xf]
    %v4257 = vld [vmem:[%s3 + $0x1d0] sm:$0xf]
    %v4258 = vld [vmem:[%s3 + $0x1d4] sm:$0xf]
    %v4259 = vld [vmem:[%s3 + $0x1d8] sm:$0xf]
    %v4260 = vld [vmem:[%s3 + $0x1dc] sm:$0xf]
    %v4261 = vld [vmem:[%s3 + $0x1e0] sm:$0xf]
    %v4262 = vld [vmem:[%s3 + $0x1e4] sm:$0xf]
    %v4263 = vld [vmem:[%s3 + $0x1e8] sm:$0xf]
    %v4264 = vld [vmem:[%s3 + $0x1ec] sm:$0xf]
    %v4265 = vld [vmem:[%s3 + $0x1f0] sm:$0xf]
    %v4266 = vld [vmem:[%s3 + $0x1f4] sm:$0xf]
    %v4267 = vld [vmem:[%s3 + $0x1f8] sm:$0xf]
    %v4268 = vld [vmem:[%s3 + $0x1fc] sm:$0xf]
    %v4269 = vld [vmem:[#allocation7] sm:$0x1]
    %v4271 = vlaneseq
    %v4272 = vshrl.u32 %v4271, 7
    %v4273 = vsub.s32 0, %v4272
    %v4274 = vrot.slane %v4269, %v4273
    %v4404 = vunpack.c.l.b16 %v4141
    %v4405 = vunpack.c.l.b16 %v4142
    %v4406 = vunpack.c.l.b16 %v4143
    %v4407 = vunpack.c.l.b16 %v4144
    %v4408 = vunpack.c.l.b16 %v4145
    %v4409 = vunpack.c.l.b16 %v4146
    %v4410 = vunpack.c.l.b16 %v4147
    %v4411 = vunpack.c.l.b16 %v4148
    %v4412 = vunpack.c.l.b16 %v4149
    %v4413 = vunpack.c.l.b16 %v4150
    %v4414 = vunpack.c.l.b16 %v4151
    %v4415 = vunpack.c.l.b16 %v4152
    %v4416 = vunpack.c.l.b16 %v4153
    %v4417 = vunpack.c.l.b16 %v4154
    %v4418 = vunpack.c.l.b16 %v4155
    %v4419 = vunpack.c.l.b16 %v4156
    %v4420 = vunpack.c.l.b16 %v4157
    %v4421 = vunpack.c.l.b16 %v4158
    %v4422 = vunpack.c.l.b16 %v4159
    %v4423 = vunpack.c.l.b16 %v4160
    %v4424 = vunpack.c.l.b16 %v4161
    %v4425 = vunpack.c.l.b16 %v4162
    %v4426 = vunpack.c.l.b16 %v4163
    %v4427 = vunpack.c.l.b16 %v4164
    %v4428 = vunpack.c.l.b16 %v4165
    %v4429 = vunpack.c.l.b16 %v4166
    %v4430 = vunpack.c.l.b16 %v4167
    %v4431 = vunpack.c.l.b16 %v4168
    %v4432 = vunpack.c.l.b16 %v4169
    %v4433 = vunpack.c.l.b16 %v4170
    %v4434 = vunpack.c.l.b16 %v4171
    %v4435 = vunpack.c.l.b16 %v4172
    %v4436 = vunpack.c.l.b16 %v4173
    %v4437 = vunpack.c.l.b16 %v4174
    %v4438 = vunpack.c.l.b16 %v4175
    %v4439 = vunpack.c.l.b16 %v4176
    %v4440 = vunpack.c.l.b16 %v4177
    %v4441 = vunpack.c.l.b16 %v4178
    %v4442 = vunpack.c.l.b16 %v4179
    %v4443 = vunpack.c.l.b16 %v4180
    %v4444 = vunpack.c.l.b16 %v4181
    %v4445 = vunpack.c.l.b16 %v4182
    %v4446 = vunpack.c.l.b16 %v4183
    %v4447 = vunpack.c.l.b16 %v4184
    %v4448 = vunpack.c.l.b16 %v4185
    %v4449 = vunpack.c.l.b16 %v4186
    %v4450 = vunpack.c.l.b16 %v4187
    %v4451 = vunpack.c.l.b16 %v4188
    %v4452 = vunpack.c.l.b16 %v4189
    %v4453 = vunpack.c.l.b16 %v4190
    %v4454 = vunpack.c.l.b16 %v4191
    %v4455 = vunpack.c.l.b16 %v4192
    %v4456 = vunpack.c.l.b16 %v4193
    %v4457 = vunpack.c.l.b16 %v4194
    %v4458 = vunpack.c.l.b16 %v4195
    %v4459 = vunpack.c.l.b16 %v4196
    %v4460 = vunpack.c.l.b16 %v4197
    %v4461 = vunpack.c.l.b16 %v4198
    %v4462 = vunpack.c.l.b16 %v4199
    %v4463 = vunpack.c.l.b16 %v4200
    %v4464 = vunpack.c.l.b16 %v4201
    %v4465 = vunpack.c.l.b16 %v4202
    %v4466 = vunpack.c.l.b16 %v4203
    %v4467 = vunpack.c.l.b16 %v4204
    %v4468 = vunpack.c.l.b16 %v4205
    %v4469 = vunpack.c.l.b16 %v4206
    %v4470 = vunpack.c.l.b16 %v4207
    %v4471 = vunpack.c.l.b16 %v4208
    %v4472 = vunpack.c.l.b16 %v4209
    %v4473 = vunpack.c.l.b16 %v4210
    %v4474 = vunpack.c.l.b16 %v4211
    %v4475 = vunpack.c.l.b16 %v4212
    %v4476 = vunpack.c.l.b16 %v4213
    %v4477 = vunpack.c.l.b16 %v4214
    %v4478 = vunpack.c.l.b16 %v4215
    %v4479 = vunpack.c.l.b16 %v4216
    %v4480 = vunpack.c.l.b16 %v4217
    %v4481 = vunpack.c.l.b16 %v4218
    %v4482 = vunpack.c.l.b16 %v4219
    %v4483 = vunpack.c.l.b16 %v4220
    %v4484 = vunpack.c.l.b16 %v4221
    %v4485 = vunpack.c.l.b16 %v4222
    %v4486 = vunpack.c.l.b16 %v4223
    %v4487 = vunpack.c.l.b16 %v4224
    %v4488 = vunpack.c.l.b16 %v4225
    %v4489 = vunpack.c.l.b16 %v4226
    %v4490 = vunpack.c.l.b16 %v4227
    %v4491 = vunpack.c.l.b16 %v4228
    %v4492 = vunpack.c.l.b16 %v4229
    %v4493 = vunpack.c.l.b16 %v4230
    %v4494 = vunpack.c.l.b16 %v4231
    %v4495 = vunpack.c.l.b16 %v4232
    %v4496 = vunpack.c.l.b16 %v4233
    %v4497 = vunpack.c.l.b16 %v4234
    %v4498 = vunpack.c.l.b16 %v4235
    %v4499 = vunpack.c.l.b16 %v4236
    %v4500 = vunpack.c.l.b16 %v4237
    %v4501 = vunpack.c.l.b16 %v4238
    %v4502 = vunpack.c.l.b16 %v4239
    %v4503 = vunpack.c.l.b16 %v4240
    %v4504 = vunpack.c.l.b16 %v4241
    %v4505 = vunpack.c.l.b16 %v4242
    %v4506 = vunpack.c.l.b16 %v4243
    %v4507 = vunpack.c.l.b16 %v4244
    %v4508 = vunpack.c.l.b16 %v4245
    %v4509 = vunpack.c.l.b16 %v4246
    %v4510 = vunpack.c.l.b16 %v4247
    %v4511 = vunpack.c.l.b16 %v4248
    %v4512 = vunpack.c.l.b16 %v4249
    %v4513 = vunpack.c.l.b16 %v4250
    %v4514 = vunpack.c.l.b16 %v4251
    %v4515 = vunpack.c.l.b16 %v4252
    %v4516 = vunpack.c.l.b16 %v4253
    %v4517 = vunpack.c.l.b16 %v4254
    %v4518 = vunpack.c.l.b16 %v4255
    %v4519 = vunpack.c.l.b16 %v4256
    %v4520 = vunpack.c.l.b16 %v4257
    %v4521 = vunpack.c.l.b16 %v4258
    %v4522 = vunpack.c.l.b16 %v4259
    %v4523 = vunpack.c.l.b16 %v4260
    %v4524 = vunpack.c.l.b16 %v4261
    %v4525 = vunpack.c.l.b16 %v4262
    %v4526 = vunpack.c.l.b16 %v4263
    %v4527 = vunpack.c.l.b16 %v4264
    %v4528 = vunpack.c.l.b16 %v4265
    %v4529 = vunpack.c.l.b16 %v4266
    %v4530 = vunpack.c.l.b16 %v4267
    %v4531 = vunpack.c.l.b16 %v4268
    %v4532 = vpack.c.b16 %v4405, %v4404
    %v4533 = vpack.c.b16 %v4407, %v4406
    %v4534 = vpack.c.b16 %v4409, %v4408
    %v4535 = vpack.c.b16 %v4411, %v4410
    %v4536 = vpack.c.b16 %v4413, %v4412
    %v4537 = vpack.c.b16 %v4415, %v4414
    %v4538 = vpack.c.b16 %v4417, %v4416
    %v4539 = vpack.c.b16 %v4419, %v4418
    %v4540 = vpack.c.b16 %v4421, %v4420
    %v4541 = vpack.c.b16 %v4423, %v4422
    %v4542 = vpack.c.b16 %v4425, %v4424
    %v4543 = vpack.c.b16 %v4427, %v4426
    %v4544 = vpack.c.b16 %v4429, %v4428
    %v4545 = vpack.c.b16 %v4431, %v4430
    %v4546 = vpack.c.b16 %v4433, %v4432
    %v4547 = vpack.c.b16 %v4435, %v4434
    %v4548 = vpack.c.b16 %v4437, %v4436
    %v4549 = vpack.c.b16 %v4439, %v4438
    %v4550 = vpack.c.b16 %v4441, %v4440
    %v4551 = vpack.c.b16 %v4443, %v4442
    %v4552 = vpack.c.b16 %v4445, %v4444
    %v4553 = vpack.c.b16 %v4447, %v4446
    %v4554 = vpack.c.b16 %v4449, %v4448
    %v4555 = vpack.c.b16 %v4451, %v4450
    %v4556 = vpack.c.b16 %v4453, %v4452
    %v4557 = vpack.c.b16 %v4455, %v4454
    %v4558 = vpack.c.b16 %v4457, %v4456
    %v4559 = vpack.c.b16 %v4459, %v4458
    %v4560 = vpack.c.b16 %v4461, %v4460
    %v4561 = vpack.c.b16 %v4463, %v4462
    %v4562 = vpack.c.b16 %v4465, %v4464
    %v4563 = vpack.c.b16 %v4467, %v4466
    %v4564 = vpack.c.b16 %v4469, %v4468
    %v4565 = vpack.c.b16 %v4471, %v4470
    %v4566 = vpack.c.b16 %v4473, %v4472
    %v4567 = vpack.c.b16 %v4475, %v4474
    %v4568 = vpack.c.b16 %v4477, %v4476
    %v4569 = vpack.c.b16 %v4479, %v4478
    %v4570 = vpack.c.b16 %v4481, %v4480
    %v4571 = vpack.c.b16 %v4483, %v4482
    %v4572 = vpack.c.b16 %v4485, %v4484
    %v4573 = vpack.c.b16 %v4487, %v4486
    %v4574 = vpack.c.b16 %v4489, %v4488
    %v4575 = vpack.c.b16 %v4491, %v4490
    %v4576 = vpack.c.b16 %v4493, %v4492
    %v4577 = vpack.c.b16 %v4495, %v4494
    %v4578 = vpack.c.b16 %v4497, %v4496
    %v4579 = vpack.c.b16 %v4499, %v4498
    %v4580 = vpack.c.b16 %v4501, %v4500
    %v4581 = vpack.c.b16 %v4503, %v4502
    %v4582 = vpack.c.b16 %v4505, %v4504
    %v4583 = vpack.c.b16 %v4507, %v4506
    %v4584 = vpack.c.b16 %v4509, %v4508
    %v4585 = vpack.c.b16 %v4511, %v4510
    %v4586 = vpack.c.b16 %v4513, %v4512
    %v4587 = vpack.c.b16 %v4515, %v4514
    %v4588 = vpack.c.b16 %v4517, %v4516
    %v4589 = vpack.c.b16 %v4519, %v4518
    %v4590 = vpack.c.b16 %v4521, %v4520
    %v4591 = vpack.c.b16 %v4523, %v4522
    %v4592 = vpack.c.b16 %v4525, %v4524
    %v4593 = vpack.c.b16 %v4527, %v4526
    %v4594 = vpack.c.b16 %v4529, %v4528
    %v4595 = vpack.c.b16 %v4531, %v4530
    %4660 = vmatprep.subr.bf16.mxu0 0
    %4661 = vmatpush1.bf16.msra.mxu0 %v4532
    %4662 = vmatprep.subr.bf16.mxu0 0
    %4663 = vmatpush1.bf16.msra.mxu0 %v4533
    %4664 = vmatprep.subr.bf16.mxu0 0
    %4665 = vmatpush1.bf16.msra.mxu0 %v4534
    %4666 = vmatprep.subr.bf16.mxu0 0
    %4667 = vmatpush1.bf16.msra.mxu0 %v4535
    %4668 = vmatprep.subr.bf16.mxu0 0
    %4669 = vmatpush1.bf16.msra.mxu0 %v4536
    %4670 = vmatprep.subr.bf16.mxu0 0
    %4671 = vmatpush1.bf16.msra.mxu0 %v4537
    %4672 = vmatprep.subr.bf16.mxu0 0
    %4673 = vmatpush1.bf16.msra.mxu0 %v4538
    %4674 = vmatprep.subr.bf16.mxu0 0
    %4675 = vmatpush1.bf16.msra.mxu0 %v4539
    %4676 = vmatprep.subr.bf16.mxu0 0
    %4677 = vmatpush1.bf16.msra.mxu0 %v4540
    %4678 = vmatprep.subr.bf16.mxu0 0
    %4679 = vmatpush1.bf16.msra.mxu0 %v4541
    %4680 = vmatprep.subr.bf16.mxu0 0
    %4681 = vmatpush1.bf16.msra.mxu0 %v4542
    %4682 = vmatprep.subr.bf16.mxu0 0
    %4683 = vmatpush1.bf16.msra.mxu0 %v4543
    %4684 = vmatprep.subr.bf16.mxu0 0
    %4685 = vmatpush1.bf16.msra.mxu0 %v4544
    %4686 = vmatprep.subr.bf16.mxu0 0
    %4687 = vmatpush1.bf16.msra.mxu0 %v4545
    %4688 = vmatprep.subr.bf16.mxu0 0
    %4689 = vmatpush1.bf16.msra.mxu0 %v4546
    %4690 = vmatprep.subr.bf16.mxu0 0
    %4691 = vmatpush1.bf16.msra.mxu0 %v4547
    %4692 = vmatprep.mubr.bf16.mxu0 %v4126
    %4693 = vmatmul.mubr.bf16.gmra.mrb[0].mxu0 %v4125
    %v4694 = vpop.f32.mrb[0].mxu0
    %v4695 = vadd.f32 %v4274, %v4694
    %v4696 = vpop.f32.mrb[0].mxu0
    %v4697 = vpop.f32.mrb[0].mxu0
    %v4698 = vadd.f32 %v4274, %v4697
    %v4699 = vpop.f32.mrb[0].mxu0
    %4700 = vmatprep.mubr.bf16.mxu0 %v4134
    %4701 = vmatmul.mubr.bf16.gmra.mrb[0].mxu0 %v4133
    %v4702 = vpop.f32.mrb[0].mxu0
    %v4703 = vadd.f32 %v4274, %v4702
    %v4704 = vpop.f32.mrb[0].mxu0
    %v4705 = vpop.f32.mrb[0].mxu0
    %v4706 = vpop.f32.mrb[0].mxu0
    %4707 = vdwg.mxu0
    %4708 = vmatprep.subr.bf16.mxu0 0
    %4709 = vmatpush1.bf16.msra.mxu0 %v4548
    %4710 = vmatprep.subr.bf16.mxu0 0
    %4711 = vmatpush1.bf16.msra.mxu0 %v4549
    %4712 = vmatprep.subr.bf16.mxu0 0
    %4713 = vmatpush1.bf16.msra.mxu0 %v4550
    %4714 = vmatprep.subr.bf16.mxu0 0
    %4715 = vmatpush1.bf16.msra.mxu0 %v4551
    %4716 = vmatprep.subr.bf16.mxu0 0
    %4717 = vmatpush1.bf16.msra.mxu0 %v4552
    %4718 = vmatprep.subr.bf16.mxu0 0
    %4719 = vmatpush1.bf16.msra.mxu0 %v4553
    %4720 = vmatprep.subr.bf16.mxu0 0
    %4721 = vmatpush1.bf16.msra.mxu0 %v4554
    %4722 = vmatprep.subr.bf16.mxu0 0
    %4723 = vmatpush1.bf16.msra.mxu0 %v4555
    %4724 = vmatprep.subr.bf16.mxu0 0
    %4725 = vmatpush1.bf16.msra.mxu0 %v4556
    %4726 = vmatprep.subr.bf16.mxu0 0
    %4727 = vmatpush1.bf16.msra.mxu0 %v4557
    %4728 = vmatprep.subr.bf16.mxu0 0
    %4729 = vmatpush1.bf16.msra.mxu0 %v4558
    %4730 = vmatprep.subr.bf16.mxu0 0
    %4731 = vmatpush1.bf16.msra.mxu0 %v4559
    %4732 = vmatprep.subr.bf16.mxu0 0
    %4733 = vmatpush1.bf16.msra.mxu0 %v4560
    %4734 = vmatprep.subr.bf16.mxu0 0
    %4735 = vmatpush1.bf16.msra.mxu0 %v4561
    %4736 = vmatprep.subr.bf16.mxu0 0
    %4737 = vmatpush1.bf16.msra.mxu0 %v4562
    %4738 = vmatprep.subr.bf16.mxu0 0
    %4739 = vmatpush1.bf16.msra.mxu0 %v4563
    %4740 = vmatprep.mubr.bf16.mxu0 %v4128
    %4741 = vmatmul.mubr.bf16.gmra.mrb[0].mxu0 %v4127
    %v4742 = vpop.f32.mrb[0].mxu0
    %v4743 = vadd.f32 %v4695, %v4742
    %v4744 = vpop.f32.mrb[0].mxu0
    %v4745 = vpop.f32.mrb[0].mxu0
    %v4746 = vadd.f32 %v4698, %v4745
    %v4747 = vpop.f32.mrb[0].mxu0
    %4748 = vmatprep.mubr.bf16.mxu0 %v4136
    %4749 = vmatmul.mubr.bf16.gmra.mrb[0].mxu0 %v4135
    %v4750 = vpop.f32.mrb[0].mxu0
    %v4751 = vadd.f32 %v4703, %v4750
    %v4752 = vpop.f32.mrb[0].mxu0
    %v4753 = vpop.f32.mrb[0].mxu0
    %v4754 = vpop.f32.mrb[0].mxu0
    %4755 = vdwg.mxu0
    %4756 = vmatprep.subr.bf16.mxu0 0
    %4757 = vmatpush1.bf16.msra.mxu0 %v4564
    %4758 = vmatprep.subr.bf16.mxu0 0
    %4759 = vmatpush1.bf16.msra.mxu0 %v4565
    %4760 = vmatprep.subr.bf16.mxu0 0
    %4761 = vmatpush1.bf16.msra.mxu0 %v4566
    %4762 = vmatprep.subr.bf16.mxu0 0
    %4763 = vmatpush1.bf16.msra.mxu0 %v4567
    %4764 = vmatprep.subr.bf16.mxu0 0
    %4765 = vmatpush1.bf16.msra.mxu0 %v4568
    %4766 = vmatprep.subr.bf16.mxu0 0
    %4767 = vmatpush1.bf16.msra.mxu0 %v4569
    %4768 = vmatprep.subr.bf16.mxu0 0
    %4769 = vmatpush1.bf16.msra.mxu0 %v4570
    %4770 = vmatprep.subr.bf16.mxu0 0
    %4771 = vmatpush1.bf16.msra.mxu0 %v4571
    %4772 = vmatprep.subr.bf16.mxu0 0
    %4773 = vmatpush1.bf16.msra.mxu0 %v4572
    %4774 = vmatprep.subr.bf16.mxu0 0
    %4775 = vmatpush1.bf16.msra.mxu0 %v4573
    %4776 = vmatprep.subr.bf16.mxu0 0
    %4777 = vmatpush1.bf16.msra.mxu0 %v4574
    %4778 = vmatprep.subr.bf16.mxu0 0
    %4779 = vmatpush1.bf16.msra.mxu0 %v4575
    %4780 = vmatprep.subr.bf16.mxu0 0
    %4781 = vmatpush1.bf16.msra.mxu0 %v4576
    %4782 = vmatprep.subr.bf16.mxu0 0
    %4783 = vmatpush1.bf16.msra.mxu0 %v4577
    %4784 = vmatprep.subr.bf16.mxu0 0
    %4785 = vmatpush1.bf16.msra.mxu0 %v4578
    %4786 = vmatprep.subr.bf16.mxu0 0
    %4787 = vmatpush1.bf16.msra.mxu0 %v4579
    %4788 = vmatprep.mubr.bf16.mxu0 %v4130
    %4789 = vmatmul.mubr.bf16.gmra.mrb[0].mxu0 %v4129
    %v4790 = vpop.f32.mrb[0].mxu0
    %v4791 = vadd.f32 %v4743, %v4790
    %v4792 = vpop.f32.mrb[0].mxu0
    %v4793 = vpop.f32.mrb[0].mxu0
    %v4794 = vadd.f32 %v4746, %v4793
    %v4795 = vpop.f32.mrb[0].mxu0
    %4796 = vmatprep.mubr.bf16.mxu0 %v4138
    %4797 = vmatmul.mubr.bf16.gmra.mrb[0].mxu0 %v4137
    %v4798 = vpop.f32.mrb[0].mxu0
    %v4799 = vadd.f32 %v4751, %v4798
    %v4800 = vpop.f32.mrb[0].mxu0
    %v4801 = vpop.f32.mrb[0].mxu0
    %v4802 = vpop.f32.mrb[0].mxu0
    %4803 = vdwg.mxu0
    %4804 = vmatprep.subr.bf16.mxu0 0
    %4805 = vmatpush1.bf16.msra.mxu0 %v4580
    %4806 = vmatprep.subr.bf16.mxu0 0
    %4807 = vmatpush1.bf16.msra.mxu0 %v4581
    %4808 = vmatprep.subr.bf16.mxu0 0
    %4809 = vmatpush1.bf16.msra.mxu0 %v4582
    %4810 = vmatprep.subr.bf16.mxu0 0
    %4811 = vmatpush1.bf16.msra.mxu0 %v4583
    %4812 = vmatprep.subr.bf16.mxu0 0
    %4813 = vmatpush1.bf16.msra.mxu0 %v4584
    %4814 = vmatprep.subr.bf16.mxu0 0
    %4815 = vmatpush1.bf16.msra.mxu0 %v4585
    %4816 = vmatprep.subr.bf16.mxu0 0
    %4817 = vmatpush1.bf16.msra.mxu0 %v4586
    %4818 = vmatprep.subr.bf16.mxu0 0
    %4819 = vmatpush1.bf16.msra.mxu0 %v4587
    %4820 = vmatprep.subr.bf16.mxu0 0
    %4821 = vmatpush1.bf16.msra.mxu0 %v4588
    %4822 = vmatprep.subr.bf16.mxu0 0
    %4823 = vmatpush1.bf16.msra.mxu0 %v4589
    %4824 = vmatprep.subr.bf16.mxu0 0
    %4825 = vmatpush1.bf16.msra.mxu0 %v4590
    %4826 = vmatprep.subr.bf16.mxu0 0
    %4827 = vmatpush1.bf16.msra.mxu0 %v4591
    %4828 = vmatprep.subr.bf16.mxu0 0
    %4829 = vmatpush1.bf16.msra.mxu0 %v4592
    %4830 = vmatprep.subr.bf16.mxu0 0
    %4831 = vmatpush1.bf16.msra.mxu0 %v4593
    %4832 = vmatprep.subr.bf16.mxu0 0
    %4833 = vmatpush1.bf16.msra.mxu0 %v4594
    %4834 = vmatprep.subr.bf16.mxu0 0
    %4835 = vmatpush1.bf16.msra.mxu0 %v4595
    %4836 = vmatprep.mubr.bf16.mxu0 %v4132
    %4837 = vmatmul.mubr.bf16.gmra.mrb[0].mxu0 %v4131
    %v4838 = vpop.f32.mrb[0].mxu0
    %v4839 = vadd.f32 %v4791, %v4838
    %v4840 = vpop.f32.mrb[0].mxu0
    %v4841 = vpop.f32.mrb[0].mxu0
    %v4842 = vadd.f32 %v4794, %v4841
    %v4843 = vpop.f32.mrb[0].mxu0
    %4844 = vmatprep.mubr.bf16.mxu0 %v4140
    %4845 = vmatmul.mubr.bf16.gmra.mrb[0].mxu0 %v4139
    %v4846 = vpop.f32.mrb[0].mxu0
    %v4847 = vadd.f32 %v4799, %v4846
    %v4848 = vpop.f32.mrb[0].mxu0
    %v4849 = vpop.f32.mrb[0].mxu0
    %v4850 = vpop.f32.mrb[0].mxu0
    %4851 = vdwg.mxu0
    %vm4852 = vcmask 64512
    %4853 = vst.msk [vmem:[%s5] sm:$0xff] %vm4852, %v4839
    %4854 = vst.msk [vmem:[%s5 + $0x8] sm:$0xff] %vm4852, %v4842
    %4855 = vst.msk [vmem:[%s5 + $0x10] sm:$0xff] %vm4852, %v4847
    // Predicated region
    $region38: #{tpu_custom_call.1} parent=1 // pred_check
      _
    $region39: #{tpu_custom_call.1} parent=1 // pred_check_branch
      %4857 = sbr.rel (0) target = $region41
    $region40: #{tpu_custom_call.1} parent=1 // pred_region
      _
    $region41: #{tpu_custom_call.1} parent=1 // pred_fallthru
      _
    // Predicated region
    $region42: #{tpu_custom_call.1} parent=1 // pred_check
      _
    $region43: #{tpu_custom_call.1} parent=1 // pred_check_branch
      %4859 = sbr.rel (0) target = $region45
    $region44: #{tpu_custom_call.1} parent=1 // pred_region
      _
    $region45: #{tpu_custom_call.1} parent=1 // pred_fallthru
      _
    %4860 = vsyncpa [#allocation3], 1
    %4861 = vsyncpa [#allocation5], 1
    %4862 = vsyncpa [#allocation8], 1

</llo_original>
